<compile_context>
chip_gen: v7x
topology: tpu7x:2x2x1
jax: 0.10.0
libtpu: 0.0.40
codegen_flags: <defaults>
</compile_context>

<pallas_src>
import functools

import jax
import jax.numpy as jnp
from jax import lax
from jax.experimental import pallas as pl
from jax.experimental.pallas import tpu as pltpu

LEAKY_SLOPE = 0.2
BN_EPS = 1e-5


def _round_up(x, m):
    return (x + m - 1) // m * m


# ----------------------------------------------------------------------------
# Pallas kernels
# ----------------------------------------------------------------------------
def _conv_act_kernel(a_ref, b_ref, bias_ref, o_ref, *, cout, act):
    """One-shot matmul (full K) + bias + activation. Epilogue math in f32."""
    o = jnp.dot(a_ref[...], b_ref[...], preferred_element_type=jnp.float32)
    if o.shape[-1] != cout:          # drop padded weight columns (static slice)
        o = o[:, :cout]
    o = o + bias_ref[...]
    if act == "leaky":
        o = jnp.where(o >= 0, o, LEAKY_SLOPE * o)
    elif act == "sigmoid":
        e = jnp.exp(-jnp.abs(o))     # numerically stable sigmoid
        o = jnp.where(o >= 0, 1.0 / (1.0 + e), e / (1.0 + e))
    o_ref[...] = o.astype(o_ref.dtype)


def _conv_bn_leaky_kernel(a_ref, b_ref, gamma_ref, beta_ref, o_ref, *, cout):
    """Fused conv-matmul + BatchNorm (batch statistics) + LeakyReLU(0.2).

    The whole (M, Cout) layer output lives in registers/VMEM, so the
    per-channel mean/var reduction and the affine+activation are applied in
    the same pass as the matmul (single kernel invocation, grid=(1,))."""
    o = jnp.dot(a_ref[...], b_ref[...], preferred_element_type=jnp.float32)
    if o.shape[-1] != cout:
        o = o[:, :cout]
    inv_m = 1.0 / o.shape[0]
    mean = jnp.sum(o, axis=0, keepdims=True) * inv_m
    var = jnp.sum((o - mean) ** 2, axis=0, keepdims=True) * inv_m  # biased (BN train)
    scale = gamma_ref[...] * lax.rsqrt(var + BN_EPS)
    shift = beta_ref[...] - mean * scale
    y = o * scale + shift
    o_ref[...] = jnp.where(y >= 0, y, LEAKY_SLOPE * y).astype(o_ref.dtype)


# ----------------------------------------------------------------------------
# Pallas wrappers
# ----------------------------------------------------------------------------
def conv_act(a, wmat_p, bias, cout, act, out_dtype, tm_hint=None):
    """act(a @ wmat_p[:, :cout] + bias).  a:(M,K) bf16, wmat_p:(K,Np) bf16."""
    M, K = a.shape
    Np = wmat_p.shape[1]
    tm = tm_hint if (tm_hint is not None and M > tm_hint and M % tm_hint == 0) else M
    bias2d = bias.reshape(1, cout).astype(jnp.float32)

    return pl.pallas_call(
        functools.partial(_conv_act_kernel, cout=cout, act=act),
        out_shape=jax.ShapeDtypeStruct((M, cout), out_dtype),
        grid_spec=pltpu.PrefetchScalarGridSpec(
            num_scalar_prefetch=0,
            grid=(M // tm,),
            in_specs=[
                pl.BlockSpec((tm, K), lambda i: (i, 0)),
                pl.BlockSpec((K, Np), lambda i: (0, 0)),
                pl.BlockSpec((1, cout), lambda i: (0, 0)),
            ],
            out_specs=pl.BlockSpec((tm, cout), lambda i: (i, 0)),
        ),
        compiler_params=pltpu.CompilerParams(
            dimension_semantics=("parallel",)),
    )(a, wmat_p, bias2d)


def conv_bn_leaky(a, wmat_p, gamma, beta, cout, out_dtype):
    """Fused Conv(matmul) + BatchNorm(batch stats) + LeakyReLU in ONE call."""
    M, K = a.shape
    Np = wmat_p.shape[1]
    g2 = gamma.reshape(1, cout).astype(jnp.float32)
    b2 = beta.reshape(1, cout).astype(jnp.float32)

    return pl.pallas_call(
        functools.partial(_conv_bn_leaky_kernel, cout=cout),
        out_shape=jax.ShapeDtypeStruct((M, cout), out_dtype),
        grid_spec=pltpu.PrefetchScalarGridSpec(
            num_scalar_prefetch=0,
            grid=(1,),
            in_specs=[
                pl.BlockSpec((M, K), lambda i: (0, 0)),
                pl.BlockSpec((K, Np), lambda i: (0, 0)),
                pl.BlockSpec((1, cout), lambda i: (0, 0)),
                pl.BlockSpec((1, cout), lambda i: (0, 0)),
            ],
            out_specs=pl.BlockSpec((M, cout), lambda i: (0, 0)),
        ),
        compiler_params=pltpu.CompilerParams(
            dimension_semantics=("arbitrary",)),
    )(a, wmat_p, g2, b2)


# ----------------------------------------------------------------------------
# Glue: patch extraction + spectral-norm weight prep (plain JAX)
# ----------------------------------------------------------------------------
def extract_patches(h_nhwc, k, stride, pad):
    """im2col via XLA patch extraction; rows ordered (N,Ho,Wo), cols (C,kh,kw)."""
    p = lax.conv_general_dilated_patches(
        h_nhwc, (k, k), (stride, stride), [(pad, pad), (pad, pad)],
        dimension_numbers=("NHWC", "HWIO", "NHWC"))
    n, ho, wo, ck = p.shape
    return p.reshape(n * ho * wo, ck), ho, wo


def spectral_normalize(w, u):
    """One power iteration (PyTorch nn.utils.spectral_norm forward semantics)."""
    wmat = w.reshape(w.shape[0], -1)
    v = wmat.T @ u
    v = v / (jnp.linalg.norm(v) + 1e-12)
    u_new = wmat @ v
    u_new = u_new / (jnp.linalg.norm(u_new) + 1e-12)
    sigma = u_new @ (wmat @ v)
    return w / sigma


def prep_conv_weight(w, u):
    """Spectral-norm, reshape to (K, Cout), pad Cout to 128 lanes, cast bf16."""
    cout = w.shape[0]
    k_dim = w.shape[1] * w.shape[2] * w.shape[3]
    wsn = spectral_normalize(w, u)
    wmat = wsn.reshape(cout, k_dim).T                      # (K, Cout)
    np_ = _round_up(cout, 128)
    if np_ != cout:
        wmat = jnp.pad(wmat, ((0, 0), (0, np_ - cout)))
    return wmat.astype(jnp.bfloat16)


# ----------------------------------------------------------------------------
# Discriminator forward (NHWC / bf16 internally, NCHW in/out like PyTorch)
# ----------------------------------------------------------------------------
def discriminator_forward(params, x, labels):
    n, _, h_sp, w_sp = x.shape
    emb = params["embed"][labels]                          # (N, E) gather
    x_nhwc = jnp.transpose(x, (0, 2, 3, 1))
    label_map = jnp.broadcast_to(emb[:, None, None, :],
                                 (n, h_sp, w_sp, emb.shape[1]))
    h = jnp.concatenate([x_nhwc, label_map], axis=-1).astype(jnp.bfloat16)

    # Layer 1: SN-Conv (bias) + LeakyReLU  (4-way parallel M grid -> both TCs on v7x)
    w1 = prep_conv_weight(params["w1"], params["u1"])
    a, ho, wo = extract_patches(h, 4, 2, 1)
    out = conv_act(a, w1, params["b1"], cout=params["w1"].shape[0],
                   act="leaky", out_dtype=jnp.bfloat16, tm_hint=512)
    h = out.reshape(n, ho, wo, -1)

    # Blocks 2-4: SN-Conv (no bias) + BatchNorm (train stats) + LeakyReLU, fully fused.
    for i in (2, 3, 4):
        wi = prep_conv_weight(params[f"w{i}"], params[f"u{i}"])
        a, ho, wo = extract_patches(h, 4, 2, 1)
        out = conv_bn_leaky(a, wi, params[f"gamma{i}"], params[f"beta{i}"],
                            cout=params[f"w{i}"].shape[0], out_dtype=jnp.bfloat16)
        h = out.reshape(n, ho, wo, -1)

    # Final: SN-Conv (bias, pad=0) + Sigmoid.
    w5 = prep_conv_weight(params["w5"], params["u5"])
    a, ho, wo = extract_patches(h, 4, 2, 0)
    out = conv_act(a, w5, params["b5"], cout=1,
                   act="sigmoid", out_dtype=jnp.float32, tm_hint=None)
    return out.reshape(n, ho, wo, 1).transpose(0, 3, 1, 2)   # (N, 1, 1, 1)


# ----------------------------------------------------------------------------
# Deterministic parameter init (synthetic, not a checkpoint load)
# ----------------------------------------------------------------------------
def init_params(key, channels_img, features_d, num_classes, embed_size):
    ks = jax.random.split(key, 16)
    in_ch = channels_img + embed_size
    fd = features_d

    def conv_w(k, co, ci):
        return 0.05 * jax.random.normal(k, (co, ci, 4, 4), jnp.float32)

    return {
        "embed": 0.5 * jax.random.normal(ks[0], (num_classes, embed_size), jnp.float32),
        # layer 1
        "w1": conv_w(ks[1], fd, in_ch),
        "b1": 0.01 * jax.random.normal(ks[2], (fd,), jnp.float32),
        "u1": jax.random.normal(ks[3], (fd,), jnp.float32),
        # block 2
        "w2": conv_w(ks[4], fd * 2, fd),
        "u2": jax.random.normal(ks[5], (fd * 2,), jnp.float32),
        "gamma2": jnp.ones((fd * 2,), jnp.float32),
        "beta2": jnp.zeros((fd * 2,), jnp.float32),
        # block 3
        "w3": conv_w(ks[6], fd * 4, fd * 2),
        "u3": jax.random.normal(ks[7], (fd * 4,), jnp.float32),
        "gamma3": jnp.ones((fd * 4,), jnp.float32),
        "beta3": jnp.zeros((fd * 4,), jnp.float32),
        # block 4
        "w4": conv_w(ks[8], fd * 8, fd * 4),
        "u4": jax.random.normal(ks[9], (fd * 8,), jnp.float32),
        "gamma4": jnp.ones((fd * 8,), jnp.float32),
        "beta4": jnp.zeros((fd * 8,), jnp.float32),
        # final layer
        "w5": conv_w(ks[10], 1, fd * 8),
        "b5": 0.01 * jax.random.normal(ks[11], (1,), jnp.float32),
        "u5": jax.random.normal(ks[12], (1,), jnp.float32),
    }


if __name__ == "__main__":
    # Spatial must be 64 so the stack of stride-2 k=4 convs (p=1 x4, then p=0)
    # reduces 64 -> 32 -> 16 -> 8 -> 4 -> 1.
    batch, channels_img, features_d = 2, 3, 8
    num_classes, embed_size = 10, 5
    H = W = 64

    key = jax.random.PRNGKey(0)
    k_param, k_x = jax.random.split(key)
    params = init_params(k_param, channels_img, features_d, num_classes, embed_size)

    x = jax.random.normal(k_x, (batch, channels_img, H, W), jnp.float32)
    labels = jnp.array([1, 7], dtype=jnp.int32)

    fwd = jax.jit(discriminator_forward)
    out = fwd(params, x, labels)
    out = jax.block_until_ready(out)

    assert out.shape == (batch, 1, 1, 1), out.shape
    assert bool(jnp.all((out > 0.0) & (out < 1.0)))
    print("KERNEL_OK")
</pallas_src>

<mosaic_0001>
module attributes {stable_mosaic.version = 11 : i64} {
  func.func @_conv_act_kernel(%arg0: i32, %arg1: memref<512x128xbf16, #tpu.memory_space<vmem>>, %arg2: memref<128x128xbf16, #tpu.memory_space<vmem>>, %arg3: memref<1x8xf32, #tpu.memory_space<vmem>>, %arg4: memref<512x8xbf16, #tpu.memory_space<vmem>>) attributes {dimension_semantics = [#tpu.dimension_semantics<parallel>], iteration_bounds = array<i64: 4>, scalar_prefetch = 0 : i64, scratch_operands = 0 : i64, tpu.core_type = #tpu.core_type<tc>, window_params = [{transform_indices = @transform_0, window_bounds = array<i64: 512, 128>}, {pipeline_mode = #tpu.pipeline_mode<synchronous>, transform_indices = @transform_1, window_bounds = array<i64: 128, 128>}, {pipeline_mode = #tpu.pipeline_mode<synchronous>, transform_indices = @transform_2, window_bounds = array<i64: 1, 8>}, {transform_indices = @transform_3, window_bounds = array<i64: 512, 8>}]} {
    %c0 = arith.constant 0 : index
    %c0_0 = arith.constant 0 : index
    %0 = vector.load %arg1[%c0, %c0_0] : memref<512x128xbf16, #tpu.memory_space<vmem>>, vector<512x128xbf16>
    %c0_1 = arith.constant 0 : index
    %c0_2 = arith.constant 0 : index
    %1 = vector.load %arg2[%c0_1, %c0_2] : memref<128x128xbf16, #tpu.memory_space<vmem>>, vector<128x128xbf16>
    %cst = arith.constant dense<0.000000e+00> : vector<512x128xf32>
    %2 = tpu.matmul %0, %1, %cst {dimension_numbers = #tpu.dot_dimension_numbers<[1], [0], [0], [1], [0, 0, 1, 1], [], []>} : vector<512x128xbf16>, vector<128x128xbf16>, vector<512x128xf32> -> vector<512x128xf32>
    %3 = vector.extract_strided_slice %2 {offsets = [0, 0], sizes = [512, 8], strides = [1, 1]} : vector<512x128xf32> to vector<512x8xf32>
    %c0_3 = arith.constant 0 : index
    %c0_4 = arith.constant 0 : index
    %4 = vector.load %arg3[%c0_3, %c0_4] : memref<1x8xf32, #tpu.memory_space<vmem>>, vector<1x8xf32>
    %5 = vector.broadcast %4 : vector<1x8xf32> to vector<512x8xf32>
    %6 = arith.addf %3, %5 : vector<512x8xf32>
    %cst_5 = arith.constant 0.000000e+00 : f32
    %7 = vector.broadcast %cst_5 : f32 to vector<512x8xf32>
    %8 = arith.cmpf oge, %6, %7 : vector<512x8xf32>
    %cst_6 = arith.constant 2.000000e-01 : f32
    %9 = vector.broadcast %cst_6 : f32 to vector<512x8xf32>
    %10 = arith.mulf %9, %6 : vector<512x8xf32>
    %11 = arith.select %8, %6, %10 : vector<512x8xi1>, vector<512x8xf32>
    %12 = arith.truncf %11 : vector<512x8xf32> to vector<512x8xbf16>
    %c0_7 = arith.constant 0 : index
    %c0_8 = arith.constant 0 : index
    %13 = vector.load %arg4[%c0_7, %c0_8] : memref<512x8xbf16, #tpu.memory_space<vmem>>, vector<512x8xbf16>
    tpu.vector_store %arg4[%c0_7, %c0_8], %12 {strides = array<i32>} : memref<512x8xbf16, #tpu.memory_space<vmem>>, vector<512x8xbf16>,
    return
  }
  func.func @transform_0(%arg0: i32) -> (i32, i32) {
    %c0_i32 = arith.constant 0 : i32
    %c0_i32_0 = arith.constant 0 : i32
    return %arg0, %c0_i32 : i32, i32
  }
  func.func @transform_1(%arg0: i32) -> (i32, i32) {
    %c0_i32 = arith.constant 0 : i32
    %c0_i32_0 = arith.constant 0 : i32
    %c0_i32_1 = arith.constant 0 : i32
    return %c0_i32, %c0_i32_0 : i32, i32
  }
  func.func @transform_2(%arg0: i32) -> (i32, i32) {
    %c0_i32 = arith.constant 0 : i32
    %c0_i32_0 = arith.constant 0 : i32
    %c0_i32_1 = arith.constant 0 : i32
    return %c0_i32, %c0_i32_0 : i32, i32
  }
  func.func @transform_3(%arg0: i32) -> (i32, i32) {
    %c0_i32 = arith.constant 0 : i32
    %c0_i32_0 = arith.constant 0 : i32
    return %arg0, %c0_i32 : i32, i32
  }
}

module attributes {stable_mosaic.version = 11 : i64} {
  func.func @_conv_bn_leaky_kernel(%arg0: i32, %arg1: memref<512x128xbf16, #tpu.memory_space<vmem>>, %arg2: memref<128x128xbf16, #tpu.memory_space<vmem>>, %arg3: memref<1x16xf32, #tpu.memory_space<vmem>>, %arg4: memref<1x16xf32, #tpu.memory_space<vmem>>, %arg5: memref<512x16xbf16, #tpu.memory_space<vmem>>) attributes {dimension_semantics = [#tpu.dimension_semantics<arbitrary>], iteration_bounds = array<i64: 1>, scalar_prefetch = 0 : i64, scratch_operands = 0 : i64, tpu.core_type = #tpu.core_type<tc>, window_params = [{pipeline_mode = #tpu.pipeline_mode<synchronous>, transform_indices = @transform_0, window_bounds = array<i64: 512, 128>}, {pipeline_mode = #tpu.pipeline_mode<synchronous>, transform_indices = @transform_1, window_bounds = array<i64: 128, 128>}, {pipeline_mode = #tpu.pipeline_mode<synchronous>, transform_indices = @transform_2, window_bounds = array<i64: 1, 16>}, {pipeline_mode = #tpu.pipeline_mode<synchronous>, transform_indices = @transform_3, window_bounds = array<i64: 1, 16>}, {pipeline_mode = #tpu.pipeline_mode<synchronous>, transform_indices = @transform_4, window_bounds = array<i64: 512, 16>}]} {
    %c0 = arith.constant 0 : index
    %c0_0 = arith.constant 0 : index
    %0 = vector.load %arg1[%c0, %c0_0] : memref<512x128xbf16, #tpu.memory_space<vmem>>, vector<512x128xbf16>
    %c0_1 = arith.constant 0 : index
    %c0_2 = arith.constant 0 : index
    %1 = vector.load %arg2[%c0_1, %c0_2] : memref<128x128xbf16, #tpu.memory_space<vmem>>, vector<128x128xbf16>
    %cst = arith.constant dense<0.000000e+00> : vector<512x128xf32>
    %2 = tpu.matmul %0, %1, %cst {dimension_numbers = #tpu.dot_dimension_numbers<[1], [0], [0], [1], [0, 0, 1, 1], [], []>} : vector<512x128xbf16>, vector<128x128xbf16>, vector<512x128xf32> -> vector<512x128xf32>
    %3 = vector.extract_strided_slice %2 {offsets = [0, 0], sizes = [512, 16], strides = [1, 1]} : vector<512x128xf32> to vector<512x16xf32>
    %cst_3 = arith.constant dense<0.000000e+00> : vector<16xf32>
    %4 = vector.multi_reduction <add>, %3, %cst_3 [0] : vector<512x16xf32> to vector<16xf32>
    %5 = vector.shape_cast %4 : vector<16xf32> to vector<1x16xf32>
    %cst_4 = arith.constant 0.001953125 : f32
    %6 = vector.broadcast %cst_4 : f32 to vector<1x16xf32>
    %7 = arith.mulf %5, %6 : vector<1x16xf32>
    %8 = vector.broadcast %7 : vector<1x16xf32> to vector<512x16xf32>
    %9 = arith.subf %3, %8 : vector<512x16xf32>
    %10 = arith.mulf %9, %9 : vector<512x16xf32>
    %cst_5 = arith.constant dense<0.000000e+00> : vector<16xf32>
    %11 = vector.multi_reduction <add>, %10, %cst_5 [0] : vector<512x16xf32> to vector<16xf32>
    %12 = vector.shape_cast %11 : vector<16xf32> to vector<1x16xf32>
    %cst_6 = arith.constant 0.001953125 : f32
    %13 = vector.broadcast %cst_6 : f32 to vector<1x16xf32>
    %14 = arith.mulf %12, %13 : vector<1x16xf32>
    %c0_7 = arith.constant 0 : index
    %c0_8 = arith.constant 0 : index
    %15 = vector.load %arg3[%c0_7, %c0_8] : memref<1x16xf32, #tpu.memory_space<vmem>>, vector<1x16xf32>
    %cst_9 = arith.constant 9.99999974E-6 : f32
    %16 = vector.broadcast %cst_9 : f32 to vector<1x16xf32>
    %17 = arith.addf %14, %16 : vector<1x16xf32>
    %18 = math.rsqrt %17 : vector<1x16xf32>
    %19 = arith.mulf %15, %18 : vector<1x16xf32>
    %c0_10 = arith.constant 0 : index
    %c0_11 = arith.constant 0 : index
    %20 = vector.load %arg4[%c0_10, %c0_11] : memref<1x16xf32, #tpu.memory_space<vmem>>, vector<1x16xf32>
    %21 = arith.mulf %7, %19 : vector<1x16xf32>
    %22 = arith.subf %20, %21 : vector<1x16xf32>
    %23 = vector.broadcast %19 : vector<1x16xf32> to vector<512x16xf32>
    %24 = arith.mulf %3, %23 : vector<512x16xf32>
    %25 = vector.broadcast %22 : vector<1x16xf32> to vector<512x16xf32>
    %26 = arith.addf %24, %25 : vector<512x16xf32>
    %cst_12 = arith.constant 0.000000e+00 : f32
    %27 = vector.broadcast %cst_12 : f32 to vector<512x16xf32>
    %28 = arith.cmpf oge, %26, %27 : vector<512x16xf32>
    %cst_13 = arith.constant 2.000000e-01 : f32
    %29 = vector.broadcast %cst_13 : f32 to vector<512x16xf32>
    %30 = arith.mulf %29, %26 : vector<512x16xf32>
    %31 = arith.select %28, %26, %30 : vector<512x16xi1>, vector<512x16xf32>
    %32 = arith.truncf %31 : vector<512x16xf32> to vector<512x16xbf16>
    %c0_14 = arith.constant 0 : index
    %c0_15 = arith.constant 0 : index
    %33 = vector.load %arg5[%c0_14, %c0_15] : memref<512x16xbf16, #tpu.memory_space<vmem>>, vector<512x16xbf16>
    tpu.vector_store %arg5[%c0_14, %c0_15], %32 {strides = array<i32>} : memref<512x16xbf16, #tpu.memory_space<vmem>>, vector<512x16xbf16>,
    return
  }
  func.func @transform_0(%arg0: i32) -> (i32, i32) {
    %c0_i32 = arith.constant 0 : i32
    %c0_i32_0 = arith.constant 0 : i32
    %c0_i32_1 = arith.constant 0 : i32
    return %c0_i32, %c0_i32_0 : i32, i32
  }
  func.func @transform_1(%arg0: i32) -> (i32, i32) {
    %c0_i32 = arith.constant 0 : i32
    %c0_i32_0 = arith.constant 0 : i32
    %c0_i32_1 = arith.constant 0 : i32
    return %c0_i32, %c0_i32_0 : i32, i32
  }
  func.func @transform_2(%arg0: i32) -> (i32, i32) {
    %c0_i32 = arith.constant 0 : i32
    %c0_i32_0 = arith.constant 0 : i32
    %c0_i32_1 = arith.constant 0 : i32
    return %c0_i32, %c0_i32_0 : i32, i32
  }
  func.func @transform_3(%arg0: i32) -> (i32, i32) {
    %c0_i32 = arith.constant 0 : i32
    %c0_i32_0 = arith.constant 0 : i32
    %c0_i32_1 = arith.constant 0 : i32
    return %c0_i32, %c0_i32_0 : i32, i32
  }
  func.func @transform_4(%arg0: i32) -> (i32, i32) {
    %c0_i32 = arith.constant 0 : i32
    %c0_i32_0 = arith.constant 0 : i32
    %c0_i32_1 = arith.constant 0 : i32
    return %c0_i32, %c0_i32_0 : i32, i32
  }
}

module attributes {stable_mosaic.version = 11 : i64} {
  func.func @_conv_bn_leaky_kernel(%arg0: i32, %arg1: memref<128x256xbf16, #tpu.memory_space<vmem>>, %arg2: memref<256x128xbf16, #tpu.memory_space<vmem>>, %arg3: memref<1x32xf32, #tpu.memory_space<vmem>>, %arg4: memref<1x32xf32, #tpu.memory_space<vmem>>, %arg5: memref<128x32xbf16, #tpu.memory_space<vmem>>) attributes {dimension_semantics = [#tpu.dimension_semantics<arbitrary>], iteration_bounds = array<i64: 1>, scalar_prefetch = 0 : i64, scratch_operands = 0 : i64, tpu.core_type = #tpu.core_type<tc>, window_params = [{pipeline_mode = #tpu.pipeline_mode<synchronous>, transform_indices = @transform_0, window_bounds = array<i64: 128, 256>}, {pipeline_mode = #tpu.pipeline_mode<synchronous>, transform_indices = @transform_1, window_bounds = array<i64: 256, 128>}, {pipeline_mode = #tpu.pipeline_mode<synchronous>, transform_indices = @transform_2, window_bounds = array<i64: 1, 32>}, {pipeline_mode = #tpu.pipeline_mode<synchronous>, transform_indices = @transform_3, window_bounds = array<i64: 1, 32>}, {pipeline_mode = #tpu.pipeline_mode<synchronous>, transform_indices = @transform_4, window_bounds = array<i64: 128, 32>}]} {
    %c0 = arith.constant 0 : index
    %c0_0 = arith.constant 0 : index
    %0 = vector.load %arg1[%c0, %c0_0] : memref<128x256xbf16, #tpu.memory_space<vmem>>, vector<128x256xbf16>
    %c0_1 = arith.constant 0 : index
    %c0_2 = arith.constant 0 : index
    %1 = vector.load %arg2[%c0_1, %c0_2] : memref<256x128xbf16, #tpu.memory_space<vmem>>, vector<256x128xbf16>
    %cst = arith.constant dense<0.000000e+00> : vector<128x128xf32>
    %2 = tpu.matmul %0, %1, %cst {dimension_numbers = #tpu.dot_dimension_numbers<[1], [0], [0], [1], [0, 0, 1, 1], [], []>} : vector<128x256xbf16>, vector<256x128xbf16>, vector<128x128xf32> -> vector<128x128xf32>
    %3 = vector.extract_strided_slice %2 {offsets = [0, 0], sizes = [128, 32], strides = [1, 1]} : vector<128x128xf32> to vector<128x32xf32>
    %cst_3 = arith.constant dense<0.000000e+00> : vector<32xf32>
    %4 = vector.multi_reduction <add>, %3, %cst_3 [0] : vector<128x32xf32> to vector<32xf32>
    %5 = vector.shape_cast %4 : vector<32xf32> to vector<1x32xf32>
    %cst_4 = arith.constant 7.812500e-03 : f32
    %6 = vector.broadcast %cst_4 : f32 to vector<1x32xf32>
    %7 = arith.mulf %5, %6 : vector<1x32xf32>
    %8 = vector.broadcast %7 : vector<1x32xf32> to vector<128x32xf32>
    %9 = arith.subf %3, %8 : vector<128x32xf32>
    %10 = arith.mulf %9, %9 : vector<128x32xf32>
    %cst_5 = arith.constant dense<0.000000e+00> : vector<32xf32>
    %11 = vector.multi_reduction <add>, %10, %cst_5 [0] : vector<128x32xf32> to vector<32xf32>
    %12 = vector.shape_cast %11 : vector<32xf32> to vector<1x32xf32>
    %cst_6 = arith.constant 7.812500e-03 : f32
    %13 = vector.broadcast %cst_6 : f32 to vector<1x32xf32>
    %14 = arith.mulf %12, %13 : vector<1x32xf32>
    %c0_7 = arith.constant 0 : index
    %c0_8 = arith.constant 0 : index
    %15 = vector.load %arg3[%c0_7, %c0_8] : memref<1x32xf32, #tpu.memory_space<vmem>>, vector<1x32xf32>
    %cst_9 = arith.constant 9.99999974E-6 : f32
    %16 = vector.broadcast %cst_9 : f32 to vector<1x32xf32>
    %17 = arith.addf %14, %16 : vector<1x32xf32>
    %18 = math.rsqrt %17 : vector<1x32xf32>
    %19 = arith.mulf %15, %18 : vector<1x32xf32>
    %c0_10 = arith.constant 0 : index
    %c0_11 = arith.constant 0 : index
    %20 = vector.load %arg4[%c0_10, %c0_11] : memref<1x32xf32, #tpu.memory_space<vmem>>, vector<1x32xf32>
    %21 = arith.mulf %7, %19 : vector<1x32xf32>
    %22 = arith.subf %20, %21 : vector<1x32xf32>
    %23 = vector.broadcast %19 : vector<1x32xf32> to vector<128x32xf32>
    %24 = arith.mulf %3, %23 : vector<128x32xf32>
    %25 = vector.broadcast %22 : vector<1x32xf32> to vector<128x32xf32>
    %26 = arith.addf %24, %25 : vector<128x32xf32>
    %cst_12 = arith.constant 0.000000e+00 : f32
    %27 = vector.broadcast %cst_12 : f32 to vector<128x32xf32>
    %28 = arith.cmpf oge, %26, %27 : vector<128x32xf32>
    %cst_13 = arith.constant 2.000000e-01 : f32
    %29 = vector.broadcast %cst_13 : f32 to vector<128x32xf32>
    %30 = arith.mulf %29, %26 : vector<128x32xf32>
    %31 = arith.select %28, %26, %30 : vector<128x32xi1>, vector<128x32xf32>
    %32 = arith.truncf %31 : vector<128x32xf32> to vector<128x32xbf16>
    %c0_14 = arith.constant 0 : index
    %c0_15 = arith.constant 0 : index
    %33 = vector.load %arg5[%c0_14, %c0_15] : memref<128x32xbf16, #tpu.memory_space<vmem>>, vector<128x32xbf16>
    tpu.vector_store %arg5[%c0_14, %c0_15], %32 {strides = array<i32>} : memref<128x32xbf16, #tpu.memory_space<vmem>>, vector<128x32xbf16>,
    return
  }
  func.func @transform_0(%arg0: i32) -> (i32, i32) {
    %c0_i32 = arith.constant 0 : i32
    %c0_i32_0 = arith.constant 0 : i32
    %c0_i32_1 = arith.constant 0 : i32
    return %c0_i32, %c0_i32_0 : i32, i32
  }
  func.func @transform_1(%arg0: i32) -> (i32, i32) {
    %c0_i32 = arith.constant 0 : i32
    %c0_i32_0 = arith.constant 0 : i32
    %c0_i32_1 = arith.constant 0 : i32
    return %c0_i32, %c0_i32_0 : i32, i32
  }
  func.func @transform_2(%arg0: i32) -> (i32, i32) {
    %c0_i32 = arith.constant 0 : i32
    %c0_i32_0 = arith.constant 0 : i32
    %c0_i32_1 = arith.constant 0 : i32
    return %c0_i32, %c0_i32_0 : i32, i32
  }
  func.func @transform_3(%arg0: i32) -> (i32, i32) {
    %c0_i32 = arith.constant 0 : i32
    %c0_i32_0 = arith.constant 0 : i32
    %c0_i32_1 = arith.constant 0 : i32
    return %c0_i32, %c0_i32_0 : i32, i32
  }
  func.func @transform_4(%arg0: i32) -> (i32, i32) {
    %c0_i32 = arith.constant 0 : i32
    %c0_i32_0 = arith.constant 0 : i32
    %c0_i32_1 = arith.constant 0 : i32
    return %c0_i32, %c0_i32_0 : i32, i32
  }
}

module attributes {stable_mosaic.version = 11 : i64} {
  func.func @_conv_bn_leaky_kernel(%arg0: i32, %arg1: memref<32x512xbf16, #tpu.memory_space<vmem>>, %arg2: memref<512x128xbf16, #tpu.memory_space<vmem>>, %arg3: memref<1x64xf32, #tpu.memory_space<vmem>>, %arg4: memref<1x64xf32, #tpu.memory_space<vmem>>, %arg5: memref<32x64xbf16, #tpu.memory_space<vmem>>) attributes {dimension_semantics = [#tpu.dimension_semantics<arbitrary>], iteration_bounds = array<i64: 1>, scalar_prefetch = 0 : i64, scratch_operands = 0 : i64, tpu.core_type = #tpu.core_type<tc>, window_params = [{pipeline_mode = #tpu.pipeline_mode<synchronous>, transform_indices = @transform_0, window_bounds = array<i64: 32, 512>}, {pipeline_mode = #tpu.pipeline_mode<synchronous>, transform_indices = @transform_1, window_bounds = array<i64: 512, 128>}, {pipeline_mode = #tpu.pipeline_mode<synchronous>, transform_indices = @transform_2, window_bounds = array<i64: 1, 64>}, {pipeline_mode = #tpu.pipeline_mode<synchronous>, transform_indices = @transform_3, window_bounds = array<i64: 1, 64>}, {pipeline_mode = #tpu.pipeline_mode<synchronous>, transform_indices = @transform_4, window_bounds = array<i64: 32, 64>}]} {
    %c0 = arith.constant 0 : index
    %c0_0 = arith.constant 0 : index
    %0 = vector.load %arg1[%c0, %c0_0] : memref<32x512xbf16, #tpu.memory_space<vmem>>, vector<32x512xbf16>
    %c0_1 = arith.constant 0 : index
    %c0_2 = arith.constant 0 : index
    %1 = vector.load %arg2[%c0_1, %c0_2] : memref<512x128xbf16, #tpu.memory_space<vmem>>, vector<512x128xbf16>
    %cst = arith.constant dense<0.000000e+00> : vector<32x128xf32>
    %2 = tpu.matmul %0, %1, %cst {dimension_numbers = #tpu.dot_dimension_numbers<[1], [0], [0], [1], [0, 0, 1, 1], [], []>} : vector<32x512xbf16>, vector<512x128xbf16>, vector<32x128xf32> -> vector<32x128xf32>
    %3 = vector.extract_strided_slice %2 {offsets = [0, 0], sizes = [32, 64], strides = [1, 1]} : vector<32x128xf32> to vector<32x64xf32>
    %cst_3 = arith.constant dense<0.000000e+00> : vector<64xf32>
    %4 = vector.multi_reduction <add>, %3, %cst_3 [0] : vector<32x64xf32> to vector<64xf32>
    %5 = vector.shape_cast %4 : vector<64xf32> to vector<1x64xf32>
    %cst_4 = arith.constant 3.125000e-02 : f32
    %6 = vector.broadcast %cst_4 : f32 to vector<1x64xf32>
    %7 = arith.mulf %5, %6 : vector<1x64xf32>
    %8 = vector.broadcast %7 : vector<1x64xf32> to vector<32x64xf32>
    %9 = arith.subf %3, %8 : vector<32x64xf32>
    %10 = arith.mulf %9, %9 : vector<32x64xf32>
    %cst_5 = arith.constant dense<0.000000e+00> : vector<64xf32>
    %11 = vector.multi_reduction <add>, %10, %cst_5 [0] : vector<32x64xf32> to vector<64xf32>
    %12 = vector.shape_cast %11 : vector<64xf32> to vector<1x64xf32>
    %cst_6 = arith.constant 3.125000e-02 : f32
    %13 = vector.broadcast %cst_6 : f32 to vector<1x64xf32>
    %14 = arith.mulf %12, %13 : vector<1x64xf32>
    %c0_7 = arith.constant 0 : index
    %c0_8 = arith.constant 0 : index
    %15 = vector.load %arg3[%c0_7, %c0_8] : memref<1x64xf32, #tpu.memory_space<vmem>>, vector<1x64xf32>
    %cst_9 = arith.constant 9.99999974E-6 : f32
    %16 = vector.broadcast %cst_9 : f32 to vector<1x64xf32>
    %17 = arith.addf %14, %16 : vector<1x64xf32>
    %18 = math.rsqrt %17 : vector<1x64xf32>
    %19 = arith.mulf %15, %18 : vector<1x64xf32>
    %c0_10 = arith.constant 0 : index
    %c0_11 = arith.constant 0 : index
    %20 = vector.load %arg4[%c0_10, %c0_11] : memref<1x64xf32, #tpu.memory_space<vmem>>, vector<1x64xf32>
    %21 = arith.mulf %7, %19 : vector<1x64xf32>
    %22 = arith.subf %20, %21 : vector<1x64xf32>
    %23 = vector.broadcast %19 : vector<1x64xf32> to vector<32x64xf32>
    %24 = arith.mulf %3, %23 : vector<32x64xf32>
    %25 = vector.broadcast %22 : vector<1x64xf32> to vector<32x64xf32>
    %26 = arith.addf %24, %25 : vector<32x64xf32>
    %cst_12 = arith.constant 0.000000e+00 : f32
    %27 = vector.broadcast %cst_12 : f32 to vector<32x64xf32>
    %28 = arith.cmpf oge, %26, %27 : vector<32x64xf32>
    %cst_13 = arith.constant 2.000000e-01 : f32
    %29 = vector.broadcast %cst_13 : f32 to vector<32x64xf32>
    %30 = arith.mulf %29, %26 : vector<32x64xf32>
    %31 = arith.select %28, %26, %30 : vector<32x64xi1>, vector<32x64xf32>
    %32 = arith.truncf %31 : vector<32x64xf32> to vector<32x64xbf16>
    %c0_14 = arith.constant 0 : index
    %c0_15 = arith.constant 0 : index
    %33 = vector.load %arg5[%c0_14, %c0_15] : memref<32x64xbf16, #tpu.memory_space<vmem>>, vector<32x64xbf16>
    tpu.vector_store %arg5[%c0_14, %c0_15], %32 {strides = array<i32>} : memref<32x64xbf16, #tpu.memory_space<vmem>>, vector<32x64xbf16>,
    return
  }
  func.func @transform_0(%arg0: i32) -> (i32, i32) {
    %c0_i32 = arith.constant 0 : i32
    %c0_i32_0 = arith.constant 0 : i32
    %c0_i32_1 = arith.constant 0 : i32
    return %c0_i32, %c0_i32_0 : i32, i32
  }
  func.func @transform_1(%arg0: i32) -> (i32, i32) {
    %c0_i32 = arith.constant 0 : i32
    %c0_i32_0 = arith.constant 0 : i32
    %c0_i32_1 = arith.constant 0 : i32
    return %c0_i32, %c0_i32_0 : i32, i32
  }
  func.func @transform_2(%arg0: i32) -> (i32, i32) {
    %c0_i32 = arith.constant 0 : i32
    %c0_i32_0 = arith.constant 0 : i32
    %c0_i32_1 = arith.constant 0 : i32
    return %c0_i32, %c0_i32_0 : i32, i32
  }
  func.func @transform_3(%arg0: i32) -> (i32, i32) {
    %c0_i32 = arith.constant 0 : i32
    %c0_i32_0 = arith.constant 0 : i32
    %c0_i32_1 = arith.constant 0 : i32
    return %c0_i32, %c0_i32_0 : i32, i32
  }
  func.func @transform_4(%arg0: i32) -> (i32, i32) {
    %c0_i32 = arith.constant 0 : i32
    %c0_i32_0 = arith.constant 0 : i32
    %c0_i32_1 = arith.constant 0 : i32
    return %c0_i32, %c0_i32_0 : i32, i32
  }
}

module attributes {stable_mosaic.version = 11 : i64} {
  func.func @_conv_act_kernel(%arg0: i32, %arg1: memref<2x1024xbf16, #tpu.memory_space<vmem>>, %arg2: memref<1024x128xbf16, #tpu.memory_space<vmem>>, %arg3: memref<1x1xf32, #tpu.memory_space<vmem>>, %arg4: memref<2x1xf32, #tpu.memory_space<vmem>>) attributes {dimension_semantics = [#tpu.dimension_semantics<parallel>], iteration_bounds = array<i64: 1>, scalar_prefetch = 0 : i64, scratch_operands = 0 : i64, tpu.core_type = #tpu.core_type<tc>, window_params = [{transform_indices = @transform_0, window_bounds = array<i64: 2, 1024>}, {pipeline_mode = #tpu.pipeline_mode<synchronous>, transform_indices = @transform_1, window_bounds = array<i64: 1024, 128>}, {pipeline_mode = #tpu.pipeline_mode<synchronous>, transform_indices = @transform_2, window_bounds = array<i64: 1, 1>}, {transform_indices = @transform_3, window_bounds = array<i64: 2, 1>}]} {
    %c0 = arith.constant 0 : index
    %c0_0 = arith.constant 0 : index
    %0 = vector.load %arg1[%c0, %c0_0] : memref<2x1024xbf16, #tpu.memory_space<vmem>>, vector<2x1024xbf16>
    %c0_1 = arith.constant 0 : index
    %c0_2 = arith.constant 0 : index
    %1 = vector.load %arg2[%c0_1, %c0_2] : memref<1024x128xbf16, #tpu.memory_space<vmem>>, vector<1024x128xbf16>
    %cst = arith.constant dense<0.000000e+00> : vector<2x128xf32>
    %2 = tpu.matmul %0, %1, %cst {dimension_numbers = #tpu.dot_dimension_numbers<[1], [0], [0], [1], [0, 0, 1, 1], [], []>} : vector<2x1024xbf16>, vector<1024x128xbf16>, vector<2x128xf32> -> vector<2x128xf32>
    %3 = vector.extract_strided_slice %2 {offsets = [0, 0], sizes = [2, 1], strides = [1, 1]} : vector<2x128xf32> to vector<2x1xf32>
    %c0_3 = arith.constant 0 : index
    %c0_4 = arith.constant 0 : index
    %4 = vector.load %arg3[%c0_3, %c0_4] : memref<1x1xf32, #tpu.memory_space<vmem>>, vector<1x1xf32>
    %5 = vector.broadcast %4 : vector<1x1xf32> to vector<2x1xf32>
    %6 = arith.addf %3, %5 : vector<2x1xf32>
    %7 = math.absf %6 : vector<2x1xf32>
    %cst_5 = arith.constant 0.000000e+00 : f32
    %8 = vector.broadcast %cst_5 : f32 to vector<2x1xf32>
    %9 = arith.subf %8, %7 : vector<2x1xf32>
    %10 = math.exp %9 : vector<2x1xf32>
    %cst_6 = arith.constant 0.000000e+00 : f32
    %11 = vector.broadcast %cst_6 : f32 to vector<2x1xf32>
    %12 = arith.cmpf oge, %6, %11 : vector<2x1xf32>
    %cst_7 = arith.constant 1.000000e+00 : f32
    %13 = vector.broadcast %cst_7 : f32 to vector<2x1xf32>
    %14 = arith.addf %13, %10 : vector<2x1xf32>
    %cst_8 = arith.constant 1.000000e+00 : f32
    %15 = vector.broadcast %cst_8 : f32 to vector<2x1xf32>
    %16 = arith.divf %15, %14 : vector<2x1xf32>
    %cst_9 = arith.constant 1.000000e+00 : f32
    %17 = vector.broadcast %cst_9 : f32 to vector<2x1xf32>
    %18 = arith.addf %17, %10 : vector<2x1xf32>
    %19 = arith.divf %10, %18 : vector<2x1xf32>
    %20 = arith.select %12, %16, %19 : vector<2x1xi1>, vector<2x1xf32>
    %c0_10 = arith.constant 0 : index
    %c0_11 = arith.constant 0 : index
    %21 = vector.load %arg4[%c0_10, %c0_11] : memref<2x1xf32, #tpu.memory_space<vmem>>, vector<2x1xf32>
    tpu.vector_store %arg4[%c0_10, %c0_11], %20 {strides = array<i32>} : memref<2x1xf32, #tpu.memory_space<vmem>>, vector<2x1xf32>,
    return
  }
  func.func @transform_0(%arg0: i32) -> (i32, i32) {
    %c0_i32 = arith.constant 0 : i32
    %c0_i32_0 = arith.constant 0 : i32
    return %arg0, %c0_i32 : i32, i32
  }
  func.func @transform_1(%arg0: i32) -> (i32, i32) {
    %c0_i32 = arith.constant 0 : i32
    %c0_i32_0 = arith.constant 0 : i32
    %c0_i32_1 = arith.constant 0 : i32
    return %c0_i32, %c0_i32_0 : i32, i32
  }
  func.func @transform_2(%arg0: i32) -> (i32, i32) {
    %c0_i32 = arith.constant 0 : i32
    %c0_i32_0 = arith.constant 0 : i32
    %c0_i32_1 = arith.constant 0 : i32
    return %c0_i32, %c0_i32_0 : i32, i32
  }
  func.func @transform_3(%arg0: i32) -> (i32, i32) {
    %c0_i32 = arith.constant 0 : i32
    %c0_i32_0 = arith.constant 0 : i32
    return %arg0, %c0_i32 : i32, i32
  }
}

</mosaic_0001>

<llo_original>
// kernel: discriminator_forward.5
$region0: #{discriminator_forward.5}
  #allocation0 [shape = 'u32[]', space=smem, size = 0x4, offset = 0x4, fixed_abs, tag = 'smem constant byte address 0x4 - core index']
  #allocation1 [shape = 'u32[144,128]{1,0:T(1,128)}', space=vmem, size = 0x12000, scoped, tag = 'internal scratch']
  %s0 = inlined_call_operand.vmem [shape: bf16[2048,128], index: 0, kind: input, shape index: {}]
  %s1 = inlined_call_operand.vmem [shape: bf16[128,128], index: 1, kind: input, shape index: {}]
  %s2 = inlined_call_operand.vmem [shape: f32[1,8], index: 2, kind: input, shape index: {}]
  %s3 = inlined_call_operand.vmem [shape: bf16[2048,8], index: 3, kind: output, shape index: {}]
  %s4 = sld [smem:[#allocation0]]
  $region45: #{discriminator_forward.5} parent=0
    _
  %s6 = ssub.s32 1, %s4
  %s7 = scalar_select 0, %s6, %s4
  loop: start=0, step=1, limit=6
  $region2: #{discriminator_forward.5} parent=0 // loop_pre_header
    _
  $region3: #{discriminator_forward.5} parent=0 // loop_header
    %s9 = sphi 0, %s13
    %p10 = scmp.ge.s32.totalorder %s9, 6
    %s19 = sphi 0, %s21
    %s22 = sphi 0, %s19
    %s23 = sphi 0, %s22
    %s39 = sphi 0, %s23
    %s43 = sphi 0, %s43
    %s45 = sphi 0, %s43
    %s46 = sphi 0, %s45
    %s60 = sphi 0, %s46
    %s64 = sphi 0, %s64
    %s66 = sphi 0, %s64
    %s67 = sphi 0, %s66
    %s81 = sphi 0, %s67
    %s87 = sphi 0, %s89
    %s90 = sphi 0, %s87
    %s91 = sphi 0, %s90
    %s107 = sphi 0, %s91
  $region4: #{discriminator_forward.5} parent=0 // loop_header_branch
    %12 = sbr.rel (%p10) target = $region8
  $region5: #{discriminator_forward.5} parent=0 // loop_body
    %s14 = ssub.s32 %s9, 1
    %s15 = ssub.s32 %s9, 2
    %s16 = sadd.s32 %s9, 1
    %s17 = ssub.s32 %s9, %s16
    %p18 = scmp.eq.s32.totalorder %s17, 0
    %s20 = sadd.s32 %s19, 1
    %s21 = scalar_select %p18, %s19, %s20
    %p24 = pneg %p18
    %p25 = scmp.eq.s32.totalorder %s9, 3
    %p26 = por %p24, %p25
    %p27 = scmp.ne.s32.totalorder %s19, %s22
    %p28 = scmp.eq.s32.totalorder %s9, 0
    %p29 = por %p27, %p28
    %p30 = scmp.ne.s32.totalorder %s19, %s22
    %p31 = scmp.eq.s32.totalorder %s14, 3
    %p32 = por %p30, %p31
    %p33 = scmp.ne.s32.totalorder %s22, %s23
    %p34 = scmp.eq.s32.totalorder %s14, 0
    %p35 = por %p33, %p34
    %p36 = scmp.ne.s32.totalorder %s22, %s23
    %p37 = scmp.eq.s32.totalorder %s15, 3
    %p38 = por %p36, %p37
    %p40 = scmp.ne.s32.totalorder %s23, %s39
    %p41 = scmp.eq.s32.totalorder %s15, 0
    %p42 = por %p40, %p41
    %s44 = sadd.s32 %s43, 1
    %p47 = scmp.eq.s32.totalorder %s9, 3
    %p48 = scmp.ne.s32.totalorder %s43, %s45
    %p49 = scmp.eq.s32.totalorder %s9, 0
    %p50 = por %p48, %p49
    %p51 = scmp.ne.s32.totalorder %s43, %s45
    %p52 = scmp.eq.s32.totalorder %s14, 3
    %p53 = por %p51, %p52
    %p54 = scmp.ne.s32.totalorder %s45, %s46
    %p55 = scmp.eq.s32.totalorder %s14, 0
    %p56 = por %p54, %p55
    %p57 = scmp.ne.s32.totalorder %s45, %s46
    %p58 = scmp.eq.s32.totalorder %s15, 3
    %p59 = por %p57, %p58
    %p61 = scmp.ne.s32.totalorder %s46, %s60
    %p62 = scmp.eq.s32.totalorder %s15, 0
    %p63 = por %p61, %p62
    %s65 = sadd.s32 %s64, 1
    %p68 = scmp.eq.s32.totalorder %s9, 3
    %p69 = scmp.ne.s32.totalorder %s64, %s66
    %p70 = scmp.eq.s32.totalorder %s9, 0
    %p71 = por %p69, %p70
    %p72 = scmp.ne.s32.totalorder %s64, %s66
    %p73 = scmp.eq.s32.totalorder %s14, 3
    %p74 = por %p72, %p73
    %p75 = scmp.ne.s32.totalorder %s66, %s67
    %p76 = scmp.eq.s32.totalorder %s14, 0
    %p77 = por %p75, %p76
    %p78 = scmp.ne.s32.totalorder %s66, %s67
    %p79 = scmp.eq.s32.totalorder %s15, 3
    %p80 = por %p78, %p79
    %p82 = scmp.ne.s32.totalorder %s67, %s81
    %p83 = scmp.eq.s32.totalorder %s15, 0
    %p84 = por %p82, %p83
    %s85 = ssub.s32 %s9, %s16
    %p86 = scmp.eq.s32.totalorder %s85, 0
    %s88 = sadd.s32 %s87, 1
    %s89 = scalar_select %p86, %s87, %s88
    %p92 = pneg %p86
    %p93 = scmp.eq.s32.totalorder %s9, 3
    %p94 = por %p92, %p93
    %p95 = scmp.ne.s32.totalorder %s87, %s90
    %p96 = scmp.eq.s32.totalorder %s9, 0
    %p97 = por %p95, %p96
    %p98 = scmp.ne.s32.totalorder %s87, %s90
    %p99 = scmp.eq.s32.totalorder %s14, 3
    %p100 = por %p98, %p99
    %p101 = scmp.ne.s32.totalorder %s90, %s91
    %p102 = scmp.eq.s32.totalorder %s14, 0
    %p103 = por %p101, %p102
    %p104 = scmp.ne.s32.totalorder %s90, %s91
    %p105 = scmp.eq.s32.totalorder %s15, 3
    %p106 = por %p104, %p105
    %p108 = scmp.ne.s32.totalorder %s91, %s107
    %p109 = scmp.eq.s32.totalorder %s15, 0
    %p110 = por %p108, %p109
    %p111 = scmp.le.s32.totalorder 1, %s9
    %p112 = scmp.lt.s32.totalorder %s9, 5
    %p113 = pnand %p111, %p112
    %p114 = pneg %p113
    // Predicated region
    $region9: #{discriminator_forward.5} parent=5 // pred_check
      _
    $region10: #{discriminator_forward.5} parent=5 // pred_check_branch
      %116 = sbr.rel (%p113) target = $region12
    $region11: #{discriminator_forward.5} parent=5 // pred_region
      %s117 = ssub.s32 %s9, 1
      // Predicated region
      $region13: #{discriminator_forward.5} parent=11 // pred_check
        %p118 = pneg %p56
      $region14: #{discriminator_forward.5} parent=11 // pred_check_branch
        %120 = sbr.rel (%p118) target = $region16
      $region15: #{discriminator_forward.5} parent=11 // pred_region
        _
      $region16: #{discriminator_forward.5} parent=11 // pred_fallthru
        _
      // Predicated region
      $region17: #{discriminator_forward.5} parent=11 // pred_check
        %p121 = pneg %p77
      $region18: #{discriminator_forward.5} parent=11 // pred_check_branch
        %123 = sbr.rel (%p121) target = $region20
      $region19: #{discriminator_forward.5} parent=11 // pred_region
        _
      $region20: #{discriminator_forward.5} parent=11 // pred_fallthru
        _
    $region12: #{discriminator_forward.5} parent=5 // pred_fallthru
      _
    %p124 = scmp.lt.s32.totalorder %s9, 4
    // Predicated region
    $region21: #{discriminator_forward.5} parent=5 // pred_check
      %p125 = pneg %p124
    $region22: #{discriminator_forward.5} parent=5 // pred_check_branch
      %127 = sbr.rel (%p125) target = $region24
    $region23: #{discriminator_forward.5} parent=5 // pred_region
      // Predicated region
      $region25: #{discriminator_forward.5} parent=23 // pred_check
        %p128 = pneg %p29
      $region26: #{discriminator_forward.5} parent=23 // pred_check_branch
        %130 = sbr.rel (%p128) target = $region28
      $region27: #{discriminator_forward.5} parent=23 // pred_region
        %s131 = smul.u32 64, %s9
        %p132 = scmp.lt.s32.totalorder %s131, 255
        %s133 = scalar_select %p132, %s131, 255
        %s134 = smul.addr %s133, 4
        %s135 = scalar_lea.vmem %s0, %s134
        %s136 = smul.u32 64, %s9
      $region28: #{discriminator_forward.5} parent=23 // pred_fallthru
        _
    $region24: #{discriminator_forward.5} parent=5 // pred_fallthru
      _
    %p137 = scmp.le.s32.totalorder 1, %s9
    %p138 = scmp.lt.s32.totalorder %s9, 5
    %p139 = pnand %p137, %p138
    %p140 = pneg %p139
    // Predicated region
    $region29: #{discriminator_forward.5} parent=5 // pred_check
      _
    $region30: #{discriminator_forward.5} parent=5 // pred_check_branch
      %142 = sbr.rel (%p139) target = $region32
    $region31: #{discriminator_forward.5} parent=5 // pred_region
      %s143 = ssub.s32 %s9, 1
      %s144 = smul.u32 64, %s14
      %p145 = scmp.lt.s32.totalorder %s144, 255
      %s146 = scalar_select %p145, %s144, 255
      %s147 = smul.addr %s146, 4
      %s148 = scalar_lea.vmem %s0, %s147
      %p149 = pneg %p35
      %p150 = pneg %p32
      %p151 = pneg %p56
      %p152 = pneg %p53
      %p153 = pneg %p77
      %p154 = pneg %p74
      %p155 = pneg %p103
      %p156 = pneg %p100
      %s157 = smul.u32 64, %s14
      %p158 = scmp.lt.s32.totalorder %s157, 255
      %s159 = scalar_select %p158, %s157, 255
      %s160 = smul.addr %s159, 4
      %s161 = scalar_lea.vmem %s3, %s160
      %s162 = smul.u32 64, %s14
      %p163 = scmp.lt.s32.totalorder %s162, 255
      %s164 = scalar_select %p163, %s162, 255
      %s165 = smul.addr %s164, 4
      %s166 = scalar_lea.vmem %s0, %s165
      %s167 = smul.u32 64, %s14
      %s168 = smul.u32 64, %s14
      %p169 = scmp.lt.s32.totalorder %s168, 255
      %s170 = scalar_select %p169, %s168, 255
      %s171 = smul.addr %s170, 4
      %s172 = scalar_lea.vmem %s3, %s171
      %s173 = smul.u32 64, %s14
      %v175 = vld [vmem:[%s166] sm:$0xf]
      %v176 = vld [vmem:[%s166 + $0x4] sm:$0xf]
      %v177 = vld [vmem:[%s166 + $0x8] sm:$0xf]
      %v178 = vld [vmem:[%s166 + $0xc] sm:$0xf]
      %v179 = vld [vmem:[%s166 + $0x10] sm:$0xf]
      %v180 = vld [vmem:[%s166 + $0x14] sm:$0xf]
      %v181 = vld [vmem:[%s166 + $0x18] sm:$0xf]
      %v182 = vld [vmem:[%s166 + $0x1c] sm:$0xf]
      %v183 = vld [vmem:[%s166 + $0x20] sm:$0xf]
      %v184 = vld [vmem:[%s166 + $0x24] sm:$0xf]
      %v185 = vld [vmem:[%s166 + $0x28] sm:$0xf]
      %v186 = vld [vmem:[%s166 + $0x2c] sm:$0xf]
      %v187 = vld [vmem:[%s166 + $0x30] sm:$0xf]
      %v188 = vld [vmem:[%s166 + $0x34] sm:$0xf]
      %v189 = vld [vmem:[%s166 + $0x38] sm:$0xf]
      %v190 = vld [vmem:[%s166 + $0x3c] sm:$0xf]
      %v191 = vld [vmem:[%s166 + $0x40] sm:$0xf]
      %v192 = vld [vmem:[%s166 + $0x44] sm:$0xf]
      %v193 = vld [vmem:[%s166 + $0x48] sm:$0xf]
      %v194 = vld [vmem:[%s166 + $0x4c] sm:$0xf]
      %v195 = vld [vmem:[%s166 + $0x50] sm:$0xf]
      %v196 = vld [vmem:[%s166 + $0x54] sm:$0xf]
      %v197 = vld [vmem:[%s166 + $0x58] sm:$0xf]
      %v198 = vld [vmem:[%s166 + $0x5c] sm:$0xf]
      %v199 = vld [vmem:[%s166 + $0x60] sm:$0xf]
      %v200 = vld [vmem:[%s166 + $0x64] sm:$0xf]
      %v201 = vld [vmem:[%s166 + $0x68] sm:$0xf]
      %v202 = vld [vmem:[%s166 + $0x6c] sm:$0xf]
      %v203 = vld [vmem:[%s166 + $0x70] sm:$0xf]
      %v204 = vld [vmem:[%s166 + $0x74] sm:$0xf]
      %v205 = vld [vmem:[%s166 + $0x78] sm:$0xf]
      %v206 = vld [vmem:[%s166 + $0x7c] sm:$0xf]
      %v207 = vld [vmem:[%s166 + $0x80] sm:$0xf]
      %v208 = vld [vmem:[%s166 + $0x84] sm:$0xf]
      %v209 = vld [vmem:[%s166 + $0x88] sm:$0xf]
      %v210 = vld [vmem:[%s166 + $0x8c] sm:$0xf]
      %v211 = vld [vmem:[%s166 + $0x90] sm:$0xf]
      %v212 = vld [vmem:[%s166 + $0x94] sm:$0xf]
      %v213 = vld [vmem:[%s166 + $0x98] sm:$0xf]
      %v214 = vld [vmem:[%s166 + $0x9c] sm:$0xf]
      %v215 = vld [vmem:[%s166 + $0xa0] sm:$0xf]
      %v216 = vld [vmem:[%s166 + $0xa4] sm:$0xf]
      %v217 = vld [vmem:[%s166 + $0xa8] sm:$0xf]
      %v218 = vld [vmem:[%s166 + $0xac] sm:$0xf]
      %v219 = vld [vmem:[%s166 + $0xb0] sm:$0xf]
      %v220 = vld [vmem:[%s166 + $0xb4] sm:$0xf]
      %v221 = vld [vmem:[%s166 + $0xb8] sm:$0xf]
      %v222 = vld [vmem:[%s166 + $0xbc] sm:$0xf]
      %v223 = vld [vmem:[%s166 + $0xc0] sm:$0xf]
      %v224 = vld [vmem:[%s166 + $0xc4] sm:$0xf]
      %v225 = vld [vmem:[%s166 + $0xc8] sm:$0xf]
      %v226 = vld [vmem:[%s166 + $0xcc] sm:$0xf]
      %v227 = vld [vmem:[%s166 + $0xd0] sm:$0xf]
      %v228 = vld [vmem:[%s166 + $0xd4] sm:$0xf]
      %v229 = vld [vmem:[%s166 + $0xd8] sm:$0xf]
      %v230 = vld [vmem:[%s166 + $0xdc] sm:$0xf]
      %v231 = vld [vmem:[%s166 + $0xe0] sm:$0xf]
      %v232 = vld [vmem:[%s166 + $0xe4] sm:$0xf]
      %v233 = vld [vmem:[%s166 + $0xe8] sm:$0xf]
      %v234 = vld [vmem:[%s166 + $0xec] sm:$0xf]
      %v235 = vld [vmem:[%s166 + $0xf0] sm:$0xf]
      %v236 = vld [vmem:[%s166 + $0xf4] sm:$0xf]
      %v237 = vld [vmem:[%s166 + $0xf8] sm:$0xf]
      %v238 = vld [vmem:[%s166 + $0xfc] sm:$0xf]
      %v239 = vld [vmem:[%s1] sm:$0xf]
      %v240 = vld [vmem:[%s1 + $0x4] sm:$0xf]
      %v241 = vld [vmem:[%s1 + $0x8] sm:$0xf]
      %v242 = vld [vmem:[%s1 + $0xc] sm:$0xf]
      %v243 = vld [vmem:[%s1 + $0x10] sm:$0xf]
      %v244 = vld [vmem:[%s1 + $0x14] sm:$0xf]
      %v245 = vld [vmem:[%s1 + $0x18] sm:$0xf]
      %v246 = vld [vmem:[%s1 + $0x1c] sm:$0xf]
      %v247 = vld [vmem:[%s1 + $0x20] sm:$0xf]
      %v248 = vld [vmem:[%s1 + $0x24] sm:$0xf]
      %v249 = vld [vmem:[%s1 + $0x28] sm:$0xf]
      %v250 = vld [vmem:[%s1 + $0x2c] sm:$0xf]
      %v251 = vld [vmem:[%s1 + $0x30] sm:$0xf]
      %v252 = vld [vmem:[%s1 + $0x34] sm:$0xf]
      %v253 = vld [vmem:[%s1 + $0x38] sm:$0xf]
      %v254 = vld [vmem:[%s1 + $0x3c] sm:$0xf]
      %v319 = vunpack.c.l.b16 %v175
      %v320 = vunpack.c.l.b16 %v176
      %v321 = vunpack.c.l.b16 %v177
      %v322 = vunpack.c.l.b16 %v178
      %v323 = vunpack.c.l.b16 %v179
      %v324 = vunpack.c.l.b16 %v180
      %v325 = vunpack.c.l.b16 %v181
      %v326 = vunpack.c.l.b16 %v182
      %v327 = vunpack.c.l.b16 %v183
      %v328 = vunpack.c.l.b16 %v184
      %v329 = vunpack.c.l.b16 %v185
      %v330 = vunpack.c.l.b16 %v186
      %v331 = vunpack.c.l.b16 %v187
      %v332 = vunpack.c.l.b16 %v188
      %v333 = vunpack.c.l.b16 %v189
      %v334 = vunpack.c.l.b16 %v190
      %v335 = vunpack.c.l.b16 %v191
      %v336 = vunpack.c.l.b16 %v192
      %v337 = vunpack.c.l.b16 %v193
      %v338 = vunpack.c.l.b16 %v194
      %v339 = vunpack.c.l.b16 %v195
      %v340 = vunpack.c.l.b16 %v196
      %v341 = vunpack.c.l.b16 %v197
      %v342 = vunpack.c.l.b16 %v198
      %v343 = vunpack.c.l.b16 %v199
      %v344 = vunpack.c.l.b16 %v200
      %v345 = vunpack.c.l.b16 %v201
      %v346 = vunpack.c.l.b16 %v202
      %v347 = vunpack.c.l.b16 %v203
      %v348 = vunpack.c.l.b16 %v204
      %v349 = vunpack.c.l.b16 %v205
      %v350 = vunpack.c.l.b16 %v206
      %v351 = vunpack.c.l.b16 %v207
      %v352 = vunpack.c.l.b16 %v208
      %v353 = vunpack.c.l.b16 %v209
      %v354 = vunpack.c.l.b16 %v210
      %v355 = vunpack.c.l.b16 %v211
      %v356 = vunpack.c.l.b16 %v212
      %v357 = vunpack.c.l.b16 %v213
      %v358 = vunpack.c.l.b16 %v214
      %v359 = vunpack.c.l.b16 %v215
      %v360 = vunpack.c.l.b16 %v216
      %v361 = vunpack.c.l.b16 %v217
      %v362 = vunpack.c.l.b16 %v218
      %v363 = vunpack.c.l.b16 %v219
      %v364 = vunpack.c.l.b16 %v220
      %v365 = vunpack.c.l.b16 %v221
      %v366 = vunpack.c.l.b16 %v222
      %v367 = vunpack.c.l.b16 %v223
      %v368 = vunpack.c.l.b16 %v224
      %v369 = vunpack.c.l.b16 %v225
      %v370 = vunpack.c.l.b16 %v226
      %v371 = vunpack.c.l.b16 %v227
      %v372 = vunpack.c.l.b16 %v228
      %v373 = vunpack.c.l.b16 %v229
      %v374 = vunpack.c.l.b16 %v230
      %v375 = vunpack.c.l.b16 %v231
      %v376 = vunpack.c.l.b16 %v232
      %v377 = vunpack.c.l.b16 %v233
      %v378 = vunpack.c.l.b16 %v234
      %v379 = vunpack.c.l.b16 %v235
      %v380 = vunpack.c.l.b16 %v236
      %v381 = vunpack.c.l.b16 %v237
      %v382 = vunpack.c.l.b16 %v238
      %v383 = vpack.c.b16 %v320, %v319
      %v384 = vpack.c.b16 %v322, %v321
      %v385 = vpack.c.b16 %v324, %v323
      %v386 = vpack.c.b16 %v326, %v325
      %v387 = vpack.c.b16 %v328, %v327
      %v388 = vpack.c.b16 %v330, %v329
      %v389 = vpack.c.b16 %v332, %v331
      %v390 = vpack.c.b16 %v334, %v333
      %v391 = vpack.c.b16 %v336, %v335
      %v392 = vpack.c.b16 %v338, %v337
      %v393 = vpack.c.b16 %v340, %v339
      %v394 = vpack.c.b16 %v342, %v341
      %v395 = vpack.c.b16 %v344, %v343
      %v396 = vpack.c.b16 %v346, %v345
      %v397 = vpack.c.b16 %v348, %v347
      %v398 = vpack.c.b16 %v350, %v349
      %v399 = vpack.c.b16 %v352, %v351
      %v400 = vpack.c.b16 %v354, %v353
      %v401 = vpack.c.b16 %v356, %v355
      %v402 = vpack.c.b16 %v358, %v357
      %v403 = vpack.c.b16 %v360, %v359
      %v404 = vpack.c.b16 %v362, %v361
      %v405 = vpack.c.b16 %v364, %v363
      %v406 = vpack.c.b16 %v366, %v365
      %v407 = vpack.c.b16 %v368, %v367
      %v408 = vpack.c.b16 %v370, %v369
      %v409 = vpack.c.b16 %v372, %v371
      %v410 = vpack.c.b16 %v374, %v373
      %v411 = vpack.c.b16 %v376, %v375
      %v412 = vpack.c.b16 %v378, %v377
      %v413 = vpack.c.b16 %v380, %v379
      %v414 = vpack.c.b16 %v382, %v381
      %v463 = vunpack.c.l.b16 %v239
      %v464 = vunpack.c.l.b16 %v240
      %v465 = vunpack.c.l.b16 %v241
      %v466 = vunpack.c.l.b16 %v242
      %v467 = vunpack.c.l.b16 %v243
      %v468 = vunpack.c.l.b16 %v244
      %v469 = vunpack.c.l.b16 %v245
      %v470 = vunpack.c.l.b16 %v246
      %v471 = vunpack.c.l.b16 %v247
      %v472 = vunpack.c.l.b16 %v248
      %v473 = vunpack.c.l.b16 %v249
      %v474 = vunpack.c.l.b16 %v250
      %v475 = vunpack.c.l.b16 %v251
      %v476 = vunpack.c.l.b16 %v252
      %v477 = vunpack.c.l.b16 %v253
      %v478 = vunpack.c.l.b16 %v254
      %v479 = vpack.c.b16 %v464, %v463
      %v480 = vpack.c.b16 %v466, %v465
      %v481 = vpack.c.b16 %v468, %v467
      %v482 = vpack.c.b16 %v470, %v469
      %v483 = vpack.c.b16 %v472, %v471
      %v484 = vpack.c.b16 %v474, %v473
      %v485 = vpack.c.b16 %v476, %v475
      %v486 = vpack.c.b16 %v478, %v477
      %495 = vmatprep.subr.bf16.mxu0 0
      %496 = vmatpush1.bf16.msra.mxu0 %v479
      %497 = vmatprep.subr.bf16.mxu0 0
      %498 = vmatpush1.bf16.msra.mxu0 %v480
      %499 = vmatprep.subr.bf16.mxu0 0
      %500 = vmatpush1.bf16.msra.mxu0 %v481
      %501 = vmatprep.subr.bf16.mxu0 0
      %502 = vmatpush1.bf16.msra.mxu0 %v482
      %503 = vmatprep.subr.bf16.mxu0 0
      %504 = vmatpush1.bf16.msra.mxu0 %v483
      %505 = vmatprep.subr.bf16.mxu0 0
      %506 = vmatpush1.bf16.msra.mxu0 %v484
      %507 = vmatprep.subr.bf16.mxu0 0
      %508 = vmatpush1.bf16.msra.mxu0 %v485
      %509 = vmatprep.subr.bf16.mxu0 0
      %510 = vmatpush1.bf16.msra.mxu0 %v486
      %511 = vmatprep.subr.bf16.mxu0 0
      %512 = vmatpush1.bf16.msra.mxu0 0
      %513 = vmatprep.subr.bf16.mxu0 0
      %514 = vmatpush1.bf16.msra.mxu0 0
      %515 = vmatprep.subr.bf16.mxu0 0
      %516 = vmatpush1.bf16.msra.mxu0 0
      %517 = vmatprep.subr.bf16.mxu0 0
      %518 = vmatpush1.bf16.msra.mxu0 0
      %519 = vmatprep.subr.bf16.mxu0 0
      %520 = vmatpush1.bf16.msra.mxu0 0
      %521 = vmatprep.subr.bf16.mxu0 0
      %522 = vmatpush1.bf16.msra.mxu0 0
      %523 = vmatprep.subr.bf16.mxu0 0
      %524 = vmatpush1.bf16.msra.mxu0 0
      %525 = vmatprep.subr.bf16.mxu0 0
      %526 = vmatpush1.bf16.msra.mxu0 0
      %527 = vmatprep.mubr.bf16.mxu0 0
      %528 = vmatmul.mubr.bf16.gmra.mrb[0].mxu0 %v383
      %v529 = vpop.f32.mrb[0].mxu0
      %v530 = vadd.f32 0.0, %v529
      %v531 = vpop.f32.mrb[0].mxu0
      %v532 = vpop.f32.mrb[0].mxu0
      %v533 = vadd.f32 0.0, %v532
      %v534 = vpop.f32.mrb[0].mxu0
      %535 = vmatprep.mubr.bf16.mxu0 0
      %536 = vmatmul.mubr.bf16.gmra.mrb[0].mxu0 %v384
      %v537 = vpop.f32.mrb[0].mxu0
      %v538 = vadd.f32 0.0, %v537
      %v539 = vpop.f32.mrb[0].mxu0
      %v540 = vpop.f32.mrb[0].mxu0
      %v541 = vadd.f32 0.0, %v540
      %v542 = vpop.f32.mrb[0].mxu0
      %543 = vmatprep.mubr.bf16.mxu0 0
      %544 = vmatmul.mubr.bf16.gmra.mrb[0].mxu0 %v385
      %v545 = vpop.f32.mrb[0].mxu0
      %v546 = vadd.f32 0.0, %v545
      %v547 = vpop.f32.mrb[0].mxu0
      %v548 = vpop.f32.mrb[0].mxu0
      %v549 = vadd.f32 0.0, %v548
      %v550 = vpop.f32.mrb[0].mxu0
      %551 = vmatprep.mubr.bf16.mxu0 0
      %552 = vmatmul.mubr.bf16.gmra.mrb[0].mxu0 %v386
      %v553 = vpop.f32.mrb[0].mxu0
      %v554 = vadd.f32 0.0, %v553
      %v555 = vpop.f32.mrb[0].mxu0
      %v556 = vpop.f32.mrb[0].mxu0
      %v557 = vadd.f32 0.0, %v556
      %v558 = vpop.f32.mrb[0].mxu0
      %559 = vmatprep.mubr.bf16.mxu0 0
      %560 = vmatmul.mubr.bf16.gmra.mrb[0].mxu0 %v387
      %v561 = vpop.f32.mrb[0].mxu0
      %v562 = vadd.f32 0.0, %v561
      %v563 = vpop.f32.mrb[0].mxu0
      %v564 = vpop.f32.mrb[0].mxu0
      %v565 = vadd.f32 0.0, %v564
      %v566 = vpop.f32.mrb[0].mxu0
      %567 = vmatprep.mubr.bf16.mxu0 0
      %568 = vmatmul.mubr.bf16.gmra.mrb[0].mxu0 %v388
      %v569 = vpop.f32.mrb[0].mxu0
      %v570 = vadd.f32 0.0, %v569
      %v571 = vpop.f32.mrb[0].mxu0
      %v572 = vpop.f32.mrb[0].mxu0
      %v573 = vadd.f32 0.0, %v572
      %v574 = vpop.f32.mrb[0].mxu0
      %575 = vmatprep.mubr.bf16.mxu0 0
      %576 = vmatmul.mubr.bf16.gmra.mrb[0].mxu0 %v389
      %v577 = vpop.f32.mrb[0].mxu0
      %v578 = vadd.f32 0.0, %v577
      %v579 = vpop.f32.mrb[0].mxu0
      %v580 = vpop.f32.mrb[0].mxu0
      %v581 = vadd.f32 0.0, %v580
      %v582 = vpop.f32.mrb[0].mxu0
      %583 = vmatprep.mubr.bf16.mxu0 0
      %584 = vmatmul.mubr.bf16.gmra.mrb[0].mxu0 %v390
      %v585 = vpop.f32.mrb[0].mxu0
      %v586 = vadd.f32 0.0, %v585
      %v587 = vpop.f32.mrb[0].mxu0
      %v588 = vpop.f32.mrb[0].mxu0
      %v589 = vadd.f32 0.0, %v588
      %v590 = vpop.f32.mrb[0].mxu0
      %591 = vmatprep.mubr.bf16.mxu0 0
      %592 = vmatmul.mubr.bf16.gmra.mrb[0].mxu0 %v391
      %v593 = vpop.f32.mrb[0].mxu0
      %v594 = vadd.f32 0.0, %v593
      %v595 = vpop.f32.mrb[0].mxu0
      %v596 = vpop.f32.mrb[0].mxu0
      %v597 = vadd.f32 0.0, %v596
      %v598 = vpop.f32.mrb[0].mxu0
      %599 = vmatprep.mubr.bf16.mxu0 0
      %600 = vmatmul.mubr.bf16.gmra.mrb[0].mxu0 %v392
      %v601 = vpop.f32.mrb[0].mxu0
      %v602 = vadd.f32 0.0, %v601
      %v603 = vpop.f32.mrb[0].mxu0
      %v604 = vpop.f32.mrb[0].mxu0
      %v605 = vadd.f32 0.0, %v604
      %v606 = vpop.f32.mrb[0].mxu0
      %607 = vmatprep.mubr.bf16.mxu0 0
      %608 = vmatmul.mubr.bf16.gmra.mrb[0].mxu0 %v393
      %v609 = vpop.f32.mrb[0].mxu0
      %v610 = vadd.f32 0.0, %v609
      %v611 = vpop.f32.mrb[0].mxu0
      %v612 = vpop.f32.mrb[0].mxu0
      %v613 = vadd.f32 0.0, %v612
      %v614 = vpop.f32.mrb[0].mxu0
      %615 = vmatprep.mubr.bf16.mxu0 0
      %616 = vmatmul.mubr.bf16.gmra.mrb[0].mxu0 %v394
      %v617 = vpop.f32.mrb[0].mxu0
      %v618 = vadd.f32 0.0, %v617
      %v619 = vpop.f32.mrb[0].mxu0
      %v620 = vpop.f32.mrb[0].mxu0
      %v621 = vadd.f32 0.0, %v620
      %v622 = vpop.f32.mrb[0].mxu0
      %623 = vmatprep.mubr.bf16.mxu0 0
      %624 = vmatmul.mubr.bf16.gmra.mrb[0].mxu0 %v395
      %v625 = vpop.f32.mrb[0].mxu0
      %v626 = vadd.f32 0.0, %v625
      %v627 = vpop.f32.mrb[0].mxu0
      %v628 = vpop.f32.mrb[0].mxu0
      %v629 = vadd.f32 0.0, %v628
      %v630 = vpop.f32.mrb[0].mxu0
      %631 = vmatprep.mubr.bf16.mxu0 0
      %632 = vmatmul.mubr.bf16.gmra.mrb[0].mxu0 %v396
      %v633 = vpop.f32.mrb[0].mxu0
      %v634 = vadd.f32 0.0, %v633
      %v635 = vpop.f32.mrb[0].mxu0
      %v636 = vpop.f32.mrb[0].mxu0
      %v637 = vadd.f32 0.0, %v636
      %v638 = vpop.f32.mrb[0].mxu0
      %639 = vmatprep.mubr.bf16.mxu0 0
      %640 = vmatmul.mubr.bf16.gmra.mrb[0].mxu0 %v397
      %v641 = vpop.f32.mrb[0].mxu0
      %v642 = vadd.f32 0.0, %v641
      %v643 = vpop.f32.mrb[0].mxu0
      %v644 = vpop.f32.mrb[0].mxu0
      %v645 = vadd.f32 0.0, %v644
      %v646 = vpop.f32.mrb[0].mxu0
      %647 = vmatprep.mubr.bf16.mxu0 0
      %648 = vmatmul.mubr.bf16.gmra.mrb[0].mxu0 %v398
      %v649 = vpop.f32.mrb[0].mxu0
      %v650 = vadd.f32 0.0, %v649
      %v651 = vpop.f32.mrb[0].mxu0
      %v652 = vpop.f32.mrb[0].mxu0
      %v653 = vadd.f32 0.0, %v652
      %v654 = vpop.f32.mrb[0].mxu0
      %655 = vmatprep.mubr.bf16.mxu0 0
      %656 = vmatmul.mubr.bf16.gmra.mrb[0].mxu0 %v399
      %v657 = vpop.f32.mrb[0].mxu0
      %v658 = vadd.f32 0.0, %v657
      %v659 = vpop.f32.mrb[0].mxu0
      %v660 = vpop.f32.mrb[0].mxu0
      %v661 = vadd.f32 0.0, %v660
      %v662 = vpop.f32.mrb[0].mxu0
      %663 = vmatprep.mubr.bf16.mxu0 0
      %664 = vmatmul.mubr.bf16.gmra.mrb[0].mxu0 %v400
      %v665 = vpop.f32.mrb[0].mxu0
      %v666 = vadd.f32 0.0, %v665
      %v667 = vpop.f32.mrb[0].mxu0
      %v668 = vpop.f32.mrb[0].mxu0
      %v669 = vadd.f32 0.0, %v668
      %v670 = vpop.f32.mrb[0].mxu0
      %671 = vmatprep.mubr.bf16.mxu0 0
      %672 = vmatmul.mubr.bf16.gmra.mrb[0].mxu0 %v401
      %v673 = vpop.f32.mrb[0].mxu0
      %v674 = vadd.f32 0.0, %v673
      %v675 = vpop.f32.mrb[0].mxu0
      %v676 = vpop.f32.mrb[0].mxu0
      %v677 = vadd.f32 0.0, %v676
      %v678 = vpop.f32.mrb[0].mxu0
      %679 = vmatprep.mubr.bf16.mxu0 0
      %680 = vmatmul.mubr.bf16.gmra.mrb[0].mxu0 %v402
      %v681 = vpop.f32.mrb[0].mxu0
      %v682 = vadd.f32 0.0, %v681
      %v683 = vpop.f32.mrb[0].mxu0
      %v684 = vpop.f32.mrb[0].mxu0
      %v685 = vadd.f32 0.0, %v684
      %v686 = vpop.f32.mrb[0].mxu0
      %687 = vmatprep.mubr.bf16.mxu0 0
      %688 = vmatmul.mubr.bf16.gmra.mrb[0].mxu0 %v403
      %v689 = vpop.f32.mrb[0].mxu0
      %v690 = vadd.f32 0.0, %v689
      %v691 = vpop.f32.mrb[0].mxu0
      %v692 = vpop.f32.mrb[0].mxu0
      %v693 = vadd.f32 0.0, %v692
      %v694 = vpop.f32.mrb[0].mxu0
      %695 = vmatprep.mubr.bf16.mxu0 0
      %696 = vmatmul.mubr.bf16.gmra.mrb[0].mxu0 %v404
      %v697 = vpop.f32.mrb[0].mxu0
      %v698 = vadd.f32 0.0, %v697
      %v699 = vpop.f32.mrb[0].mxu0
      %v700 = vpop.f32.mrb[0].mxu0
      %v701 = vadd.f32 0.0, %v700
      %v702 = vpop.f32.mrb[0].mxu0
      %703 = vmatprep.mubr.bf16.mxu0 0
      %704 = vmatmul.mubr.bf16.gmra.mrb[0].mxu0 %v405
      %v705 = vpop.f32.mrb[0].mxu0
      %v706 = vadd.f32 0.0, %v705
      %v707 = vpop.f32.mrb[0].mxu0
      %v708 = vpop.f32.mrb[0].mxu0
      %v709 = vadd.f32 0.0, %v708
      %v710 = vpop.f32.mrb[0].mxu0
      %711 = vmatprep.mubr.bf16.mxu0 0
      %712 = vmatmul.mubr.bf16.gmra.mrb[0].mxu0 %v406
      %v713 = vpop.f32.mrb[0].mxu0
      %v714 = vadd.f32 0.0, %v713
      %v715 = vpop.f32.mrb[0].mxu0
      %v716 = vpop.f32.mrb[0].mxu0
      %v717 = vadd.f32 0.0, %v716
      %v718 = vpop.f32.mrb[0].mxu0
      %719 = vmatprep.mubr.bf16.mxu0 0
      %720 = vmatmul.mubr.bf16.gmra.mrb[0].mxu0 %v407
      %v721 = vpop.f32.mrb[0].mxu0
      %v722 = vadd.f32 0.0, %v721
      %v723 = vpop.f32.mrb[0].mxu0
      %v724 = vpop.f32.mrb[0].mxu0
      %v725 = vadd.f32 0.0, %v724
      %v726 = vpop.f32.mrb[0].mxu0
      %727 = vmatprep.mubr.bf16.mxu0 0
      %728 = vmatmul.mubr.bf16.gmra.mrb[0].mxu0 %v408
      %v729 = vpop.f32.mrb[0].mxu0
      %v730 = vadd.f32 0.0, %v729
      %v731 = vpop.f32.mrb[0].mxu0
      %v732 = vpop.f32.mrb[0].mxu0
      %v733 = vadd.f32 0.0, %v732
      %v734 = vpop.f32.mrb[0].mxu0
      %735 = vmatprep.mubr.bf16.mxu0 0
      %736 = vmatmul.mubr.bf16.gmra.mrb[0].mxu0 %v409
      %v737 = vpop.f32.mrb[0].mxu0
      %v738 = vadd.f32 0.0, %v737
      %v739 = vpop.f32.mrb[0].mxu0
      %v740 = vpop.f32.mrb[0].mxu0
      %v741 = vadd.f32 0.0, %v740
      %v742 = vpop.f32.mrb[0].mxu0
      %743 = vmatprep.mubr.bf16.mxu0 0
      %744 = vmatmul.mubr.bf16.gmra.mrb[0].mxu0 %v410
      %v745 = vpop.f32.mrb[0].mxu0
      %v746 = vadd.f32 0.0, %v745
      %v747 = vpop.f32.mrb[0].mxu0
      %v748 = vpop.f32.mrb[0].mxu0
      %v749 = vadd.f32 0.0, %v748
      %v750 = vpop.f32.mrb[0].mxu0
      %751 = vmatprep.mubr.bf16.mxu0 0
      %752 = vmatmul.mubr.bf16.gmra.mrb[0].mxu0 %v411
      %v753 = vpop.f32.mrb[0].mxu0
      %v754 = vadd.f32 0.0, %v753
      %v755 = vpop.f32.mrb[0].mxu0
      %v756 = vpop.f32.mrb[0].mxu0
      %v757 = vadd.f32 0.0, %v756
      %v758 = vpop.f32.mrb[0].mxu0
      %759 = vmatprep.mubr.bf16.mxu0 0
      %760 = vmatmul.mubr.bf16.gmra.mrb[0].mxu0 %v412
      %v761 = vpop.f32.mrb[0].mxu0
      %v762 = vadd.f32 0.0, %v761
      %v763 = vpop.f32.mrb[0].mxu0
      %v764 = vpop.f32.mrb[0].mxu0
      %v765 = vadd.f32 0.0, %v764
      %v766 = vpop.f32.mrb[0].mxu0
      %767 = vmatprep.mubr.bf16.mxu0 0
      %768 = vmatmul.mubr.bf16.gmra.mrb[0].mxu0 %v413
      %v769 = vpop.f32.mrb[0].mxu0
      %v770 = vadd.f32 0.0, %v769
      %v771 = vpop.f32.mrb[0].mxu0
      %v772 = vpop.f32.mrb[0].mxu0
      %v773 = vadd.f32 0.0, %v772
      %v774 = vpop.f32.mrb[0].mxu0
      %775 = vmatprep.mubr.bf16.mxu0 0
      %776 = vmatmul.mubr.bf16.gmra.mrb[0].mxu0 %v414
      %v777 = vpop.f32.mrb[0].mxu0
      %v778 = vadd.f32 0.0, %v777
      %v779 = vpop.f32.mrb[0].mxu0
      %v780 = vpop.f32.mrb[0].mxu0
      %v781 = vadd.f32 0.0, %v780
      %v782 = vpop.f32.mrb[0].mxu0
      %783 = vdwg.mxu0
      %v784 = vld [vmem:[%s2] sm:$0x1]
      %v786 = vlaneseq
      %v787 = vshrl.u32 %v786, 7
      %v788 = vsub.s32 0, %v787
      %v789 = vrot.slane %v784, %v788
      %v791 = vadd.f32 %v530, %v789
      %v792 = vadd.f32 %v533, %v789
      %v793 = vadd.f32 %v538, %v789
      %v794 = vadd.f32 %v541, %v789
      %v795 = vadd.f32 %v546, %v789
      %v796 = vadd.f32 %v549, %v789
      %v797 = vadd.f32 %v554, %v789
      %v798 = vadd.f32 %v557, %v789
      %v799 = vadd.f32 %v562, %v789
      %v800 = vadd.f32 %v565, %v789
      %v801 = vadd.f32 %v570, %v789
      %v802 = vadd.f32 %v573, %v789
      %v803 = vadd.f32 %v578, %v789
      %v804 = vadd.f32 %v581, %v789
      %v805 = vadd.f32 %v586, %v789
      %v806 = vadd.f32 %v589, %v789
      %v807 = vadd.f32 %v594, %v789
      %v808 = vadd.f32 %v597, %v789
      %v809 = vadd.f32 %v602, %v789
      %v810 = vadd.f32 %v605, %v789
      %v811 = vadd.f32 %v610, %v789
      %v812 = vadd.f32 %v613, %v789
      %v813 = vadd.f32 %v618, %v789
      %v814 = vadd.f32 %v621, %v789
      %v815 = vadd.f32 %v626, %v789
      %v816 = vadd.f32 %v629, %v789
      %v817 = vadd.f32 %v634, %v789
      %v818 = vadd.f32 %v637, %v789
      %v819 = vadd.f32 %v642, %v789
      %v820 = vadd.f32 %v645, %v789
      %v821 = vadd.f32 %v650, %v789
      %v822 = vadd.f32 %v653, %v789
      %v823 = vadd.f32 %v658, %v789
      %v824 = vadd.f32 %v661, %v789
      %v825 = vadd.f32 %v666, %v789
      %v826 = vadd.f32 %v669, %v789
      %v827 = vadd.f32 %v674, %v789
      %v828 = vadd.f32 %v677, %v789
      %v829 = vadd.f32 %v682, %v789
      %v830 = vadd.f32 %v685, %v789
      %v831 = vadd.f32 %v690, %v789
      %v832 = vadd.f32 %v693, %v789
      %v833 = vadd.f32 %v698, %v789
      %v834 = vadd.f32 %v701, %v789
      %v835 = vadd.f32 %v706, %v789
      %v836 = vadd.f32 %v709, %v789
      %v837 = vadd.f32 %v714, %v789
      %v838 = vadd.f32 %v717, %v789
      %v839 = vadd.f32 %v722, %v789
      %v840 = vadd.f32 %v725, %v789
      %v841 = vadd.f32 %v730, %v789
      %v842 = vadd.f32 %v733, %v789
      %v843 = vadd.f32 %v738, %v789
      %v844 = vadd.f32 %v741, %v789
      %v845 = vadd.f32 %v746, %v789
      %v846 = vadd.f32 %v749, %v789
      %v847 = vadd.f32 %v754, %v789
      %v848 = vadd.f32 %v757, %v789
      %v849 = vadd.f32 %v762, %v789
      %v850 = vadd.f32 %v765, %v789
      %v851 = vadd.f32 %v770, %v789
      %v852 = vadd.f32 %v773, %v789
      %v853 = vadd.f32 %v778, %v789
      %v854 = vadd.f32 %v781, %v789
      %vm855 = vcmp.ge.f32.partialorder %v791, 0.0
      %vm856 = vcmp.ge.f32.partialorder %v792, 0.0
      %vm857 = vcmp.ge.f32.partialorder %v793, 0.0
      %vm858 = vcmp.ge.f32.partialorder %v794, 0.0
      %vm859 = vcmp.ge.f32.partialorder %v795, 0.0
      %vm860 = vcmp.ge.f32.partialorder %v796, 0.0
      %vm861 = vcmp.ge.f32.partialorder %v797, 0.0
      %vm862 = vcmp.ge.f32.partialorder %v798, 0.0
      %vm863 = vcmp.ge.f32.partialorder %v799, 0.0
      %vm864 = vcmp.ge.f32.partialorder %v800, 0.0
      %vm865 = vcmp.ge.f32.partialorder %v801, 0.0
      %vm866 = vcmp.ge.f32.partialorder %v802, 0.0
      %vm867 = vcmp.ge.f32.partialorder %v803, 0.0
      %vm868 = vcmp.ge.f32.partialorder %v804, 0.0
      %vm869 = vcmp.ge.f32.partialorder %v805, 0.0
      %vm870 = vcmp.ge.f32.partialorder %v806, 0.0
      %vm871 = vcmp.ge.f32.partialorder %v807, 0.0
      %vm872 = vcmp.ge.f32.partialorder %v808, 0.0
      %vm873 = vcmp.ge.f32.partialorder %v809, 0.0
      %vm874 = vcmp.ge.f32.partialorder %v810, 0.0
      %vm875 = vcmp.ge.f32.partialorder %v811, 0.0
      %vm876 = vcmp.ge.f32.partialorder %v812, 0.0
      %vm877 = vcmp.ge.f32.partialorder %v813, 0.0
      %vm878 = vcmp.ge.f32.partialorder %v814, 0.0
      %vm879 = vcmp.ge.f32.partialorder %v815, 0.0
      %vm880 = vcmp.ge.f32.partialorder %v816, 0.0
      %vm881 = vcmp.ge.f32.partialorder %v817, 0.0
      %vm882 = vcmp.ge.f32.partialorder %v818, 0.0
      %vm883 = vcmp.ge.f32.partialorder %v819, 0.0
      %vm884 = vcmp.ge.f32.partialorder %v820, 0.0
      %vm885 = vcmp.ge.f32.partialorder %v821, 0.0
      %vm886 = vcmp.ge.f32.partialorder %v822, 0.0
      %vm887 = vcmp.ge.f32.partialorder %v823, 0.0
      %vm888 = vcmp.ge.f32.partialorder %v824, 0.0
      %vm889 = vcmp.ge.f32.partialorder %v825, 0.0
      %vm890 = vcmp.ge.f32.partialorder %v826, 0.0
      %vm891 = vcmp.ge.f32.partialorder %v827, 0.0
      %vm892 = vcmp.ge.f32.partialorder %v828, 0.0
      %vm893 = vcmp.ge.f32.partialorder %v829, 0.0
      %vm894 = vcmp.ge.f32.partialorder %v830, 0.0
      %vm895 = vcmp.ge.f32.partialorder %v831, 0.0
      %vm896 = vcmp.ge.f32.partialorder %v832, 0.0
      %vm897 = vcmp.ge.f32.partialorder %v833, 0.0
      %vm898 = vcmp.ge.f32.partialorder %v834, 0.0
      %vm899 = vcmp.ge.f32.partialorder %v835, 0.0
      %vm900 = vcmp.ge.f32.partialorder %v836, 0.0
      %vm901 = vcmp.ge.f32.partialorder %v837, 0.0
      %vm902 = vcmp.ge.f32.partialorder %v838, 0.0
      %vm903 = vcmp.ge.f32.partialorder %v839, 0.0
      %vm904 = vcmp.ge.f32.partialorder %v840, 0.0
      %vm905 = vcmp.ge.f32.partialorder %v841, 0.0
      %vm906 = vcmp.ge.f32.partialorder %v842, 0.0
      %vm907 = vcmp.ge.f32.partialorder %v843, 0.0
      %vm908 = vcmp.ge.f32.partialorder %v844, 0.0
      %vm909 = vcmp.ge.f32.partialorder %v845, 0.0
      %vm910 = vcmp.ge.f32.partialorder %v846, 0.0
      %vm911 = vcmp.ge.f32.partialorder %v847, 0.0
      %vm912 = vcmp.ge.f32.partialorder %v848, 0.0
      %vm913 = vcmp.ge.f32.partialorder %v849, 0.0
      %vm914 = vcmp.ge.f32.partialorder %v850, 0.0
      %vm915 = vcmp.ge.f32.partialorder %v851, 0.0
      %vm916 = vcmp.ge.f32.partialorder %v852, 0.0
      %vm917 = vcmp.ge.f32.partialorder %v853, 0.0
      %vm918 = vcmp.ge.f32.partialorder %v854, 0.0
      %v919 = vmul.f32 %v791, 0.2
      %v920 = vmul.f32 %v792, 0.2
      %v921 = vmul.f32 %v793, 0.2
      %v922 = vmul.f32 %v794, 0.2
      %v923 = vmul.f32 %v795, 0.2
      %v924 = vmul.f32 %v796, 0.2
      %v925 = vmul.f32 %v797, 0.2
      %v926 = vmul.f32 %v798, 0.2
      %v927 = vmul.f32 %v799, 0.2
      %v928 = vmul.f32 %v800, 0.2
      %v929 = vmul.f32 %v801, 0.2
      %v930 = vmul.f32 %v802, 0.2
      %v931 = vmul.f32 %v803, 0.2
      %v932 = vmul.f32 %v804, 0.2
      %v933 = vmul.f32 %v805, 0.2
      %v934 = vmul.f32 %v806, 0.2
      %v935 = vmul.f32 %v807, 0.2
      %v936 = vmul.f32 %v808, 0.2
      %v937 = vmul.f32 %v809, 0.2
      %v938 = vmul.f32 %v810, 0.2
      %v939 = vmul.f32 %v811, 0.2
      %v940 = vmul.f32 %v812, 0.2
      %v941 = vmul.f32 %v813, 0.2
      %v942 = vmul.f32 %v814, 0.2
      %v943 = vmul.f32 %v815, 0.2
      %v944 = vmul.f32 %v816, 0.2
      %v945 = vmul.f32 %v817, 0.2
      %v946 = vmul.f32 %v818, 0.2
      %v947 = vmul.f32 %v819, 0.2
      %v948 = vmul.f32 %v820, 0.2
      %v949 = vmul.f32 %v821, 0.2
      %v950 = vmul.f32 %v822, 0.2
      %v951 = vmul.f32 %v823, 0.2
      %v952 = vmul.f32 %v824, 0.2
      %v953 = vmul.f32 %v825, 0.2
      %v954 = vmul.f32 %v826, 0.2
      %v955 = vmul.f32 %v827, 0.2
      %v956 = vmul.f32 %v828, 0.2
      %v957 = vmul.f32 %v829, 0.2
      %v958 = vmul.f32 %v830, 0.2
      %v959 = vmul.f32 %v831, 0.2
      %v960 = vmul.f32 %v832, 0.2
      %v961 = vmul.f32 %v833, 0.2
      %v962 = vmul.f32 %v834, 0.2
      %v963 = vmul.f32 %v835, 0.2
      %v964 = vmul.f32 %v836, 0.2
      %v965 = vmul.f32 %v837, 0.2
      %v966 = vmul.f32 %v838, 0.2
      %v967 = vmul.f32 %v839, 0.2
      %v968 = vmul.f32 %v840, 0.2
      %v969 = vmul.f32 %v841, 0.2
      %v970 = vmul.f32 %v842, 0.2
      %v971 = vmul.f32 %v843, 0.2
      %v972 = vmul.f32 %v844, 0.2
      %v973 = vmul.f32 %v845, 0.2
      %v974 = vmul.f32 %v846, 0.2
      %v975 = vmul.f32 %v847, 0.2
      %v976 = vmul.f32 %v848, 0.2
      %v977 = vmul.f32 %v849, 0.2
      %v978 = vmul.f32 %v850, 0.2
      %v979 = vmul.f32 %v851, 0.2
      %v980 = vmul.f32 %v852, 0.2
      %v981 = vmul.f32 %v853, 0.2
      %v982 = vmul.f32 %v854, 0.2
      %v983 = vsel %vm855, %v791, %v919
      %v984 = vsel %vm856, %v792, %v920
      %v985 = vsel %vm857, %v793, %v921
      %v986 = vsel %vm858, %v794, %v922
      %v987 = vsel %vm859, %v795, %v923
      %v988 = vsel %vm860, %v796, %v924
      %v989 = vsel %vm861, %v797, %v925
      %v990 = vsel %vm862, %v798, %v926
      %v991 = vsel %vm863, %v799, %v927
      %v992 = vsel %vm864, %v800, %v928
      %v993 = vsel %vm865, %v801, %v929
      %v994 = vsel %vm866, %v802, %v930
      %v995 = vsel %vm867, %v803, %v931
      %v996 = vsel %vm868, %v804, %v932
      %v997 = vsel %vm869, %v805, %v933
      %v998 = vsel %vm870, %v806, %v934
      %v999 = vsel %vm871, %v807, %v935
      %v1000 = vsel %vm872, %v808, %v936
      %v1001 = vsel %vm873, %v809, %v937
      %v1002 = vsel %vm874, %v810, %v938
      %v1003 = vsel %vm875, %v811, %v939
      %v1004 = vsel %vm876, %v812, %v940
      %v1005 = vsel %vm877, %v813, %v941
      %v1006 = vsel %vm878, %v814, %v942
      %v1007 = vsel %vm879, %v815, %v943
      %v1008 = vsel %vm880, %v816, %v944
      %v1009 = vsel %vm881, %v817, %v945
      %v1010 = vsel %vm882, %v818, %v946
      %v1011 = vsel %vm883, %v819, %v947
      %v1012 = vsel %vm884, %v820, %v948
      %v1013 = vsel %vm885, %v821, %v949
      %v1014 = vsel %vm886, %v822, %v950
      %v1015 = vsel %vm887, %v823, %v951
      %v1016 = vsel %vm888, %v824, %v952
      %v1017 = vsel %vm889, %v825, %v953
      %v1018 = vsel %vm890, %v826, %v954
      %v1019 = vsel %vm891, %v827, %v955
      %v1020 = vsel %vm892, %v828, %v956
      %v1021 = vsel %vm893, %v829, %v957
      %v1022 = vsel %vm894, %v830, %v958
      %v1023 = vsel %vm895, %v831, %v959
      %v1024 = vsel %vm896, %v832, %v960
      %v1025 = vsel %vm897, %v833, %v961
      %v1026 = vsel %vm898, %v834, %v962
      %v1027 = vsel %vm899, %v835, %v963
      %v1028 = vsel %vm900, %v836, %v964
      %v1029 = vsel %vm901, %v837, %v965
      %v1030 = vsel %vm902, %v838, %v966
      %v1031 = vsel %vm903, %v839, %v967
      %v1032 = vsel %vm904, %v840, %v968
      %v1033 = vsel %vm905, %v841, %v969
      %v1034 = vsel %vm906, %v842, %v970
      %v1035 = vsel %vm907, %v843, %v971
      %v1036 = vsel %vm908, %v844, %v972
      %v1037 = vsel %vm909, %v845, %v973
      %v1038 = vsel %vm910, %v846, %v974
      %v1039 = vsel %vm911, %v847, %v975
      %v1040 = vsel %vm912, %v848, %v976
      %v1041 = vsel %vm913, %v849, %v977
      %v1042 = vsel %vm914, %v850, %v978
      %v1043 = vsel %vm915, %v851, %v979
      %v1044 = vsel %vm916, %v852, %v980
      %v1045 = vsel %vm917, %v853, %v981
      %v1046 = vsel %vm918, %v854, %v982
      %v1047 = vpack.c.bf16 %v984, %v983
      %v1048 = vpack.c.bf16 %v986, %v985
      %v1049 = vpack.c.bf16 %v988, %v987
      %v1050 = vpack.c.bf16 %v990, %v989
      %v1051 = vpack.c.bf16 %v992, %v991
      %v1052 = vpack.c.bf16 %v994, %v993
      %v1053 = vpack.c.bf16 %v996, %v995
      %v1054 = vpack.c.bf16 %v998, %v997
      %v1055 = vpack.c.bf16 %v1000, %v999
      %v1056 = vpack.c.bf16 %v1002, %v1001
      %v1057 = vpack.c.bf16 %v1004, %v1003
      %v1058 = vpack.c.bf16 %v1006, %v1005
      %v1059 = vpack.c.bf16 %v1008, %v1007
      %v1060 = vpack.c.bf16 %v1010, %v1009
      %v1061 = vpack.c.bf16 %v1012, %v1011
      %v1062 = vpack.c.bf16 %v1014, %v1013
      %v1063 = vpack.c.bf16 %v1016, %v1015
      %v1064 = vpack.c.bf16 %v1018, %v1017
      %v1065 = vpack.c.bf16 %v1020, %v1019
      %v1066 = vpack.c.bf16 %v1022, %v1021
      %v1067 = vpack.c.bf16 %v1024, %v1023
      %v1068 = vpack.c.bf16 %v1026, %v1025
      %v1069 = vpack.c.bf16 %v1028, %v1027
      %v1070 = vpack.c.bf16 %v1030, %v1029
      %v1071 = vpack.c.bf16 %v1032, %v1031
      %v1072 = vpack.c.bf16 %v1034, %v1033
      %v1073 = vpack.c.bf16 %v1036, %v1035
      %v1074 = vpack.c.bf16 %v1038, %v1037
      %v1075 = vpack.c.bf16 %v1040, %v1039
      %v1076 = vpack.c.bf16 %v1042, %v1041
      %v1077 = vpack.c.bf16 %v1044, %v1043
      %v1078 = vpack.c.bf16 %v1046, %v1045
      %v1111 = vunpack.c.l.b16 %v1047
      %v1112 = vunpack.c.h.b16 %v1047
      %v1113 = vunpack.c.l.b16 %v1048
      %v1114 = vunpack.c.h.b16 %v1048
      %v1115 = vunpack.c.l.b16 %v1049
      %v1116 = vunpack.c.h.b16 %v1049
      %v1117 = vunpack.c.l.b16 %v1050
      %v1118 = vunpack.c.h.b16 %v1050
      %v1119 = vunpack.c.l.b16 %v1051
      %v1120 = vunpack.c.h.b16 %v1051
      %v1121 = vunpack.c.l.b16 %v1052
      %v1122 = vunpack.c.h.b16 %v1052
      %v1123 = vunpack.c.l.b16 %v1053
      %v1124 = vunpack.c.h.b16 %v1053
      %v1125 = vunpack.c.l.b16 %v1054
      %v1126 = vunpack.c.h.b16 %v1054
      %v1127 = vunpack.c.l.b16 %v1055
      %v1128 = vunpack.c.h.b16 %v1055
      %v1129 = vunpack.c.l.b16 %v1056
      %v1130 = vunpack.c.h.b16 %v1056
      %v1131 = vunpack.c.l.b16 %v1057
      %v1132 = vunpack.c.h.b16 %v1057
      %v1133 = vunpack.c.l.b16 %v1058
      %v1134 = vunpack.c.h.b16 %v1058
      %v1135 = vunpack.c.l.b16 %v1059
      %v1136 = vunpack.c.h.b16 %v1059
      %v1137 = vunpack.c.l.b16 %v1060
      %v1138 = vunpack.c.h.b16 %v1060
      %v1139 = vunpack.c.l.b16 %v1061
      %v1140 = vunpack.c.h.b16 %v1061
      %v1141 = vunpack.c.l.b16 %v1062
      %v1142 = vunpack.c.h.b16 %v1062
      %v1143 = vunpack.c.l.b16 %v1063
      %v1144 = vunpack.c.h.b16 %v1063
      %v1145 = vunpack.c.l.b16 %v1064
      %v1146 = vunpack.c.h.b16 %v1064
      %v1147 = vunpack.c.l.b16 %v1065
      %v1148 = vunpack.c.h.b16 %v1065
      %v1149 = vunpack.c.l.b16 %v1066
      %v1150 = vunpack.c.h.b16 %v1066
      %v1151 = vunpack.c.l.b16 %v1067
      %v1152 = vunpack.c.h.b16 %v1067
      %v1153 = vunpack.c.l.b16 %v1068
      %v1154 = vunpack.c.h.b16 %v1068
      %v1155 = vunpack.c.l.b16 %v1069
      %v1156 = vunpack.c.h.b16 %v1069
      %v1157 = vunpack.c.l.b16 %v1070
      %v1158 = vunpack.c.h.b16 %v1070
      %v1159 = vunpack.c.l.b16 %v1071
      %v1160 = vunpack.c.h.b16 %v1071
      %v1161 = vunpack.c.l.b16 %v1072
      %v1162 = vunpack.c.h.b16 %v1072
      %v1163 = vunpack.c.l.b16 %v1073
      %v1164 = vunpack.c.h.b16 %v1073
      %v1165 = vunpack.c.l.b16 %v1074
      %v1166 = vunpack.c.h.b16 %v1074
      %v1167 = vunpack.c.l.b16 %v1075
      %v1168 = vunpack.c.h.b16 %v1075
      %v1169 = vunpack.c.l.b16 %v1076
      %v1170 = vunpack.c.h.b16 %v1076
      %v1171 = vunpack.c.l.b16 %v1077
      %v1172 = vunpack.c.h.b16 %v1077
      %v1173 = vunpack.c.l.b16 %v1078
      %v1174 = vunpack.c.h.b16 %v1078
      %v1175 = vpack.c.b16 %v1111, %v1111
      %v1176 = vpack.c.b16 %v1112, %v1112
      %v1177 = vpack.c.b16 %v1113, %v1113
      %v1178 = vpack.c.b16 %v1114, %v1114
      %v1179 = vpack.c.b16 %v1115, %v1115
      %v1180 = vpack.c.b16 %v1116, %v1116
      %v1181 = vpack.c.b16 %v1117, %v1117
      %v1182 = vpack.c.b16 %v1118, %v1118
      %v1183 = vpack.c.b16 %v1119, %v1119
      %v1184 = vpack.c.b16 %v1120, %v1120
      %v1185 = vpack.c.b16 %v1121, %v1121
      %v1186 = vpack.c.b16 %v1122, %v1122
      %v1187 = vpack.c.b16 %v1123, %v1123
      %v1188 = vpack.c.b16 %v1124, %v1124
      %v1189 = vpack.c.b16 %v1125, %v1125
      %v1190 = vpack.c.b16 %v1126, %v1126
      %v1191 = vpack.c.b16 %v1127, %v1127
      %v1192 = vpack.c.b16 %v1128, %v1128
      %v1193 = vpack.c.b16 %v1129, %v1129
      %v1194 = vpack.c.b16 %v1130, %v1130
      %v1195 = vpack.c.b16 %v1131, %v1131
      %v1196 = vpack.c.b16 %v1132, %v1132
      %v1197 = vpack.c.b16 %v1133, %v1133
      %v1198 = vpack.c.b16 %v1134, %v1134
      %v1199 = vpack.c.b16 %v1135, %v1135
      %v1200 = vpack.c.b16 %v1136, %v1136
      %v1201 = vpack.c.b16 %v1137, %v1137
      %v1202 = vpack.c.b16 %v1138, %v1138
      %v1203 = vpack.c.b16 %v1139, %v1139
      %v1204 = vpack.c.b16 %v1140, %v1140
      %v1205 = vpack.c.b16 %v1141, %v1141
      %v1206 = vpack.c.b16 %v1142, %v1142
      %v1207 = vpack.c.b16 %v1143, %v1143
      %v1208 = vpack.c.b16 %v1144, %v1144
      %v1209 = vpack.c.b16 %v1145, %v1145
      %v1210 = vpack.c.b16 %v1146, %v1146
      %v1211 = vpack.c.b16 %v1147, %v1147
      %v1212 = vpack.c.b16 %v1148, %v1148
      %v1213 = vpack.c.b16 %v1149, %v1149
      %v1214 = vpack.c.b16 %v1150, %v1150
      %v1215 = vpack.c.b16 %v1151, %v1151
      %v1216 = vpack.c.b16 %v1152, %v1152
      %v1217 = vpack.c.b16 %v1153, %v1153
      %v1218 = vpack.c.b16 %v1154, %v1154
      %v1219 = vpack.c.b16 %v1155, %v1155
      %v1220 = vpack.c.b16 %v1156, %v1156
      %v1221 = vpack.c.b16 %v1157, %v1157
      %v1222 = vpack.c.b16 %v1158, %v1158
      %v1223 = vpack.c.b16 %v1159, %v1159
      %v1224 = vpack.c.b16 %v1160, %v1160
      %v1225 = vpack.c.b16 %v1161, %v1161
      %v1226 = vpack.c.b16 %v1162, %v1162
      %v1227 = vpack.c.b16 %v1163, %v1163
      %v1228 = vpack.c.b16 %v1164, %v1164
      %v1229 = vpack.c.b16 %v1165, %v1165
      %v1230 = vpack.c.b16 %v1166, %v1166
      %v1231 = vpack.c.b16 %v1167, %v1167
      %v1232 = vpack.c.b16 %v1168, %v1168
      %v1233 = vpack.c.b16 %v1169, %v1169
      %v1234 = vpack.c.b16 %v1170, %v1170
      %v1235 = vpack.c.b16 %v1171, %v1171
      %v1236 = vpack.c.b16 %v1172, %v1172
      %v1237 = vpack.c.b16 %v1173, %v1173
      %v1238 = vpack.c.b16 %v1174, %v1174
      %vm1303 = vcmask 60416
      %1304 = vst.msk [vmem:[%s172] sm:$0xf] %vm1303, %v1175
      %1305 = vst.msk [vmem:[%s172 + $0x4] sm:$0xf] %vm1303, %v1176
      %1306 = vst.msk [vmem:[%s172 + $0x8] sm:$0xf] %vm1303, %v1177
      %1307 = vst.msk [vmem:[%s172 + $0xc] sm:$0xf] %vm1303, %v1178
      %1308 = vst.msk [vmem:[%s172 + $0x10] sm:$0xf] %vm1303, %v1179
      %1309 = vst.msk [vmem:[%s172 + $0x14] sm:$0xf] %vm1303, %v1180
      %1310 = vst.msk [vmem:[%s172 + $0x18] sm:$0xf] %vm1303, %v1181
      %1311 = vst.msk [vmem:[%s172 + $0x1c] sm:$0xf] %vm1303, %v1182
      %1312 = vst.msk [vmem:[%s172 + $0x20] sm:$0xf] %vm1303, %v1183
      %1313 = vst.msk [vmem:[%s172 + $0x24] sm:$0xf] %vm1303, %v1184
      %1314 = vst.msk [vmem:[%s172 + $0x28] sm:$0xf] %vm1303, %v1185
      %1315 = vst.msk [vmem:[%s172 + $0x2c] sm:$0xf] %vm1303, %v1186
      %1316 = vst.msk [vmem:[%s172 + $0x30] sm:$0xf] %vm1303, %v1187
      %1317 = vst.msk [vmem:[%s172 + $0x34] sm:$0xf] %vm1303, %v1188
      %1318 = vst.msk [vmem:[%s172 + $0x38] sm:$0xf] %vm1303, %v1189
      %1319 = vst.msk [vmem:[%s172 + $0x3c] sm:$0xf] %vm1303, %v1190
      %1320 = vst.msk [vmem:[%s172 + $0x40] sm:$0xf] %vm1303, %v1191
      %1321 = vst.msk [vmem:[%s172 + $0x44] sm:$0xf] %vm1303, %v1192
      %1322 = vst.msk [vmem:[%s172 + $0x48] sm:$0xf] %vm1303, %v1193
      %1323 = vst.msk [vmem:[%s172 + $0x4c] sm:$0xf] %vm1303, %v1194
      %1324 = vst.msk [vmem:[%s172 + $0x50] sm:$0xf] %vm1303, %v1195
      %1325 = vst.msk [vmem:[%s172 + $0x54] sm:$0xf] %vm1303, %v1196
      %1326 = vst.msk [vmem:[%s172 + $0x58] sm:$0xf] %vm1303, %v1197
      %1327 = vst.msk [vmem:[%s172 + $0x5c] sm:$0xf] %vm1303, %v1198
      %1328 = vst.msk [vmem:[%s172 + $0x60] sm:$0xf] %vm1303, %v1199
      %1329 = vst.msk [vmem:[%s172 + $0x64] sm:$0xf] %vm1303, %v1200
      %1330 = vst.msk [vmem:[%s172 + $0x68] sm:$0xf] %vm1303, %v1201
      %1331 = vst.msk [vmem:[%s172 + $0x6c] sm:$0xf] %vm1303, %v1202
      %1332 = vst.msk [vmem:[%s172 + $0x70] sm:$0xf] %vm1303, %v1203
      %1333 = vst.msk [vmem:[%s172 + $0x74] sm:$0xf] %vm1303, %v1204
      %1334 = vst.msk [vmem:[%s172 + $0x78] sm:$0xf] %vm1303, %v1205
      %1335 = vst.msk [vmem:[%s172 + $0x7c] sm:$0xf] %vm1303, %v1206
      %1336 = vst.msk [vmem:[%s172 + $0x80] sm:$0xf] %vm1303, %v1207
      %1337 = vst.msk [vmem:[%s172 + $0x84] sm:$0xf] %vm1303, %v1208
      %1338 = vst.msk [vmem:[%s172 + $0x88] sm:$0xf] %vm1303, %v1209
      %1339 = vst.msk [vmem:[%s172 + $0x8c] sm:$0xf] %vm1303, %v1210
      %1340 = vst.msk [vmem:[%s172 + $0x90] sm:$0xf] %vm1303, %v1211
      %1341 = vst.msk [vmem:[%s172 + $0x94] sm:$0xf] %vm1303, %v1212
      %1342 = vst.msk [vmem:[%s172 + $0x98] sm:$0xf] %vm1303, %v1213
      %1343 = vst.msk [vmem:[%s172 + $0x9c] sm:$0xf] %vm1303, %v1214
      %1344 = vst.msk [vmem:[%s172 + $0xa0] sm:$0xf] %vm1303, %v1215
      %1345 = vst.msk [vmem:[%s172 + $0xa4] sm:$0xf] %vm1303, %v1216
      %1346 = vst.msk [vmem:[%s172 + $0xa8] sm:$0xf] %vm1303, %v1217
      %1347 = vst.msk [vmem:[%s172 + $0xac] sm:$0xf] %vm1303, %v1218
      %1348 = vst.msk [vmem:[%s172 + $0xb0] sm:$0xf] %vm1303, %v1219
      %1349 = vst.msk [vmem:[%s172 + $0xb4] sm:$0xf] %vm1303, %v1220
      %1350 = vst.msk [vmem:[%s172 + $0xb8] sm:$0xf] %vm1303, %v1221
      %1351 = vst.msk [vmem:[%s172 + $0xbc] sm:$0xf] %vm1303, %v1222
      %1352 = vst.msk [vmem:[%s172 + $0xc0] sm:$0xf] %vm1303, %v1223
      %1353 = vst.msk [vmem:[%s172 + $0xc4] sm:$0xf] %vm1303, %v1224
      %1354 = vst.msk [vmem:[%s172 + $0xc8] sm:$0xf] %vm1303, %v1225
      %1355 = vst.msk [vmem:[%s172 + $0xcc] sm:$0xf] %vm1303, %v1226
      %1356 = vst.msk [vmem:[%s172 + $0xd0] sm:$0xf] %vm1303, %v1227
      %1357 = vst.msk [vmem:[%s172 + $0xd4] sm:$0xf] %vm1303, %v1228
      %1358 = vst.msk [vmem:[%s172 + $0xd8] sm:$0xf] %vm1303, %v1229
      %1359 = vst.msk [vmem:[%s172 + $0xdc] sm:$0xf] %vm1303, %v1230
      %1360 = vst.msk [vmem:[%s172 + $0xe0] sm:$0xf] %vm1303, %v1231
      %1361 = vst.msk [vmem:[%s172 + $0xe4] sm:$0xf] %vm1303, %v1232
      %1362 = vst.msk [vmem:[%s172 + $0xe8] sm:$0xf] %vm1303, %v1233
      %1363 = vst.msk [vmem:[%s172 + $0xec] sm:$0xf] %vm1303, %v1234
      %1364 = vst.msk [vmem:[%s172 + $0xf0] sm:$0xf] %vm1303, %v1235
      %1365 = vst.msk [vmem:[%s172 + $0xf4] sm:$0xf] %vm1303, %v1236
      %1366 = vst.msk [vmem:[%s172 + $0xf8] sm:$0xf] %vm1303, %v1237
      %1367 = vst.msk [vmem:[%s172 + $0xfc] sm:$0xf] %vm1303, %v1238
      %s1368 = smul.u32 64, %s14
      %p1369 = scmp.lt.s32.totalorder %s1368, 255
      %s1370 = scalar_select %p1369, %s1368, 255
      %s1371 = smul.addr %s1370, 4
      %s1372 = scalar_lea.vmem %s3, %s1371
      // Predicated region
      $region33: #{discriminator_forward.5} parent=31 // pred_check
        %p1373 = pneg %p100
      $region34: #{discriminator_forward.5} parent=31 // pred_check_branch
        %1375 = sbr.rel (%p1373) target = $region36
      $region35: #{discriminator_forward.5} parent=31 // pred_region
        %s1376 = smul.u32 64, %s14
      $region36: #{discriminator_forward.5} parent=31 // pred_fallthru
        _
    $region32: #{discriminator_forward.5} parent=5 // pred_fallthru
      _
    %p1377 = scmp.le.s32.totalorder 2, %s9
    // Predicated region
    $region37: #{discriminator_forward.5} parent=5 // pred_check
      %p1378 = pneg %p1377
    $region38: #{discriminator_forward.5} parent=5 // pred_check_branch
      %1380 = sbr.rel (%p1378) target = $region40
    $region39: #{discriminator_forward.5} parent=5 // pred_region
      %s1381 = ssub.s32 %s9, 2
      // Predicated region
      $region41: #{discriminator_forward.5} parent=39 // pred_check
        %p1382 = pneg %p106
      $region42: #{discriminator_forward.5} parent=39 // pred_check_branch
        %1384 = sbr.rel (%p1382) target = $region44
      $region43: #{discriminator_forward.5} parent=39 // pred_region
        %s1385 = smul.u32 64, %s15
        %p1386 = scmp.lt.s32.totalorder %s1385, 255
        %s1387 = scalar_select %p1386, %s1385, 255
        %s1388 = smul.addr %s1387, 4
        %s1389 = scalar_lea.vmem %s3, %s1388
      $region44: #{discriminator_forward.5} parent=39 // pred_fallthru
        _
    $region40: #{discriminator_forward.5} parent=5 // pred_fallthru
      _
  $region6: #{discriminator_forward.5} parent=0 // loop_footer
    %s13 = sadd.s32 1, %s9
  $region7: #{discriminator_forward.5} parent=0 // loop_footer_branch
    %8 = sbr.rel target = $region3
  $region8: #{discriminator_forward.5} parent=0 // loop_exit
    _

// kernel: discriminator_forward.6
$region0: #{discriminator_forward.6}
  #allocation0 [shape = 'u32[]', space=smem, size = 0x4, offset = 0x4, fixed_abs, tag = 'smem constant byte address 0x4 - core index']
  #allocation1 [shape = 'u32[144,128]{1,0:T(1,128)}', space=vmem, size = 0x12000, scoped, tag = 'internal scratch']
  %s0 = inlined_call_operand.vmem [shape: bf16[512,128], index: 0, kind: input, shape index: {}]
  %s1 = inlined_call_operand.vmem [shape: bf16[128,128], index: 1, kind: input, shape index: {}]
  %s2 = inlined_call_operand.vmem [shape: f32[1,16], index: 2, kind: input, shape index: {}]
  %s3 = inlined_call_operand.vmem [shape: f32[1,16], index: 3, kind: input, shape index: {}]
  %s4 = inlined_call_operand.vmem [shape: bf16[512,16], index: 4, kind: output, shape index: {}]
  %s5 = sld [smem:[#allocation0]]
  $region26: #{discriminator_forward.6} parent=0
    _
  %s7 = ssub.s32 1, %s5
  %s8 = scalar_select 0, %s7, %s5
  // Predicated region
  $region2: #{discriminator_forward.6} parent=0 // pred_check
    _
  $region3: #{discriminator_forward.6} parent=0 // pred_check_branch
    %10 = sbr.rel (0) target = $region5
  $region4: #{discriminator_forward.6} parent=0 // pred_region
    _
  $region5: #{discriminator_forward.6} parent=0 // pred_fallthru
    _
  // Predicated region
  $region6: #{discriminator_forward.6} parent=0 // pred_check
    _
  $region7: #{discriminator_forward.6} parent=0 // pred_check_branch
    %12 = sbr.rel (0) target = $region9
  $region8: #{discriminator_forward.6} parent=0 // pred_region
    _
  $region9: #{discriminator_forward.6} parent=0 // pred_fallthru
    _
  // Predicated region
  $region10: #{discriminator_forward.6} parent=0 // pred_check
    _
  $region11: #{discriminator_forward.6} parent=0 // pred_check_branch
    %14 = sbr.rel (0) target = $region13
  $region12: #{discriminator_forward.6} parent=0 // pred_region
    _
  $region13: #{discriminator_forward.6} parent=0 // pred_fallthru
    _
  // Predicated region
  $region14: #{discriminator_forward.6} parent=0 // pred_check
    _
  $region15: #{discriminator_forward.6} parent=0 // pred_check_branch
    %16 = sbr.rel (0) target = $region17
  $region16: #{discriminator_forward.6} parent=0 // pred_region
    _
  $region17: #{discriminator_forward.6} parent=0 // pred_fallthru
    _
  %v18 = vld [vmem:[%s0] sm:$0xf]
  %v19 = vld [vmem:[%s0 + $0x4] sm:$0xf]
  %v20 = vld [vmem:[%s0 + $0x8] sm:$0xf]
  %v21 = vld [vmem:[%s0 + $0xc] sm:$0xf]
  %v22 = vld [vmem:[%s0 + $0x10] sm:$0xf]
  %v23 = vld [vmem:[%s0 + $0x14] sm:$0xf]
  %v24 = vld [vmem:[%s0 + $0x18] sm:$0xf]
  %v25 = vld [vmem:[%s0 + $0x1c] sm:$0xf]
  %v26 = vld [vmem:[%s0 + $0x20] sm:$0xf]
  %v27 = vld [vmem:[%s0 + $0x24] sm:$0xf]
  %v28 = vld [vmem:[%s0 + $0x28] sm:$0xf]
  %v29 = vld [vmem:[%s0 + $0x2c] sm:$0xf]
  %v30 = vld [vmem:[%s0 + $0x30] sm:$0xf]
  %v31 = vld [vmem:[%s0 + $0x34] sm:$0xf]
  %v32 = vld [vmem:[%s0 + $0x38] sm:$0xf]
  %v33 = vld [vmem:[%s0 + $0x3c] sm:$0xf]
  %v34 = vld [vmem:[%s0 + $0x40] sm:$0xf]
  %v35 = vld [vmem:[%s0 + $0x44] sm:$0xf]
  %v36 = vld [vmem:[%s0 + $0x48] sm:$0xf]
  %v37 = vld [vmem:[%s0 + $0x4c] sm:$0xf]
  %v38 = vld [vmem:[%s0 + $0x50] sm:$0xf]
  %v39 = vld [vmem:[%s0 + $0x54] sm:$0xf]
  %v40 = vld [vmem:[%s0 + $0x58] sm:$0xf]
  %v41 = vld [vmem:[%s0 + $0x5c] sm:$0xf]
  %v42 = vld [vmem:[%s0 + $0x60] sm:$0xf]
  %v43 = vld [vmem:[%s0 + $0x64] sm:$0xf]
  %v44 = vld [vmem:[%s0 + $0x68] sm:$0xf]
  %v45 = vld [vmem:[%s0 + $0x6c] sm:$0xf]
  %v46 = vld [vmem:[%s0 + $0x70] sm:$0xf]
  %v47 = vld [vmem:[%s0 + $0x74] sm:$0xf]
  %v48 = vld [vmem:[%s0 + $0x78] sm:$0xf]
  %v49 = vld [vmem:[%s0 + $0x7c] sm:$0xf]
  %v50 = vld [vmem:[%s0 + $0x80] sm:$0xf]
  %v51 = vld [vmem:[%s0 + $0x84] sm:$0xf]
  %v52 = vld [vmem:[%s0 + $0x88] sm:$0xf]
  %v53 = vld [vmem:[%s0 + $0x8c] sm:$0xf]
  %v54 = vld [vmem:[%s0 + $0x90] sm:$0xf]
  %v55 = vld [vmem:[%s0 + $0x94] sm:$0xf]
  %v56 = vld [vmem:[%s0 + $0x98] sm:$0xf]
  %v57 = vld [vmem:[%s0 + $0x9c] sm:$0xf]
  %v58 = vld [vmem:[%s0 + $0xa0] sm:$0xf]
  %v59 = vld [vmem:[%s0 + $0xa4] sm:$0xf]
  %v60 = vld [vmem:[%s0 + $0xa8] sm:$0xf]
  %v61 = vld [vmem:[%s0 + $0xac] sm:$0xf]
  %v62 = vld [vmem:[%s0 + $0xb0] sm:$0xf]
  %v63 = vld [vmem:[%s0 + $0xb4] sm:$0xf]
  %v64 = vld [vmem:[%s0 + $0xb8] sm:$0xf]
  %v65 = vld [vmem:[%s0 + $0xbc] sm:$0xf]
  %v66 = vld [vmem:[%s0 + $0xc0] sm:$0xf]
  %v67 = vld [vmem:[%s0 + $0xc4] sm:$0xf]
  %v68 = vld [vmem:[%s0 + $0xc8] sm:$0xf]
  %v69 = vld [vmem:[%s0 + $0xcc] sm:$0xf]
  %v70 = vld [vmem:[%s0 + $0xd0] sm:$0xf]
  %v71 = vld [vmem:[%s0 + $0xd4] sm:$0xf]
  %v72 = vld [vmem:[%s0 + $0xd8] sm:$0xf]
  %v73 = vld [vmem:[%s0 + $0xdc] sm:$0xf]
  %v74 = vld [vmem:[%s0 + $0xe0] sm:$0xf]
  %v75 = vld [vmem:[%s0 + $0xe4] sm:$0xf]
  %v76 = vld [vmem:[%s0 + $0xe8] sm:$0xf]
  %v77 = vld [vmem:[%s0 + $0xec] sm:$0xf]
  %v78 = vld [vmem:[%s0 + $0xf0] sm:$0xf]
  %v79 = vld [vmem:[%s0 + $0xf4] sm:$0xf]
  %v80 = vld [vmem:[%s0 + $0xf8] sm:$0xf]
  %v81 = vld [vmem:[%s0 + $0xfc] sm:$0xf]
  %v82 = vld [vmem:[%s1] sm:$0xf]
  %v83 = vld [vmem:[%s1 + $0x4] sm:$0xf]
  %v84 = vld [vmem:[%s1 + $0x8] sm:$0xf]
  %v85 = vld [vmem:[%s1 + $0xc] sm:$0xf]
  %v86 = vld [vmem:[%s1 + $0x10] sm:$0xf]
  %v87 = vld [vmem:[%s1 + $0x14] sm:$0xf]
  %v88 = vld [vmem:[%s1 + $0x18] sm:$0xf]
  %v89 = vld [vmem:[%s1 + $0x1c] sm:$0xf]
  %v90 = vld [vmem:[%s1 + $0x20] sm:$0xf]
  %v91 = vld [vmem:[%s1 + $0x24] sm:$0xf]
  %v92 = vld [vmem:[%s1 + $0x28] sm:$0xf]
  %v93 = vld [vmem:[%s1 + $0x2c] sm:$0xf]
  %v94 = vld [vmem:[%s1 + $0x30] sm:$0xf]
  %v95 = vld [vmem:[%s1 + $0x34] sm:$0xf]
  %v96 = vld [vmem:[%s1 + $0x38] sm:$0xf]
  %v97 = vld [vmem:[%s1 + $0x3c] sm:$0xf]
  %v162 = vunpack.c.l.b16 %v18
  %v163 = vunpack.c.l.b16 %v19
  %v164 = vunpack.c.l.b16 %v20
  %v165 = vunpack.c.l.b16 %v21
  %v166 = vunpack.c.l.b16 %v22
  %v167 = vunpack.c.l.b16 %v23
  %v168 = vunpack.c.l.b16 %v24
  %v169 = vunpack.c.l.b16 %v25
  %v170 = vunpack.c.l.b16 %v26
  %v171 = vunpack.c.l.b16 %v27
  %v172 = vunpack.c.l.b16 %v28
  %v173 = vunpack.c.l.b16 %v29
  %v174 = vunpack.c.l.b16 %v30
  %v175 = vunpack.c.l.b16 %v31
  %v176 = vunpack.c.l.b16 %v32
  %v177 = vunpack.c.l.b16 %v33
  %v178 = vunpack.c.l.b16 %v34
  %v179 = vunpack.c.l.b16 %v35
  %v180 = vunpack.c.l.b16 %v36
  %v181 = vunpack.c.l.b16 %v37
  %v182 = vunpack.c.l.b16 %v38
  %v183 = vunpack.c.l.b16 %v39
  %v184 = vunpack.c.l.b16 %v40
  %v185 = vunpack.c.l.b16 %v41
  %v186 = vunpack.c.l.b16 %v42
  %v187 = vunpack.c.l.b16 %v43
  %v188 = vunpack.c.l.b16 %v44
  %v189 = vunpack.c.l.b16 %v45
  %v190 = vunpack.c.l.b16 %v46
  %v191 = vunpack.c.l.b16 %v47
  %v192 = vunpack.c.l.b16 %v48
  %v193 = vunpack.c.l.b16 %v49
  %v194 = vunpack.c.l.b16 %v50
  %v195 = vunpack.c.l.b16 %v51
  %v196 = vunpack.c.l.b16 %v52
  %v197 = vunpack.c.l.b16 %v53
  %v198 = vunpack.c.l.b16 %v54
  %v199 = vunpack.c.l.b16 %v55
  %v200 = vunpack.c.l.b16 %v56
  %v201 = vunpack.c.l.b16 %v57
  %v202 = vunpack.c.l.b16 %v58
  %v203 = vunpack.c.l.b16 %v59
  %v204 = vunpack.c.l.b16 %v60
  %v205 = vunpack.c.l.b16 %v61
  %v206 = vunpack.c.l.b16 %v62
  %v207 = vunpack.c.l.b16 %v63
  %v208 = vunpack.c.l.b16 %v64
  %v209 = vunpack.c.l.b16 %v65
  %v210 = vunpack.c.l.b16 %v66
  %v211 = vunpack.c.l.b16 %v67
  %v212 = vunpack.c.l.b16 %v68
  %v213 = vunpack.c.l.b16 %v69
  %v214 = vunpack.c.l.b16 %v70
  %v215 = vunpack.c.l.b16 %v71
  %v216 = vunpack.c.l.b16 %v72
  %v217 = vunpack.c.l.b16 %v73
  %v218 = vunpack.c.l.b16 %v74
  %v219 = vunpack.c.l.b16 %v75
  %v220 = vunpack.c.l.b16 %v76
  %v221 = vunpack.c.l.b16 %v77
  %v222 = vunpack.c.l.b16 %v78
  %v223 = vunpack.c.l.b16 %v79
  %v224 = vunpack.c.l.b16 %v80
  %v225 = vunpack.c.l.b16 %v81
  %v226 = vpack.c.b16 %v163, %v162
  %v227 = vpack.c.b16 %v165, %v164
  %v228 = vpack.c.b16 %v167, %v166
  %v229 = vpack.c.b16 %v169, %v168
  %v230 = vpack.c.b16 %v171, %v170
  %v231 = vpack.c.b16 %v173, %v172
  %v232 = vpack.c.b16 %v175, %v174
  %v233 = vpack.c.b16 %v177, %v176
  %v234 = vpack.c.b16 %v179, %v178
  %v235 = vpack.c.b16 %v181, %v180
  %v236 = vpack.c.b16 %v183, %v182
  %v237 = vpack.c.b16 %v185, %v184
  %v238 = vpack.c.b16 %v187, %v186
  %v239 = vpack.c.b16 %v189, %v188
  %v240 = vpack.c.b16 %v191, %v190
  %v241 = vpack.c.b16 %v193, %v192
  %v242 = vpack.c.b16 %v195, %v194
  %v243 = vpack.c.b16 %v197, %v196
  %v244 = vpack.c.b16 %v199, %v198
  %v245 = vpack.c.b16 %v201, %v200
  %v246 = vpack.c.b16 %v203, %v202
  %v247 = vpack.c.b16 %v205, %v204
  %v248 = vpack.c.b16 %v207, %v206
  %v249 = vpack.c.b16 %v209, %v208
  %v250 = vpack.c.b16 %v211, %v210
  %v251 = vpack.c.b16 %v213, %v212
  %v252 = vpack.c.b16 %v215, %v214
  %v253 = vpack.c.b16 %v217, %v216
  %v254 = vpack.c.b16 %v219, %v218
  %v255 = vpack.c.b16 %v221, %v220
  %v256 = vpack.c.b16 %v223, %v222
  %v257 = vpack.c.b16 %v225, %v224
  %v306 = vunpack.c.l.b16 %v82
  %v307 = vunpack.c.l.b16 %v83
  %v308 = vunpack.c.l.b16 %v84
  %v309 = vunpack.c.l.b16 %v85
  %v310 = vunpack.c.l.b16 %v86
  %v311 = vunpack.c.l.b16 %v87
  %v312 = vunpack.c.l.b16 %v88
  %v313 = vunpack.c.l.b16 %v89
  %v314 = vunpack.c.l.b16 %v90
  %v315 = vunpack.c.l.b16 %v91
  %v316 = vunpack.c.l.b16 %v92
  %v317 = vunpack.c.l.b16 %v93
  %v318 = vunpack.c.l.b16 %v94
  %v319 = vunpack.c.l.b16 %v95
  %v320 = vunpack.c.l.b16 %v96
  %v321 = vunpack.c.l.b16 %v97
  %v322 = vpack.c.b16 %v307, %v306
  %v323 = vpack.c.b16 %v309, %v308
  %v324 = vpack.c.b16 %v311, %v310
  %v325 = vpack.c.b16 %v313, %v312
  %v326 = vpack.c.b16 %v315, %v314
  %v327 = vpack.c.b16 %v317, %v316
  %v328 = vpack.c.b16 %v319, %v318
  %v329 = vpack.c.b16 %v321, %v320
  %338 = vmatprep.subr.bf16.mxu0 0
  %339 = vmatpush1.bf16.msra.mxu0 %v322
  %340 = vmatprep.subr.bf16.mxu0 0
  %341 = vmatpush1.bf16.msra.mxu0 %v323
  %342 = vmatprep.subr.bf16.mxu0 0
  %343 = vmatpush1.bf16.msra.mxu0 %v324
  %344 = vmatprep.subr.bf16.mxu0 0
  %345 = vmatpush1.bf16.msra.mxu0 %v325
  %346 = vmatprep.subr.bf16.mxu0 0
  %347 = vmatpush1.bf16.msra.mxu0 %v326
  %348 = vmatprep.subr.bf16.mxu0 0
  %349 = vmatpush1.bf16.msra.mxu0 %v327
  %350 = vmatprep.subr.bf16.mxu0 0
  %351 = vmatpush1.bf16.msra.mxu0 %v328
  %352 = vmatprep.subr.bf16.mxu0 0
  %353 = vmatpush1.bf16.msra.mxu0 %v329
  %354 = vmatprep.subr.bf16.mxu0 0
  %355 = vmatpush1.bf16.msra.mxu0 0
  %356 = vmatprep.subr.bf16.mxu0 0
  %357 = vmatpush1.bf16.msra.mxu0 0
  %358 = vmatprep.subr.bf16.mxu0 0
  %359 = vmatpush1.bf16.msra.mxu0 0
  %360 = vmatprep.subr.bf16.mxu0 0
  %361 = vmatpush1.bf16.msra.mxu0 0
  %362 = vmatprep.subr.bf16.mxu0 0
  %363 = vmatpush1.bf16.msra.mxu0 0
  %364 = vmatprep.subr.bf16.mxu0 0
  %365 = vmatpush1.bf16.msra.mxu0 0
  %366 = vmatprep.subr.bf16.mxu0 0
  %367 = vmatpush1.bf16.msra.mxu0 0
  %368 = vmatprep.subr.bf16.mxu0 0
  %369 = vmatpush1.bf16.msra.mxu0 0
  %370 = vmatprep.mubr.bf16.mxu0 0
  %371 = vmatmul.mubr.bf16.gmra.mrb[0].mxu0 %v226
  %v372 = vpop.f32.mrb[0].mxu0
  %v373 = vadd.f32 0.0, %v372
  %v374 = vpop.f32.mrb[0].mxu0
  %v375 = vpop.f32.mrb[0].mxu0
  %v376 = vadd.f32 0.0, %v375
  %v377 = vpop.f32.mrb[0].mxu0
  %378 = vmatprep.mubr.bf16.mxu0 0
  %379 = vmatmul.mubr.bf16.gmra.mrb[0].mxu0 %v227
  %v380 = vpop.f32.mrb[0].mxu0
  %v381 = vadd.f32 0.0, %v380
  %v382 = vpop.f32.mrb[0].mxu0
  %v383 = vpop.f32.mrb[0].mxu0
  %v384 = vadd.f32 0.0, %v383
  %v385 = vpop.f32.mrb[0].mxu0
  %386 = vmatprep.mubr.bf16.mxu0 0
  %387 = vmatmul.mubr.bf16.gmra.mrb[0].mxu0 %v228
  %v388 = vpop.f32.mrb[0].mxu0
  %v389 = vadd.f32 0.0, %v388
  %v390 = vpop.f32.mrb[0].mxu0
  %v391 = vpop.f32.mrb[0].mxu0
  %v392 = vadd.f32 0.0, %v391
  %v393 = vpop.f32.mrb[0].mxu0
  %394 = vmatprep.mubr.bf16.mxu0 0
  %395 = vmatmul.mubr.bf16.gmra.mrb[0].mxu0 %v229
  %v396 = vpop.f32.mrb[0].mxu0
  %v397 = vadd.f32 0.0, %v396
  %v398 = vpop.f32.mrb[0].mxu0
  %v399 = vpop.f32.mrb[0].mxu0
  %v400 = vadd.f32 0.0, %v399
  %v401 = vpop.f32.mrb[0].mxu0
  %402 = vmatprep.mubr.bf16.mxu0 0
  %403 = vmatmul.mubr.bf16.gmra.mrb[0].mxu0 %v230
  %v404 = vpop.f32.mrb[0].mxu0
  %v405 = vadd.f32 0.0, %v404
  %v406 = vpop.f32.mrb[0].mxu0
  %v407 = vpop.f32.mrb[0].mxu0
  %v408 = vadd.f32 0.0, %v407
  %v409 = vpop.f32.mrb[0].mxu0
  %410 = vmatprep.mubr.bf16.mxu0 0
  %411 = vmatmul.mubr.bf16.gmra.mrb[0].mxu0 %v231
  %v412 = vpop.f32.mrb[0].mxu0
  %v413 = vadd.f32 0.0, %v412
  %v414 = vpop.f32.mrb[0].mxu0
  %v415 = vpop.f32.mrb[0].mxu0
  %v416 = vadd.f32 0.0, %v415
  %v417 = vpop.f32.mrb[0].mxu0
  %418 = vmatprep.mubr.bf16.mxu0 0
  %419 = vmatmul.mubr.bf16.gmra.mrb[0].mxu0 %v232
  %v420 = vpop.f32.mrb[0].mxu0
  %v421 = vadd.f32 0.0, %v420
  %v422 = vpop.f32.mrb[0].mxu0
  %v423 = vpop.f32.mrb[0].mxu0
  %v424 = vadd.f32 0.0, %v423
  %v425 = vpop.f32.mrb[0].mxu0
  %426 = vmatprep.mubr.bf16.mxu0 0
  %427 = vmatmul.mubr.bf16.gmra.mrb[0].mxu0 %v233
  %v428 = vpop.f32.mrb[0].mxu0
  %v429 = vadd.f32 0.0, %v428
  %v430 = vpop.f32.mrb[0].mxu0
  %v431 = vpop.f32.mrb[0].mxu0
  %v432 = vadd.f32 0.0, %v431
  %v433 = vpop.f32.mrb[0].mxu0
  %434 = vmatprep.mubr.bf16.mxu0 0
  %435 = vmatmul.mubr.bf16.gmra.mrb[0].mxu0 %v234
  %v436 = vpop.f32.mrb[0].mxu0
  %v437 = vadd.f32 0.0, %v436
  %v438 = vpop.f32.mrb[0].mxu0
  %v439 = vpop.f32.mrb[0].mxu0
  %v440 = vadd.f32 0.0, %v439
  %v441 = vpop.f32.mrb[0].mxu0
  %442 = vmatprep.mubr.bf16.mxu0 0
  %443 = vmatmul.mubr.bf16.gmra.mrb[0].mxu0 %v235
  %v444 = vpop.f32.mrb[0].mxu0
  %v445 = vadd.f32 0.0, %v444
  %v446 = vpop.f32.mrb[0].mxu0
  %v447 = vpop.f32.mrb[0].mxu0
  %v448 = vadd.f32 0.0, %v447
  %v449 = vpop.f32.mrb[0].mxu0
  %450 = vmatprep.mubr.bf16.mxu0 0
  %451 = vmatmul.mubr.bf16.gmra.mrb[0].mxu0 %v236
  %v452 = vpop.f32.mrb[0].mxu0
  %v453 = vadd.f32 0.0, %v452
  %v454 = vpop.f32.mrb[0].mxu0
  %v455 = vpop.f32.mrb[0].mxu0
  %v456 = vadd.f32 0.0, %v455
  %v457 = vpop.f32.mrb[0].mxu0
  %458 = vmatprep.mubr.bf16.mxu0 0
  %459 = vmatmul.mubr.bf16.gmra.mrb[0].mxu0 %v237
  %v460 = vpop.f32.mrb[0].mxu0
  %v461 = vadd.f32 0.0, %v460
  %v462 = vpop.f32.mrb[0].mxu0
  %v463 = vpop.f32.mrb[0].mxu0
  %v464 = vadd.f32 0.0, %v463
  %v465 = vpop.f32.mrb[0].mxu0
  %466 = vmatprep.mubr.bf16.mxu0 0
  %467 = vmatmul.mubr.bf16.gmra.mrb[0].mxu0 %v238
  %v468 = vpop.f32.mrb[0].mxu0
  %v469 = vadd.f32 0.0, %v468
  %v470 = vpop.f32.mrb[0].mxu0
  %v471 = vpop.f32.mrb[0].mxu0
  %v472 = vadd.f32 0.0, %v471
  %v473 = vpop.f32.mrb[0].mxu0
  %474 = vmatprep.mubr.bf16.mxu0 0
  %475 = vmatmul.mubr.bf16.gmra.mrb[0].mxu0 %v239
  %v476 = vpop.f32.mrb[0].mxu0
  %v477 = vadd.f32 0.0, %v476
  %v478 = vpop.f32.mrb[0].mxu0
  %v479 = vpop.f32.mrb[0].mxu0
  %v480 = vadd.f32 0.0, %v479
  %v481 = vpop.f32.mrb[0].mxu0
  %482 = vmatprep.mubr.bf16.mxu0 0
  %483 = vmatmul.mubr.bf16.gmra.mrb[0].mxu0 %v240
  %v484 = vpop.f32.mrb[0].mxu0
  %v485 = vadd.f32 0.0, %v484
  %v486 = vpop.f32.mrb[0].mxu0
  %v487 = vpop.f32.mrb[0].mxu0
  %v488 = vadd.f32 0.0, %v487
  %v489 = vpop.f32.mrb[0].mxu0
  %490 = vmatprep.mubr.bf16.mxu0 0
  %491 = vmatmul.mubr.bf16.gmra.mrb[0].mxu0 %v241
  %v492 = vpop.f32.mrb[0].mxu0
  %v493 = vadd.f32 0.0, %v492
  %v494 = vpop.f32.mrb[0].mxu0
  %v495 = vpop.f32.mrb[0].mxu0
  %v496 = vadd.f32 0.0, %v495
  %v497 = vpop.f32.mrb[0].mxu0
  %498 = vmatprep.mubr.bf16.mxu0 0
  %499 = vmatmul.mubr.bf16.gmra.mrb[0].mxu0 %v242
  %v500 = vpop.f32.mrb[0].mxu0
  %v501 = vadd.f32 0.0, %v500
  %v502 = vpop.f32.mrb[0].mxu0
  %v503 = vpop.f32.mrb[0].mxu0
  %v504 = vadd.f32 0.0, %v503
  %v505 = vpop.f32.mrb[0].mxu0
  %506 = vmatprep.mubr.bf16.mxu0 0
  %507 = vmatmul.mubr.bf16.gmra.mrb[0].mxu0 %v243
  %v508 = vpop.f32.mrb[0].mxu0
  %v509 = vadd.f32 0.0, %v508
  %v510 = vpop.f32.mrb[0].mxu0
  %v511 = vpop.f32.mrb[0].mxu0
  %v512 = vadd.f32 0.0, %v511
  %v513 = vpop.f32.mrb[0].mxu0
  %514 = vmatprep.mubr.bf16.mxu0 0
  %515 = vmatmul.mubr.bf16.gmra.mrb[0].mxu0 %v244
  %v516 = vpop.f32.mrb[0].mxu0
  %v517 = vadd.f32 0.0, %v516
  %v518 = vpop.f32.mrb[0].mxu0
  %v519 = vpop.f32.mrb[0].mxu0
  %v520 = vadd.f32 0.0, %v519
  %v521 = vpop.f32.mrb[0].mxu0
  %522 = vmatprep.mubr.bf16.mxu0 0
  %523 = vmatmul.mubr.bf16.gmra.mrb[0].mxu0 %v245
  %v524 = vpop.f32.mrb[0].mxu0
  %v525 = vadd.f32 0.0, %v524
  %v526 = vpop.f32.mrb[0].mxu0
  %v527 = vpop.f32.mrb[0].mxu0
  %v528 = vadd.f32 0.0, %v527
  %v529 = vpop.f32.mrb[0].mxu0
  %530 = vmatprep.mubr.bf16.mxu0 0
  %531 = vmatmul.mubr.bf16.gmra.mrb[0].mxu0 %v246
  %v532 = vpop.f32.mrb[0].mxu0
  %v533 = vadd.f32 0.0, %v532
  %v534 = vpop.f32.mrb[0].mxu0
  %v535 = vpop.f32.mrb[0].mxu0
  %v536 = vadd.f32 0.0, %v535
  %v537 = vpop.f32.mrb[0].mxu0
  %538 = vmatprep.mubr.bf16.mxu0 0
  %539 = vmatmul.mubr.bf16.gmra.mrb[0].mxu0 %v247
  %v540 = vpop.f32.mrb[0].mxu0
  %v541 = vadd.f32 0.0, %v540
  %v542 = vpop.f32.mrb[0].mxu0
  %v543 = vpop.f32.mrb[0].mxu0
  %v544 = vadd.f32 0.0, %v543
  %v545 = vpop.f32.mrb[0].mxu0
  %546 = vmatprep.mubr.bf16.mxu0 0
  %547 = vmatmul.mubr.bf16.gmra.mrb[0].mxu0 %v248
  %v548 = vpop.f32.mrb[0].mxu0
  %v549 = vadd.f32 0.0, %v548
  %v550 = vpop.f32.mrb[0].mxu0
  %v551 = vpop.f32.mrb[0].mxu0
  %v552 = vadd.f32 0.0, %v551
  %v553 = vpop.f32.mrb[0].mxu0
  %554 = vmatprep.mubr.bf16.mxu0 0
  %555 = vmatmul.mubr.bf16.gmra.mrb[0].mxu0 %v249
  %v556 = vpop.f32.mrb[0].mxu0
  %v557 = vadd.f32 0.0, %v556
  %v558 = vpop.f32.mrb[0].mxu0
  %v559 = vpop.f32.mrb[0].mxu0
  %v560 = vadd.f32 0.0, %v559
  %v561 = vpop.f32.mrb[0].mxu0
  %562 = vmatprep.mubr.bf16.mxu0 0
  %563 = vmatmul.mubr.bf16.gmra.mrb[0].mxu0 %v250
  %v564 = vpop.f32.mrb[0].mxu0
  %v565 = vadd.f32 0.0, %v564
  %v566 = vpop.f32.mrb[0].mxu0
  %v567 = vpop.f32.mrb[0].mxu0
  %v568 = vadd.f32 0.0, %v567
  %v569 = vpop.f32.mrb[0].mxu0
  %570 = vmatprep.mubr.bf16.mxu0 0
  %571 = vmatmul.mubr.bf16.gmra.mrb[0].mxu0 %v251
  %v572 = vpop.f32.mrb[0].mxu0
  %v573 = vadd.f32 0.0, %v572
  %v574 = vpop.f32.mrb[0].mxu0
  %v575 = vpop.f32.mrb[0].mxu0
  %v576 = vadd.f32 0.0, %v575
  %v577 = vpop.f32.mrb[0].mxu0
  %578 = vmatprep.mubr.bf16.mxu0 0
  %579 = vmatmul.mubr.bf16.gmra.mrb[0].mxu0 %v252
  %v580 = vpop.f32.mrb[0].mxu0
  %v581 = vadd.f32 0.0, %v580
  %v582 = vpop.f32.mrb[0].mxu0
  %v583 = vpop.f32.mrb[0].mxu0
  %v584 = vadd.f32 0.0, %v583
  %v585 = vpop.f32.mrb[0].mxu0
  %586 = vmatprep.mubr.bf16.mxu0 0
  %587 = vmatmul.mubr.bf16.gmra.mrb[0].mxu0 %v253
  %v588 = vpop.f32.mrb[0].mxu0
  %v589 = vadd.f32 0.0, %v588
  %v590 = vpop.f32.mrb[0].mxu0
  %v591 = vpop.f32.mrb[0].mxu0
  %v592 = vadd.f32 0.0, %v591
  %v593 = vpop.f32.mrb[0].mxu0
  %594 = vmatprep.mubr.bf16.mxu0 0
  %595 = vmatmul.mubr.bf16.gmra.mrb[0].mxu0 %v254
  %v596 = vpop.f32.mrb[0].mxu0
  %v597 = vadd.f32 0.0, %v596
  %v598 = vpop.f32.mrb[0].mxu0
  %v599 = vpop.f32.mrb[0].mxu0
  %v600 = vadd.f32 0.0, %v599
  %v601 = vpop.f32.mrb[0].mxu0
  %602 = vmatprep.mubr.bf16.mxu0 0
  %603 = vmatmul.mubr.bf16.gmra.mrb[0].mxu0 %v255
  %v604 = vpop.f32.mrb[0].mxu0
  %v605 = vadd.f32 0.0, %v604
  %v606 = vpop.f32.mrb[0].mxu0
  %v607 = vpop.f32.mrb[0].mxu0
  %v608 = vadd.f32 0.0, %v607
  %v609 = vpop.f32.mrb[0].mxu0
  %610 = vmatprep.mubr.bf16.mxu0 0
  %611 = vmatmul.mubr.bf16.gmra.mrb[0].mxu0 %v256
  %v612 = vpop.f32.mrb[0].mxu0
  %v613 = vadd.f32 0.0, %v612
  %v614 = vpop.f32.mrb[0].mxu0
  %v615 = vpop.f32.mrb[0].mxu0
  %v616 = vadd.f32 0.0, %v615
  %v617 = vpop.f32.mrb[0].mxu0
  %618 = vmatprep.mubr.bf16.mxu0 0
  %619 = vmatmul.mubr.bf16.gmra.mrb[0].mxu0 %v257
  %v620 = vpop.f32.mrb[0].mxu0
  %v621 = vadd.f32 0.0, %v620
  %v622 = vpop.f32.mrb[0].mxu0
  %v623 = vpop.f32.mrb[0].mxu0
  %v624 = vadd.f32 0.0, %v623
  %v625 = vpop.f32.mrb[0].mxu0
  %626 = vdwg.mxu0
  %vm627 = vcmask 130048
  %v628 = vsel %vm627, %v373, 0.0
  %v629 = vsel %vm627, %v376, 0.0
  %v630 = vadd.f32 %v628, %v629
  %v631 = vsel %vm627, %v381, 0.0
  %v632 = vadd.f32 %v630, %v631
  %v633 = vsel %vm627, %v384, 0.0
  %v634 = vadd.f32 %v632, %v633
  %v635 = vsel %vm627, %v389, 0.0
  %v636 = vadd.f32 %v634, %v635
  %v637 = vsel %vm627, %v392, 0.0
  %v638 = vadd.f32 %v636, %v637
  %v639 = vsel %vm627, %v397, 0.0
  %v640 = vadd.f32 %v638, %v639
  %v641 = vsel %vm627, %v400, 0.0
  %v642 = vadd.f32 %v640, %v641
  %v643 = vsel %vm627, %v405, 0.0
  %v644 = vadd.f32 %v642, %v643
  %v645 = vsel %vm627, %v408, 0.0
  %v646 = vadd.f32 %v644, %v645
  %v647 = vsel %vm627, %v413, 0.0
  %v648 = vadd.f32 %v646, %v647
  %v649 = vsel %vm627, %v416, 0.0
  %v650 = vadd.f32 %v648, %v649
  %v651 = vsel %vm627, %v421, 0.0
  %v652 = vadd.f32 %v650, %v651
  %v653 = vsel %vm627, %v424, 0.0
  %v654 = vadd.f32 %v652, %v653
  %v655 = vsel %vm627, %v429, 0.0
  %v656 = vadd.f32 %v654, %v655
  %v657 = vsel %vm627, %v432, 0.0
  %v658 = vadd.f32 %v656, %v657
  %v659 = vsel %vm627, %v437, 0.0
  %v660 = vadd.f32 %v658, %v659
  %v661 = vsel %vm627, %v440, 0.0
  %v662 = vadd.f32 %v660, %v661
  %v663 = vsel %vm627, %v445, 0.0
  %v664 = vadd.f32 %v662, %v663
  %v665 = vsel %vm627, %v448, 0.0
  %v666 = vadd.f32 %v664, %v665
  %v667 = vsel %vm627, %v453, 0.0
  %v668 = vadd.f32 %v666, %v667
  %v669 = vsel %vm627, %v456, 0.0
  %v670 = vadd.f32 %v668, %v669
  %v671 = vsel %vm627, %v461, 0.0
  %v672 = vadd.f32 %v670, %v671
  %v673 = vsel %vm627, %v464, 0.0
  %v674 = vadd.f32 %v672, %v673
  %v675 = vsel %vm627, %v469, 0.0
  %v676 = vadd.f32 %v674, %v675
  %v677 = vsel %vm627, %v472, 0.0
  %v678 = vadd.f32 %v676, %v677
  %v679 = vsel %vm627, %v477, 0.0
  %v680 = vadd.f32 %v678, %v679
  %v681 = vsel %vm627, %v480, 0.0
  %v682 = vadd.f32 %v680, %v681
  %v683 = vsel %vm627, %v485, 0.0
  %v684 = vadd.f32 %v682, %v683
  %v685 = vsel %vm627, %v488, 0.0
  %v686 = vadd.f32 %v684, %v685
  %v687 = vsel %vm627, %v493, 0.0
  %v688 = vadd.f32 %v686, %v687
  %v689 = vsel %vm627, %v496, 0.0
  %v690 = vadd.f32 %v688, %v689
  %v691 = vsel %vm627, %v501, 0.0
  %v692 = vadd.f32 %v690, %v691
  %v693 = vsel %vm627, %v504, 0.0
  %v694 = vadd.f32 %v692, %v693
  %v695 = vsel %vm627, %v509, 0.0
  %v696 = vadd.f32 %v694, %v695
  %v697 = vsel %vm627, %v512, 0.0
  %v698 = vadd.f32 %v696, %v697
  %v699 = vsel %vm627, %v517, 0.0
  %v700 = vadd.f32 %v698, %v699
  %v701 = vsel %vm627, %v520, 0.0
  %v702 = vadd.f32 %v700, %v701
  %v703 = vsel %vm627, %v525, 0.0
  %v704 = vadd.f32 %v702, %v703
  %v705 = vsel %vm627, %v528, 0.0
  %v706 = vadd.f32 %v704, %v705
  %v707 = vsel %vm627, %v533, 0.0
  %v708 = vadd.f32 %v706, %v707
  %v709 = vsel %vm627, %v536, 0.0
  %v710 = vadd.f32 %v708, %v709
  %v711 = vsel %vm627, %v541, 0.0
  %v712 = vadd.f32 %v710, %v711
  %v713 = vsel %vm627, %v544, 0.0
  %v714 = vadd.f32 %v712, %v713
  %v715 = vsel %vm627, %v549, 0.0
  %v716 = vadd.f32 %v714, %v715
  %v717 = vsel %vm627, %v552, 0.0
  %v718 = vadd.f32 %v716, %v717
  %v719 = vsel %vm627, %v557, 0.0
  %v720 = vadd.f32 %v718, %v719
  %v721 = vsel %vm627, %v560, 0.0
  %v722 = vadd.f32 %v720, %v721
  %v723 = vsel %vm627, %v565, 0.0
  %v724 = vadd.f32 %v722, %v723
  %v725 = vsel %vm627, %v568, 0.0
  %v726 = vadd.f32 %v724, %v725
  %v727 = vsel %vm627, %v573, 0.0
  %v728 = vadd.f32 %v726, %v727
  %v729 = vsel %vm627, %v576, 0.0
  %v730 = vadd.f32 %v728, %v729
  %v731 = vsel %vm627, %v581, 0.0
  %v732 = vadd.f32 %v730, %v731
  %v733 = vsel %vm627, %v584, 0.0
  %v734 = vadd.f32 %v732, %v733
  %v735 = vsel %vm627, %v589, 0.0
  %v736 = vadd.f32 %v734, %v735
  %v737 = vsel %vm627, %v592, 0.0
  %v738 = vadd.f32 %v736, %v737
  %v739 = vsel %vm627, %v597, 0.0
  %v740 = vadd.f32 %v738, %v739
  %v741 = vsel %vm627, %v600, 0.0
  %v742 = vadd.f32 %v740, %v741
  %v743 = vsel %vm627, %v605, 0.0
  %v744 = vadd.f32 %v742, %v743
  %v745 = vsel %vm627, %v608, 0.0
  %v746 = vadd.f32 %v744, %v745
  %v747 = vsel %vm627, %v613, 0.0
  %v748 = vadd.f32 %v746, %v747
  %v749 = vsel %vm627, %v616, 0.0
  %v750 = vadd.f32 %v748, %v749
  %v751 = vsel %vm627, %v621, 0.0
  %v752 = vadd.f32 %v750, %v751
  %v753 = vsel %vm627, %v624, 0.0
  %v754 = vadd.f32 %v752, %v753
  %v755 = vrot.slane %v754, 4
  %v756 = vadd.f32 %v754, %v755
  %v757 = vrot.slane %v756, 2
  %v758 = vadd.f32 %v756, %v757
  %v759 = vrot.slane %v758, 1
  %v760 = vadd.f32 %v758, %v759
  %v761 = vmul.f32 %v760, 0.001953125
  %v762 = vsub.f32 %v373, %v761
  %v763 = vsub.f32 %v376, %v761
  %v764 = vsub.f32 %v381, %v761
  %v765 = vsub.f32 %v384, %v761
  %v766 = vsub.f32 %v389, %v761
  %v767 = vsub.f32 %v392, %v761
  %v768 = vsub.f32 %v397, %v761
  %v769 = vsub.f32 %v400, %v761
  %v770 = vsub.f32 %v405, %v761
  %v771 = vsub.f32 %v408, %v761
  %v772 = vsub.f32 %v413, %v761
  %v773 = vsub.f32 %v416, %v761
  %v774 = vsub.f32 %v421, %v761
  %v775 = vsub.f32 %v424, %v761
  %v776 = vsub.f32 %v429, %v761
  %v777 = vsub.f32 %v432, %v761
  %v778 = vsub.f32 %v437, %v761
  %v779 = vsub.f32 %v440, %v761
  %v780 = vsub.f32 %v445, %v761
  %v781 = vsub.f32 %v448, %v761
  %v782 = vsub.f32 %v453, %v761
  %v783 = vsub.f32 %v456, %v761
  %v784 = vsub.f32 %v461, %v761
  %v785 = vsub.f32 %v464, %v761
  %v786 = vsub.f32 %v469, %v761
  %v787 = vsub.f32 %v472, %v761
  %v788 = vsub.f32 %v477, %v761
  %v789 = vsub.f32 %v480, %v761
  %v790 = vsub.f32 %v485, %v761
  %v791 = vsub.f32 %v488, %v761
  %v792 = vsub.f32 %v493, %v761
  %v793 = vsub.f32 %v496, %v761
  %v794 = vsub.f32 %v501, %v761
  %v795 = vsub.f32 %v504, %v761
  %v796 = vsub.f32 %v509, %v761
  %v797 = vsub.f32 %v512, %v761
  %v798 = vsub.f32 %v517, %v761
  %v799 = vsub.f32 %v520, %v761
  %v800 = vsub.f32 %v525, %v761
  %v801 = vsub.f32 %v528, %v761
  %v802 = vsub.f32 %v533, %v761
  %v803 = vsub.f32 %v536, %v761
  %v804 = vsub.f32 %v541, %v761
  %v805 = vsub.f32 %v544, %v761
  %v806 = vsub.f32 %v549, %v761
  %v807 = vsub.f32 %v552, %v761
  %v808 = vsub.f32 %v557, %v761
  %v809 = vsub.f32 %v560, %v761
  %v810 = vsub.f32 %v565, %v761
  %v811 = vsub.f32 %v568, %v761
  %v812 = vsub.f32 %v573, %v761
  %v813 = vsub.f32 %v576, %v761
  %v814 = vsub.f32 %v581, %v761
  %v815 = vsub.f32 %v584, %v761
  %v816 = vsub.f32 %v589, %v761
  %v817 = vsub.f32 %v592, %v761
  %v818 = vsub.f32 %v597, %v761
  %v819 = vsub.f32 %v600, %v761
  %v820 = vsub.f32 %v605, %v761
  %v821 = vsub.f32 %v608, %v761
  %v822 = vsub.f32 %v613, %v761
  %v823 = vsub.f32 %v616, %v761
  %v824 = vsub.f32 %v621, %v761
  %v825 = vsub.f32 %v624, %v761
  %v826 = vmul.f32 %v762, %v762
  %v827 = vmul.f32 %v763, %v763
  %v828 = vmul.f32 %v764, %v764
  %v829 = vmul.f32 %v765, %v765
  %v830 = vmul.f32 %v766, %v766
  %v831 = vmul.f32 %v767, %v767
  %v832 = vmul.f32 %v768, %v768
  %v833 = vmul.f32 %v769, %v769
  %v834 = vmul.f32 %v770, %v770
  %v835 = vmul.f32 %v771, %v771
  %v836 = vmul.f32 %v772, %v772
  %v837 = vmul.f32 %v773, %v773
  %v838 = vmul.f32 %v774, %v774
  %v839 = vmul.f32 %v775, %v775
  %v840 = vmul.f32 %v776, %v776
  %v841 = vmul.f32 %v777, %v777
  %v842 = vmul.f32 %v778, %v778
  %v843 = vmul.f32 %v779, %v779
  %v844 = vmul.f32 %v780, %v780
  %v845 = vmul.f32 %v781, %v781
  %v846 = vmul.f32 %v782, %v782
  %v847 = vmul.f32 %v783, %v783
  %v848 = vmul.f32 %v784, %v784
  %v849 = vmul.f32 %v785, %v785
  %v850 = vmul.f32 %v786, %v786
  %v851 = vmul.f32 %v787, %v787
  %v852 = vmul.f32 %v788, %v788
  %v853 = vmul.f32 %v789, %v789
  %v854 = vmul.f32 %v790, %v790
  %v855 = vmul.f32 %v791, %v791
  %v856 = vmul.f32 %v792, %v792
  %v857 = vmul.f32 %v793, %v793
  %v858 = vmul.f32 %v794, %v794
  %v859 = vmul.f32 %v795, %v795
  %v860 = vmul.f32 %v796, %v796
  %v861 = vmul.f32 %v797, %v797
  %v862 = vmul.f32 %v798, %v798
  %v863 = vmul.f32 %v799, %v799
  %v864 = vmul.f32 %v800, %v800
  %v865 = vmul.f32 %v801, %v801
  %v866 = vmul.f32 %v802, %v802
  %v867 = vmul.f32 %v803, %v803
  %v868 = vmul.f32 %v804, %v804
  %v869 = vmul.f32 %v805, %v805
  %v870 = vmul.f32 %v806, %v806
  %v871 = vmul.f32 %v807, %v807
  %v872 = vmul.f32 %v808, %v808
  %v873 = vmul.f32 %v809, %v809
  %v874 = vmul.f32 %v810, %v810
  %v875 = vmul.f32 %v811, %v811
  %v876 = vmul.f32 %v812, %v812
  %v877 = vmul.f32 %v813, %v813
  %v878 = vmul.f32 %v814, %v814
  %v879 = vmul.f32 %v815, %v815
  %v880 = vmul.f32 %v816, %v816
  %v881 = vmul.f32 %v817, %v817
  %v882 = vmul.f32 %v818, %v818
  %v883 = vmul.f32 %v819, %v819
  %v884 = vmul.f32 %v820, %v820
  %v885 = vmul.f32 %v821, %v821
  %v886 = vmul.f32 %v822, %v822
  %v887 = vmul.f32 %v823, %v823
  %v888 = vmul.f32 %v824, %v824
  %v889 = vmul.f32 %v825, %v825
  %v890 = vsel %vm627, %v826, 0.0
  %v891 = vsel %vm627, %v827, 0.0
  %v892 = vadd.f32 %v890, %v891
  %v893 = vsel %vm627, %v828, 0.0
  %v894 = vadd.f32 %v892, %v893
  %v895 = vsel %vm627, %v829, 0.0
  %v896 = vadd.f32 %v894, %v895
  %v897 = vsel %vm627, %v830, 0.0
  %v898 = vadd.f32 %v896, %v897
  %v899 = vsel %vm627, %v831, 0.0
  %v900 = vadd.f32 %v898, %v899
  %v901 = vsel %vm627, %v832, 0.0
  %v902 = vadd.f32 %v900, %v901
  %v903 = vsel %vm627, %v833, 0.0
  %v904 = vadd.f32 %v902, %v903
  %v905 = vsel %vm627, %v834, 0.0
  %v906 = vadd.f32 %v904, %v905
  %v907 = vsel %vm627, %v835, 0.0
  %v908 = vadd.f32 %v906, %v907
  %v909 = vsel %vm627, %v836, 0.0
  %v910 = vadd.f32 %v908, %v909
  %v911 = vsel %vm627, %v837, 0.0
  %v912 = vadd.f32 %v910, %v911
  %v913 = vsel %vm627, %v838, 0.0
  %v914 = vadd.f32 %v912, %v913
  %v915 = vsel %vm627, %v839, 0.0
  %v916 = vadd.f32 %v914, %v915
  %v917 = vsel %vm627, %v840, 0.0
  %v918 = vadd.f32 %v916, %v917
  %v919 = vsel %vm627, %v841, 0.0
  %v920 = vadd.f32 %v918, %v919
  %v921 = vsel %vm627, %v842, 0.0
  %v922 = vadd.f32 %v920, %v921
  %v923 = vsel %vm627, %v843, 0.0
  %v924 = vadd.f32 %v922, %v923
  %v925 = vsel %vm627, %v844, 0.0
  %v926 = vadd.f32 %v924, %v925
  %v927 = vsel %vm627, %v845, 0.0
  %v928 = vadd.f32 %v926, %v927
  %v929 = vsel %vm627, %v846, 0.0
  %v930 = vadd.f32 %v928, %v929
  %v931 = vsel %vm627, %v847, 0.0
  %v932 = vadd.f32 %v930, %v931
  %v933 = vsel %vm627, %v848, 0.0
  %v934 = vadd.f32 %v932, %v933
  %v935 = vsel %vm627, %v849, 0.0
  %v936 = vadd.f32 %v934, %v935
  %v937 = vsel %vm627, %v850, 0.0
  %v938 = vadd.f32 %v936, %v937
  %v939 = vsel %vm627, %v851, 0.0
  %v940 = vadd.f32 %v938, %v939
  %v941 = vsel %vm627, %v852, 0.0
  %v942 = vadd.f32 %v940, %v941
  %v943 = vsel %vm627, %v853, 0.0
  %v944 = vadd.f32 %v942, %v943
  %v945 = vsel %vm627, %v854, 0.0
  %v946 = vadd.f32 %v944, %v945
  %v947 = vsel %vm627, %v855, 0.0
  %v948 = vadd.f32 %v946, %v947
  %v949 = vsel %vm627, %v856, 0.0
  %v950 = vadd.f32 %v948, %v949
  %v951 = vsel %vm627, %v857, 0.0
  %v952 = vadd.f32 %v950, %v951
  %v953 = vsel %vm627, %v858, 0.0
  %v954 = vadd.f32 %v952, %v953
  %v955 = vsel %vm627, %v859, 0.0
  %v956 = vadd.f32 %v954, %v955
  %v957 = vsel %vm627, %v860, 0.0
  %v958 = vadd.f32 %v956, %v957
  %v959 = vsel %vm627, %v861, 0.0
  %v960 = vadd.f32 %v958, %v959
  %v961 = vsel %vm627, %v862, 0.0
  %v962 = vadd.f32 %v960, %v961
  %v963 = vsel %vm627, %v863, 0.0
  %v964 = vadd.f32 %v962, %v963
  %v965 = vsel %vm627, %v864, 0.0
  %v966 = vadd.f32 %v964, %v965
  %v967 = vsel %vm627, %v865, 0.0
  %v968 = vadd.f32 %v966, %v967
  %v969 = vsel %vm627, %v866, 0.0
  %v970 = vadd.f32 %v968, %v969
  %v971 = vsel %vm627, %v867, 0.0
  %v972 = vadd.f32 %v970, %v971
  %v973 = vsel %vm627, %v868, 0.0
  %v974 = vadd.f32 %v972, %v973
  %v975 = vsel %vm627, %v869, 0.0
  %v976 = vadd.f32 %v974, %v975
  %v977 = vsel %vm627, %v870, 0.0
  %v978 = vadd.f32 %v976, %v977
  %v979 = vsel %vm627, %v871, 0.0
  %v980 = vadd.f32 %v978, %v979
  %v981 = vsel %vm627, %v872, 0.0
  %v982 = vadd.f32 %v980, %v981
  %v983 = vsel %vm627, %v873, 0.0
  %v984 = vadd.f32 %v982, %v983
  %v985 = vsel %vm627, %v874, 0.0
  %v986 = vadd.f32 %v984, %v985
  %v987 = vsel %vm627, %v875, 0.0
  %v988 = vadd.f32 %v986, %v987
  %v989 = vsel %vm627, %v876, 0.0
  %v990 = vadd.f32 %v988, %v989
  %v991 = vsel %vm627, %v877, 0.0
  %v992 = vadd.f32 %v990, %v991
  %v993 = vsel %vm627, %v878, 0.0
  %v994 = vadd.f32 %v992, %v993
  %v995 = vsel %vm627, %v879, 0.0
  %v996 = vadd.f32 %v994, %v995
  %v997 = vsel %vm627, %v880, 0.0
  %v998 = vadd.f32 %v996, %v997
  %v999 = vsel %vm627, %v881, 0.0
  %v1000 = vadd.f32 %v998, %v999
  %v1001 = vsel %vm627, %v882, 0.0
  %v1002 = vadd.f32 %v1000, %v1001
  %v1003 = vsel %vm627, %v883, 0.0
  %v1004 = vadd.f32 %v1002, %v1003
  %v1005 = vsel %vm627, %v884, 0.0
  %v1006 = vadd.f32 %v1004, %v1005
  %v1007 = vsel %vm627, %v885, 0.0
  %v1008 = vadd.f32 %v1006, %v1007
  %v1009 = vsel %vm627, %v886, 0.0
  %v1010 = vadd.f32 %v1008, %v1009
  %v1011 = vsel %vm627, %v887, 0.0
  %v1012 = vadd.f32 %v1010, %v1011
  %v1013 = vsel %vm627, %v888, 0.0
  %v1014 = vadd.f32 %v1012, %v1013
  %v1015 = vsel %vm627, %v889, 0.0
  %v1016 = vadd.f32 %v1014, %v1015
  %v1017 = vrot.slane %v1016, 4
  %v1018 = vadd.f32 %v1016, %v1017
  %v1019 = vrot.slane %v1018, 2
  %v1020 = vadd.f32 %v1018, %v1019
  %v1021 = vrot.slane %v1020, 1
  %v1022 = vadd.f32 %v1020, %v1021
  %v1023 = vmul.f32 %v1022, 0.001953125
  %v1024 = vld [vmem:[%s2] sm:$0x1]
  %v1025 = vadd.f32 %v1023, 1e-05
  %v1026 = vrsqrt.pop %v1025
  %v1027 = vmul.f32 %v1024, %v1026
  %v1028 = vld [vmem:[%s3] sm:$0x1]
  %v1029 = vmul.f32 %v761, %v1027
  %v1030 = vsub.f32 %v1028, %v1029
  %v1032 = vlaneseq
  %v1033 = vshrl.u32 %v1032, 7
  %v1034 = vsub.s32 0, %v1033
  %v1035 = vrot.slane %v1027, %v1034
  %v1037 = vmul.f32 %v373, %v1035
  %v1038 = vmul.f32 %v376, %v1035
  %v1039 = vmul.f32 %v381, %v1035
  %v1040 = vmul.f32 %v384, %v1035
  %v1041 = vmul.f32 %v389, %v1035
  %v1042 = vmul.f32 %v392, %v1035
  %v1043 = vmul.f32 %v397, %v1035
  %v1044 = vmul.f32 %v400, %v1035
  %v1045 = vmul.f32 %v405, %v1035
  %v1046 = vmul.f32 %v408, %v1035
  %v1047 = vmul.f32 %v413, %v1035
  %v1048 = vmul.f32 %v416, %v1035
  %v1049 = vmul.f32 %v421, %v1035
  %v1050 = vmul.f32 %v424, %v1035
  %v1051 = vmul.f32 %v429, %v1035
  %v1052 = vmul.f32 %v432, %v1035
  %v1053 = vmul.f32 %v437, %v1035
  %v1054 = vmul.f32 %v440, %v1035
  %v1055 = vmul.f32 %v445, %v1035
  %v1056 = vmul.f32 %v448, %v1035
  %v1057 = vmul.f32 %v453, %v1035
  %v1058 = vmul.f32 %v456, %v1035
  %v1059 = vmul.f32 %v461, %v1035
  %v1060 = vmul.f32 %v464, %v1035
  %v1061 = vmul.f32 %v469, %v1035
  %v1062 = vmul.f32 %v472, %v1035
  %v1063 = vmul.f32 %v477, %v1035
  %v1064 = vmul.f32 %v480, %v1035
  %v1065 = vmul.f32 %v485, %v1035
  %v1066 = vmul.f32 %v488, %v1035
  %v1067 = vmul.f32 %v493, %v1035
  %v1068 = vmul.f32 %v496, %v1035
  %v1069 = vmul.f32 %v501, %v1035
  %v1070 = vmul.f32 %v504, %v1035
  %v1071 = vmul.f32 %v509, %v1035
  %v1072 = vmul.f32 %v512, %v1035
  %v1073 = vmul.f32 %v517, %v1035
  %v1074 = vmul.f32 %v520, %v1035
  %v1075 = vmul.f32 %v525, %v1035
  %v1076 = vmul.f32 %v528, %v1035
  %v1077 = vmul.f32 %v533, %v1035
  %v1078 = vmul.f32 %v536, %v1035
  %v1079 = vmul.f32 %v541, %v1035
  %v1080 = vmul.f32 %v544, %v1035
  %v1081 = vmul.f32 %v549, %v1035
  %v1082 = vmul.f32 %v552, %v1035
  %v1083 = vmul.f32 %v557, %v1035
  %v1084 = vmul.f32 %v560, %v1035
  %v1085 = vmul.f32 %v565, %v1035
  %v1086 = vmul.f32 %v568, %v1035
  %v1087 = vmul.f32 %v573, %v1035
  %v1088 = vmul.f32 %v576, %v1035
  %v1089 = vmul.f32 %v581, %v1035
  %v1090 = vmul.f32 %v584, %v1035
  %v1091 = vmul.f32 %v589, %v1035
  %v1092 = vmul.f32 %v592, %v1035
  %v1093 = vmul.f32 %v597, %v1035
  %v1094 = vmul.f32 %v600, %v1035
  %v1095 = vmul.f32 %v605, %v1035
  %v1096 = vmul.f32 %v608, %v1035
  %v1097 = vmul.f32 %v613, %v1035
  %v1098 = vmul.f32 %v616, %v1035
  %v1099 = vmul.f32 %v621, %v1035
  %v1100 = vmul.f32 %v624, %v1035
  %v1102 = vlaneseq
  %v1103 = vshrl.u32 %v1102, 7
  %v1104 = vsub.s32 0, %v1103
  %v1105 = vrot.slane %v1030, %v1104
  %v1107 = vadd.f32 %v1037, %v1105
  %v1108 = vadd.f32 %v1038, %v1105
  %v1109 = vadd.f32 %v1039, %v1105
  %v1110 = vadd.f32 %v1040, %v1105
  %v1111 = vadd.f32 %v1041, %v1105
  %v1112 = vadd.f32 %v1042, %v1105
  %v1113 = vadd.f32 %v1043, %v1105
  %v1114 = vadd.f32 %v1044, %v1105
  %v1115 = vadd.f32 %v1045, %v1105
  %v1116 = vadd.f32 %v1046, %v1105
  %v1117 = vadd.f32 %v1047, %v1105
  %v1118 = vadd.f32 %v1048, %v1105
  %v1119 = vadd.f32 %v1049, %v1105
  %v1120 = vadd.f32 %v1050, %v1105
  %v1121 = vadd.f32 %v1051, %v1105
  %v1122 = vadd.f32 %v1052, %v1105
  %v1123 = vadd.f32 %v1053, %v1105
  %v1124 = vadd.f32 %v1054, %v1105
  %v1125 = vadd.f32 %v1055, %v1105
  %v1126 = vadd.f32 %v1056, %v1105
  %v1127 = vadd.f32 %v1057, %v1105
  %v1128 = vadd.f32 %v1058, %v1105
  %v1129 = vadd.f32 %v1059, %v1105
  %v1130 = vadd.f32 %v1060, %v1105
  %v1131 = vadd.f32 %v1061, %v1105
  %v1132 = vadd.f32 %v1062, %v1105
  %v1133 = vadd.f32 %v1063, %v1105
  %v1134 = vadd.f32 %v1064, %v1105
  %v1135 = vadd.f32 %v1065, %v1105
  %v1136 = vadd.f32 %v1066, %v1105
  %v1137 = vadd.f32 %v1067, %v1105
  %v1138 = vadd.f32 %v1068, %v1105
  %v1139 = vadd.f32 %v1069, %v1105
  %v1140 = vadd.f32 %v1070, %v1105
  %v1141 = vadd.f32 %v1071, %v1105
  %v1142 = vadd.f32 %v1072, %v1105
  %v1143 = vadd.f32 %v1073, %v1105
  %v1144 = vadd.f32 %v1074, %v1105
  %v1145 = vadd.f32 %v1075, %v1105
  %v1146 = vadd.f32 %v1076, %v1105
  %v1147 = vadd.f32 %v1077, %v1105
  %v1148 = vadd.f32 %v1078, %v1105
  %v1149 = vadd.f32 %v1079, %v1105
  %v1150 = vadd.f32 %v1080, %v1105
  %v1151 = vadd.f32 %v1081, %v1105
  %v1152 = vadd.f32 %v1082, %v1105
  %v1153 = vadd.f32 %v1083, %v1105
  %v1154 = vadd.f32 %v1084, %v1105
  %v1155 = vadd.f32 %v1085, %v1105
  %v1156 = vadd.f32 %v1086, %v1105
  %v1157 = vadd.f32 %v1087, %v1105
  %v1158 = vadd.f32 %v1088, %v1105
  %v1159 = vadd.f32 %v1089, %v1105
  %v1160 = vadd.f32 %v1090, %v1105
  %v1161 = vadd.f32 %v1091, %v1105
  %v1162 = vadd.f32 %v1092, %v1105
  %v1163 = vadd.f32 %v1093, %v1105
  %v1164 = vadd.f32 %v1094, %v1105
  %v1165 = vadd.f32 %v1095, %v1105
  %v1166 = vadd.f32 %v1096, %v1105
  %v1167 = vadd.f32 %v1097, %v1105
  %v1168 = vadd.f32 %v1098, %v1105
  %v1169 = vadd.f32 %v1099, %v1105
  %v1170 = vadd.f32 %v1100, %v1105
  %vm1171 = vcmp.ge.f32.partialorder %v1107, 0.0
  %vm1172 = vcmp.ge.f32.partialorder %v1108, 0.0
  %vm1173 = vcmp.ge.f32.partialorder %v1109, 0.0
  %vm1174 = vcmp.ge.f32.partialorder %v1110, 0.0
  %vm1175 = vcmp.ge.f32.partialorder %v1111, 0.0
  %vm1176 = vcmp.ge.f32.partialorder %v1112, 0.0
  %vm1177 = vcmp.ge.f32.partialorder %v1113, 0.0
  %vm1178 = vcmp.ge.f32.partialorder %v1114, 0.0
  %vm1179 = vcmp.ge.f32.partialorder %v1115, 0.0
  %vm1180 = vcmp.ge.f32.partialorder %v1116, 0.0
  %vm1181 = vcmp.ge.f32.partialorder %v1117, 0.0
  %vm1182 = vcmp.ge.f32.partialorder %v1118, 0.0
  %vm1183 = vcmp.ge.f32.partialorder %v1119, 0.0
  %vm1184 = vcmp.ge.f32.partialorder %v1120, 0.0
  %vm1185 = vcmp.ge.f32.partialorder %v1121, 0.0
  %vm1186 = vcmp.ge.f32.partialorder %v1122, 0.0
  %vm1187 = vcmp.ge.f32.partialorder %v1123, 0.0
  %vm1188 = vcmp.ge.f32.partialorder %v1124, 0.0
  %vm1189 = vcmp.ge.f32.partialorder %v1125, 0.0
  %vm1190 = vcmp.ge.f32.partialorder %v1126, 0.0
  %vm1191 = vcmp.ge.f32.partialorder %v1127, 0.0
  %vm1192 = vcmp.ge.f32.partialorder %v1128, 0.0
  %vm1193 = vcmp.ge.f32.partialorder %v1129, 0.0
  %vm1194 = vcmp.ge.f32.partialorder %v1130, 0.0
  %vm1195 = vcmp.ge.f32.partialorder %v1131, 0.0
  %vm1196 = vcmp.ge.f32.partialorder %v1132, 0.0
  %vm1197 = vcmp.ge.f32.partialorder %v1133, 0.0
  %vm1198 = vcmp.ge.f32.partialorder %v1134, 0.0
  %vm1199 = vcmp.ge.f32.partialorder %v1135, 0.0
  %vm1200 = vcmp.ge.f32.partialorder %v1136, 0.0
  %vm1201 = vcmp.ge.f32.partialorder %v1137, 0.0
  %vm1202 = vcmp.ge.f32.partialorder %v1138, 0.0
  %vm1203 = vcmp.ge.f32.partialorder %v1139, 0.0
  %vm1204 = vcmp.ge.f32.partialorder %v1140, 0.0
  %vm1205 = vcmp.ge.f32.partialorder %v1141, 0.0
  %vm1206 = vcmp.ge.f32.partialorder %v1142, 0.0
  %vm1207 = vcmp.ge.f32.partialorder %v1143, 0.0
  %vm1208 = vcmp.ge.f32.partialorder %v1144, 0.0
  %vm1209 = vcmp.ge.f32.partialorder %v1145, 0.0
  %vm1210 = vcmp.ge.f32.partialorder %v1146, 0.0
  %vm1211 = vcmp.ge.f32.partialorder %v1147, 0.0
  %vm1212 = vcmp.ge.f32.partialorder %v1148, 0.0
  %vm1213 = vcmp.ge.f32.partialorder %v1149, 0.0
  %vm1214 = vcmp.ge.f32.partialorder %v1150, 0.0
  %vm1215 = vcmp.ge.f32.partialorder %v1151, 0.0
  %vm1216 = vcmp.ge.f32.partialorder %v1152, 0.0
  %vm1217 = vcmp.ge.f32.partialorder %v1153, 0.0
  %vm1218 = vcmp.ge.f32.partialorder %v1154, 0.0
  %vm1219 = vcmp.ge.f32.partialorder %v1155, 0.0
  %vm1220 = vcmp.ge.f32.partialorder %v1156, 0.0
  %vm1221 = vcmp.ge.f32.partialorder %v1157, 0.0
  %vm1222 = vcmp.ge.f32.partialorder %v1158, 0.0
  %vm1223 = vcmp.ge.f32.partialorder %v1159, 0.0
  %vm1224 = vcmp.ge.f32.partialorder %v1160, 0.0
  %vm1225 = vcmp.ge.f32.partialorder %v1161, 0.0
  %vm1226 = vcmp.ge.f32.partialorder %v1162, 0.0
  %vm1227 = vcmp.ge.f32.partialorder %v1163, 0.0
  %vm1228 = vcmp.ge.f32.partialorder %v1164, 0.0
  %vm1229 = vcmp.ge.f32.partialorder %v1165, 0.0
  %vm1230 = vcmp.ge.f32.partialorder %v1166, 0.0
  %vm1231 = vcmp.ge.f32.partialorder %v1167, 0.0
  %vm1232 = vcmp.ge.f32.partialorder %v1168, 0.0
  %vm1233 = vcmp.ge.f32.partialorder %v1169, 0.0
  %vm1234 = vcmp.ge.f32.partialorder %v1170, 0.0
  %v1235 = vmul.f32 %v1107, 0.2
  %v1236 = vmul.f32 %v1108, 0.2
  %v1237 = vmul.f32 %v1109, 0.2
  %v1238 = vmul.f32 %v1110, 0.2
  %v1239 = vmul.f32 %v1111, 0.2
  %v1240 = vmul.f32 %v1112, 0.2
  %v1241 = vmul.f32 %v1113, 0.2
  %v1242 = vmul.f32 %v1114, 0.2
  %v1243 = vmul.f32 %v1115, 0.2
  %v1244 = vmul.f32 %v1116, 0.2
  %v1245 = vmul.f32 %v1117, 0.2
  %v1246 = vmul.f32 %v1118, 0.2
  %v1247 = vmul.f32 %v1119, 0.2
  %v1248 = vmul.f32 %v1120, 0.2
  %v1249 = vmul.f32 %v1121, 0.2
  %v1250 = vmul.f32 %v1122, 0.2
  %v1251 = vmul.f32 %v1123, 0.2
  %v1252 = vmul.f32 %v1124, 0.2
  %v1253 = vmul.f32 %v1125, 0.2
  %v1254 = vmul.f32 %v1126, 0.2
  %v1255 = vmul.f32 %v1127, 0.2
  %v1256 = vmul.f32 %v1128, 0.2
  %v1257 = vmul.f32 %v1129, 0.2
  %v1258 = vmul.f32 %v1130, 0.2
  %v1259 = vmul.f32 %v1131, 0.2
  %v1260 = vmul.f32 %v1132, 0.2
  %v1261 = vmul.f32 %v1133, 0.2
  %v1262 = vmul.f32 %v1134, 0.2
  %v1263 = vmul.f32 %v1135, 0.2
  %v1264 = vmul.f32 %v1136, 0.2
  %v1265 = vmul.f32 %v1137, 0.2
  %v1266 = vmul.f32 %v1138, 0.2
  %v1267 = vmul.f32 %v1139, 0.2
  %v1268 = vmul.f32 %v1140, 0.2
  %v1269 = vmul.f32 %v1141, 0.2
  %v1270 = vmul.f32 %v1142, 0.2
  %v1271 = vmul.f32 %v1143, 0.2
  %v1272 = vmul.f32 %v1144, 0.2
  %v1273 = vmul.f32 %v1145, 0.2
  %v1274 = vmul.f32 %v1146, 0.2
  %v1275 = vmul.f32 %v1147, 0.2
  %v1276 = vmul.f32 %v1148, 0.2
  %v1277 = vmul.f32 %v1149, 0.2
  %v1278 = vmul.f32 %v1150, 0.2
  %v1279 = vmul.f32 %v1151, 0.2
  %v1280 = vmul.f32 %v1152, 0.2
  %v1281 = vmul.f32 %v1153, 0.2
  %v1282 = vmul.f32 %v1154, 0.2
  %v1283 = vmul.f32 %v1155, 0.2
  %v1284 = vmul.f32 %v1156, 0.2
  %v1285 = vmul.f32 %v1157, 0.2
  %v1286 = vmul.f32 %v1158, 0.2
  %v1287 = vmul.f32 %v1159, 0.2
  %v1288 = vmul.f32 %v1160, 0.2
  %v1289 = vmul.f32 %v1161, 0.2
  %v1290 = vmul.f32 %v1162, 0.2
  %v1291 = vmul.f32 %v1163, 0.2
  %v1292 = vmul.f32 %v1164, 0.2
  %v1293 = vmul.f32 %v1165, 0.2
  %v1294 = vmul.f32 %v1166, 0.2
  %v1295 = vmul.f32 %v1167, 0.2
  %v1296 = vmul.f32 %v1168, 0.2
  %v1297 = vmul.f32 %v1169, 0.2
  %v1298 = vmul.f32 %v1170, 0.2
  %v1299 = vsel %vm1171, %v1107, %v1235
  %v1300 = vsel %vm1172, %v1108, %v1236
  %v1301 = vsel %vm1173, %v1109, %v1237
  %v1302 = vsel %vm1174, %v1110, %v1238
  %v1303 = vsel %vm1175, %v1111, %v1239
  %v1304 = vsel %vm1176, %v1112, %v1240
  %v1305 = vsel %vm1177, %v1113, %v1241
  %v1306 = vsel %vm1178, %v1114, %v1242
  %v1307 = vsel %vm1179, %v1115, %v1243
  %v1308 = vsel %vm1180, %v1116, %v1244
  %v1309 = vsel %vm1181, %v1117, %v1245
  %v1310 = vsel %vm1182, %v1118, %v1246
  %v1311 = vsel %vm1183, %v1119, %v1247
  %v1312 = vsel %vm1184, %v1120, %v1248
  %v1313 = vsel %vm1185, %v1121, %v1249
  %v1314 = vsel %vm1186, %v1122, %v1250
  %v1315 = vsel %vm1187, %v1123, %v1251
  %v1316 = vsel %vm1188, %v1124, %v1252
  %v1317 = vsel %vm1189, %v1125, %v1253
  %v1318 = vsel %vm1190, %v1126, %v1254
  %v1319 = vsel %vm1191, %v1127, %v1255
  %v1320 = vsel %vm1192, %v1128, %v1256
  %v1321 = vsel %vm1193, %v1129, %v1257
  %v1322 = vsel %vm1194, %v1130, %v1258
  %v1323 = vsel %vm1195, %v1131, %v1259
  %v1324 = vsel %vm1196, %v1132, %v1260
  %v1325 = vsel %vm1197, %v1133, %v1261
  %v1326 = vsel %vm1198, %v1134, %v1262
  %v1327 = vsel %vm1199, %v1135, %v1263
  %v1328 = vsel %vm1200, %v1136, %v1264
  %v1329 = vsel %vm1201, %v1137, %v1265
  %v1330 = vsel %vm1202, %v1138, %v1266
  %v1331 = vsel %vm1203, %v1139, %v1267
  %v1332 = vsel %vm1204, %v1140, %v1268
  %v1333 = vsel %vm1205, %v1141, %v1269
  %v1334 = vsel %vm1206, %v1142, %v1270
  %v1335 = vsel %vm1207, %v1143, %v1271
  %v1336 = vsel %vm1208, %v1144, %v1272
  %v1337 = vsel %vm1209, %v1145, %v1273
  %v1338 = vsel %vm1210, %v1146, %v1274
  %v1339 = vsel %vm1211, %v1147, %v1275
  %v1340 = vsel %vm1212, %v1148, %v1276
  %v1341 = vsel %vm1213, %v1149, %v1277
  %v1342 = vsel %vm1214, %v1150, %v1278
  %v1343 = vsel %vm1215, %v1151, %v1279
  %v1344 = vsel %vm1216, %v1152, %v1280
  %v1345 = vsel %vm1217, %v1153, %v1281
  %v1346 = vsel %vm1218, %v1154, %v1282
  %v1347 = vsel %vm1219, %v1155, %v1283
  %v1348 = vsel %vm1220, %v1156, %v1284
  %v1349 = vsel %vm1221, %v1157, %v1285
  %v1350 = vsel %vm1222, %v1158, %v1286
  %v1351 = vsel %vm1223, %v1159, %v1287
  %v1352 = vsel %vm1224, %v1160, %v1288
  %v1353 = vsel %vm1225, %v1161, %v1289
  %v1354 = vsel %vm1226, %v1162, %v1290
  %v1355 = vsel %vm1227, %v1163, %v1291
  %v1356 = vsel %vm1228, %v1164, %v1292
  %v1357 = vsel %vm1229, %v1165, %v1293
  %v1358 = vsel %vm1230, %v1166, %v1294
  %v1359 = vsel %vm1231, %v1167, %v1295
  %v1360 = vsel %vm1232, %v1168, %v1296
  %v1361 = vsel %vm1233, %v1169, %v1297
  %v1362 = vsel %vm1234, %v1170, %v1298
  %v1363 = vpack.c.bf16 %v1300, %v1299
  %v1364 = vpack.c.bf16 %v1302, %v1301
  %v1365 = vpack.c.bf16 %v1304, %v1303
  %v1366 = vpack.c.bf16 %v1306, %v1305
  %v1367 = vpack.c.bf16 %v1308, %v1307
  %v1368 = vpack.c.bf16 %v1310, %v1309
  %v1369 = vpack.c.bf16 %v1312, %v1311
  %v1370 = vpack.c.bf16 %v1314, %v1313
  %v1371 = vpack.c.bf16 %v1316, %v1315
  %v1372 = vpack.c.bf16 %v1318, %v1317
  %v1373 = vpack.c.bf16 %v1320, %v1319
  %v1374 = vpack.c.bf16 %v1322, %v1321
  %v1375 = vpack.c.bf16 %v1324, %v1323
  %v1376 = vpack.c.bf16 %v1326, %v1325
  %v1377 = vpack.c.bf16 %v1328, %v1327
  %v1378 = vpack.c.bf16 %v1330, %v1329
  %v1379 = vpack.c.bf16 %v1332, %v1331
  %v1380 = vpack.c.bf16 %v1334, %v1333
  %v1381 = vpack.c.bf16 %v1336, %v1335
  %v1382 = vpack.c.bf16 %v1338, %v1337
  %v1383 = vpack.c.bf16 %v1340, %v1339
  %v1384 = vpack.c.bf16 %v1342, %v1341
  %v1385 = vpack.c.bf16 %v1344, %v1343
  %v1386 = vpack.c.bf16 %v1346, %v1345
  %v1387 = vpack.c.bf16 %v1348, %v1347
  %v1388 = vpack.c.bf16 %v1350, %v1349
  %v1389 = vpack.c.bf16 %v1352, %v1351
  %v1390 = vpack.c.bf16 %v1354, %v1353
  %v1391 = vpack.c.bf16 %v1356, %v1355
  %v1392 = vpack.c.bf16 %v1358, %v1357
  %v1393 = vpack.c.bf16 %v1360, %v1359
  %v1394 = vpack.c.bf16 %v1362, %v1361
  %v1427 = vunpack.c.l.b16 %v1363
  %v1428 = vunpack.c.h.b16 %v1363
  %v1429 = vunpack.c.l.b16 %v1364
  %v1430 = vunpack.c.h.b16 %v1364
  %v1431 = vunpack.c.l.b16 %v1365
  %v1432 = vunpack.c.h.b16 %v1365
  %v1433 = vunpack.c.l.b16 %v1366
  %v1434 = vunpack.c.h.b16 %v1366
  %v1435 = vunpack.c.l.b16 %v1367
  %v1436 = vunpack.c.h.b16 %v1367
  %v1437 = vunpack.c.l.b16 %v1368
  %v1438 = vunpack.c.h.b16 %v1368
  %v1439 = vunpack.c.l.b16 %v1369
  %v1440 = vunpack.c.h.b16 %v1369
  %v1441 = vunpack.c.l.b16 %v1370
  %v1442 = vunpack.c.h.b16 %v1370
  %v1443 = vunpack.c.l.b16 %v1371
  %v1444 = vunpack.c.h.b16 %v1371
  %v1445 = vunpack.c.l.b16 %v1372
  %v1446 = vunpack.c.h.b16 %v1372
  %v1447 = vunpack.c.l.b16 %v1373
  %v1448 = vunpack.c.h.b16 %v1373
  %v1449 = vunpack.c.l.b16 %v1374
  %v1450 = vunpack.c.h.b16 %v1374
  %v1451 = vunpack.c.l.b16 %v1375
  %v1452 = vunpack.c.h.b16 %v1375
  %v1453 = vunpack.c.l.b16 %v1376
  %v1454 = vunpack.c.h.b16 %v1376
  %v1455 = vunpack.c.l.b16 %v1377
  %v1456 = vunpack.c.h.b16 %v1377
  %v1457 = vunpack.c.l.b16 %v1378
  %v1458 = vunpack.c.h.b16 %v1378
  %v1459 = vunpack.c.l.b16 %v1379
  %v1460 = vunpack.c.h.b16 %v1379
  %v1461 = vunpack.c.l.b16 %v1380
  %v1462 = vunpack.c.h.b16 %v1380
  %v1463 = vunpack.c.l.b16 %v1381
  %v1464 = vunpack.c.h.b16 %v1381
  %v1465 = vunpack.c.l.b16 %v1382
  %v1466 = vunpack.c.h.b16 %v1382
  %v1467 = vunpack.c.l.b16 %v1383
  %v1468 = vunpack.c.h.b16 %v1383
  %v1469 = vunpack.c.l.b16 %v1384
  %v1470 = vunpack.c.h.b16 %v1384
  %v1471 = vunpack.c.l.b16 %v1385
  %v1472 = vunpack.c.h.b16 %v1385
  %v1473 = vunpack.c.l.b16 %v1386
  %v1474 = vunpack.c.h.b16 %v1386
  %v1475 = vunpack.c.l.b16 %v1387
  %v1476 = vunpack.c.h.b16 %v1387
  %v1477 = vunpack.c.l.b16 %v1388
  %v1478 = vunpack.c.h.b16 %v1388
  %v1479 = vunpack.c.l.b16 %v1389
  %v1480 = vunpack.c.h.b16 %v1389
  %v1481 = vunpack.c.l.b16 %v1390
  %v1482 = vunpack.c.h.b16 %v1390
  %v1483 = vunpack.c.l.b16 %v1391
  %v1484 = vunpack.c.h.b16 %v1391
  %v1485 = vunpack.c.l.b16 %v1392
  %v1486 = vunpack.c.h.b16 %v1392
  %v1487 = vunpack.c.l.b16 %v1393
  %v1488 = vunpack.c.h.b16 %v1393
  %v1489 = vunpack.c.l.b16 %v1394
  %v1490 = vunpack.c.h.b16 %v1394
  %v1491 = vpack.c.b16 %v1427, %v1427
  %v1492 = vpack.c.b16 %v1428, %v1428
  %v1493 = vpack.c.b16 %v1429, %v1429
  %v1494 = vpack.c.b16 %v1430, %v1430
  %v1495 = vpack.c.b16 %v1431, %v1431
  %v1496 = vpack.c.b16 %v1432, %v1432
  %v1497 = vpack.c.b16 %v1433, %v1433
  %v1498 = vpack.c.b16 %v1434, %v1434
  %v1499 = vpack.c.b16 %v1435, %v1435
  %v1500 = vpack.c.b16 %v1436, %v1436
  %v1501 = vpack.c.b16 %v1437, %v1437
  %v1502 = vpack.c.b16 %v1438, %v1438
  %v1503 = vpack.c.b16 %v1439, %v1439
  %v1504 = vpack.c.b16 %v1440, %v1440
  %v1505 = vpack.c.b16 %v1441, %v1441
  %v1506 = vpack.c.b16 %v1442, %v1442
  %v1507 = vpack.c.b16 %v1443, %v1443
  %v1508 = vpack.c.b16 %v1444, %v1444
  %v1509 = vpack.c.b16 %v1445, %v1445
  %v1510 = vpack.c.b16 %v1446, %v1446
  %v1511 = vpack.c.b16 %v1447, %v1447
  %v1512 = vpack.c.b16 %v1448, %v1448
  %v1513 = vpack.c.b16 %v1449, %v1449
  %v1514 = vpack.c.b16 %v1450, %v1450
  %v1515 = vpack.c.b16 %v1451, %v1451
  %v1516 = vpack.c.b16 %v1452, %v1452
  %v1517 = vpack.c.b16 %v1453, %v1453
  %v1518 = vpack.c.b16 %v1454, %v1454
  %v1519 = vpack.c.b16 %v1455, %v1455
  %v1520 = vpack.c.b16 %v1456, %v1456
  %v1521 = vpack.c.b16 %v1457, %v1457
  %v1522 = vpack.c.b16 %v1458, %v1458
  %v1523 = vpack.c.b16 %v1459, %v1459
  %v1524 = vpack.c.b16 %v1460, %v1460
  %v1525 = vpack.c.b16 %v1461, %v1461
  %v1526 = vpack.c.b16 %v1462, %v1462
  %v1527 = vpack.c.b16 %v1463, %v1463
  %v1528 = vpack.c.b16 %v1464, %v1464
  %v1529 = vpack.c.b16 %v1465, %v1465
  %v1530 = vpack.c.b16 %v1466, %v1466
  %v1531 = vpack.c.b16 %v1467, %v1467
  %v1532 = vpack.c.b16 %v1468, %v1468
  %v1533 = vpack.c.b16 %v1469, %v1469
  %v1534 = vpack.c.b16 %v1470, %v1470
  %v1535 = vpack.c.b16 %v1471, %v1471
  %v1536 = vpack.c.b16 %v1472, %v1472
  %v1537 = vpack.c.b16 %v1473, %v1473
  %v1538 = vpack.c.b16 %v1474, %v1474
  %v1539 = vpack.c.b16 %v1475, %v1475
  %v1540 = vpack.c.b16 %v1476, %v1476
  %v1541 = vpack.c.b16 %v1477, %v1477
  %v1542 = vpack.c.b16 %v1478, %v1478
  %v1543 = vpack.c.b16 %v1479, %v1479
  %v1544 = vpack.c.b16 %v1480, %v1480
  %v1545 = vpack.c.b16 %v1481, %v1481
  %v1546 = vpack.c.b16 %v1482, %v1482
  %v1547 = vpack.c.b16 %v1483, %v1483
  %v1548 = vpack.c.b16 %v1484, %v1484
  %v1549 = vpack.c.b16 %v1485, %v1485
  %v1550 = vpack.c.b16 %v1486, %v1486
  %v1551 = vpack.c.b16 %v1487, %v1487
  %v1552 = vpack.c.b16 %v1488, %v1488
  %v1553 = vpack.c.b16 %v1489, %v1489
  %v1554 = vpack.c.b16 %v1490, %v1490
  %vm1619 = vcmask 125952
  %1620 = vst.msk [vmem:[%s4] sm:$0xf] %vm1619, %v1491
  %1621 = vst.msk [vmem:[%s4 + $0x4] sm:$0xf] %vm1619, %v1492
  %1622 = vst.msk [vmem:[%s4 + $0x8] sm:$0xf] %vm1619, %v1493
  %1623 = vst.msk [vmem:[%s4 + $0xc] sm:$0xf] %vm1619, %v1494
  %1624 = vst.msk [vmem:[%s4 + $0x10] sm:$0xf] %vm1619, %v1495
  %1625 = vst.msk [vmem:[%s4 + $0x14] sm:$0xf] %vm1619, %v1496
  %1626 = vst.msk [vmem:[%s4 + $0x18] sm:$0xf] %vm1619, %v1497
  %1627 = vst.msk [vmem:[%s4 + $0x1c] sm:$0xf] %vm1619, %v1498
  %1628 = vst.msk [vmem:[%s4 + $0x20] sm:$0xf] %vm1619, %v1499
  %1629 = vst.msk [vmem:[%s4 + $0x24] sm:$0xf] %vm1619, %v1500
  %1630 = vst.msk [vmem:[%s4 + $0x28] sm:$0xf] %vm1619, %v1501
  %1631 = vst.msk [vmem:[%s4 + $0x2c] sm:$0xf] %vm1619, %v1502
  %1632 = vst.msk [vmem:[%s4 + $0x30] sm:$0xf] %vm1619, %v1503
  %1633 = vst.msk [vmem:[%s4 + $0x34] sm:$0xf] %vm1619, %v1504
  %1634 = vst.msk [vmem:[%s4 + $0x38] sm:$0xf] %vm1619, %v1505
  %1635 = vst.msk [vmem:[%s4 + $0x3c] sm:$0xf] %vm1619, %v1506
  %1636 = vst.msk [vmem:[%s4 + $0x40] sm:$0xf] %vm1619, %v1507
  %1637 = vst.msk [vmem:[%s4 + $0x44] sm:$0xf] %vm1619, %v1508
  %1638 = vst.msk [vmem:[%s4 + $0x48] sm:$0xf] %vm1619, %v1509
  %1639 = vst.msk [vmem:[%s4 + $0x4c] sm:$0xf] %vm1619, %v1510
  %1640 = vst.msk [vmem:[%s4 + $0x50] sm:$0xf] %vm1619, %v1511
  %1641 = vst.msk [vmem:[%s4 + $0x54] sm:$0xf] %vm1619, %v1512
  %1642 = vst.msk [vmem:[%s4 + $0x58] sm:$0xf] %vm1619, %v1513
  %1643 = vst.msk [vmem:[%s4 + $0x5c] sm:$0xf] %vm1619, %v1514
  %1644 = vst.msk [vmem:[%s4 + $0x60] sm:$0xf] %vm1619, %v1515
  %1645 = vst.msk [vmem:[%s4 + $0x64] sm:$0xf] %vm1619, %v1516
  %1646 = vst.msk [vmem:[%s4 + $0x68] sm:$0xf] %vm1619, %v1517
  %1647 = vst.msk [vmem:[%s4 + $0x6c] sm:$0xf] %vm1619, %v1518
  %1648 = vst.msk [vmem:[%s4 + $0x70] sm:$0xf] %vm1619, %v1519
  %1649 = vst.msk [vmem:[%s4 + $0x74] sm:$0xf] %vm1619, %v1520
  %1650 = vst.msk [vmem:[%s4 + $0x78] sm:$0xf] %vm1619, %v1521
  %1651 = vst.msk [vmem:[%s4 + $0x7c] sm:$0xf] %vm1619, %v1522
  %1652 = vst.msk [vmem:[%s4 + $0x80] sm:$0xf] %vm1619, %v1523
  %1653 = vst.msk [vmem:[%s4 + $0x84] sm:$0xf] %vm1619, %v1524
  %1654 = vst.msk [vmem:[%s4 + $0x88] sm:$0xf] %vm1619, %v1525
  %1655 = vst.msk [vmem:[%s4 + $0x8c] sm:$0xf] %vm1619, %v1526
  %1656 = vst.msk [vmem:[%s4 + $0x90] sm:$0xf] %vm1619, %v1527
  %1657 = vst.msk [vmem:[%s4 + $0x94] sm:$0xf] %vm1619, %v1528
  %1658 = vst.msk [vmem:[%s4 + $0x98] sm:$0xf] %vm1619, %v1529
  %1659 = vst.msk [vmem:[%s4 + $0x9c] sm:$0xf] %vm1619, %v1530
  %1660 = vst.msk [vmem:[%s4 + $0xa0] sm:$0xf] %vm1619, %v1531
  %1661 = vst.msk [vmem:[%s4 + $0xa4] sm:$0xf] %vm1619, %v1532
  %1662 = vst.msk [vmem:[%s4 + $0xa8] sm:$0xf] %vm1619, %v1533
  %1663 = vst.msk [vmem:[%s4 + $0xac] sm:$0xf] %vm1619, %v1534
  %1664 = vst.msk [vmem:[%s4 + $0xb0] sm:$0xf] %vm1619, %v1535
  %1665 = vst.msk [vmem:[%s4 + $0xb4] sm:$0xf] %vm1619, %v1536
  %1666 = vst.msk [vmem:[%s4 + $0xb8] sm:$0xf] %vm1619, %v1537
  %1667 = vst.msk [vmem:[%s4 + $0xbc] sm:$0xf] %vm1619, %v1538
  %1668 = vst.msk [vmem:[%s4 + $0xc0] sm:$0xf] %vm1619, %v1539
  %1669 = vst.msk [vmem:[%s4 + $0xc4] sm:$0xf] %vm1619, %v1540
  %1670 = vst.msk [vmem:[%s4 + $0xc8] sm:$0xf] %vm1619, %v1541
  %1671 = vst.msk [vmem:[%s4 + $0xcc] sm:$0xf] %vm1619, %v1542
  %1672 = vst.msk [vmem:[%s4 + $0xd0] sm:$0xf] %vm1619, %v1543
  %1673 = vst.msk [vmem:[%s4 + $0xd4] sm:$0xf] %vm1619, %v1544
  %1674 = vst.msk [vmem:[%s4 + $0xd8] sm:$0xf] %vm1619, %v1545
  %1675 = vst.msk [vmem:[%s4 + $0xdc] sm:$0xf] %vm1619, %v1546
  %1676 = vst.msk [vmem:[%s4 + $0xe0] sm:$0xf] %vm1619, %v1547
  %1677 = vst.msk [vmem:[%s4 + $0xe4] sm:$0xf] %vm1619, %v1548
  %1678 = vst.msk [vmem:[%s4 + $0xe8] sm:$0xf] %vm1619, %v1549
  %1679 = vst.msk [vmem:[%s4 + $0xec] sm:$0xf] %vm1619, %v1550
  %1680 = vst.msk [vmem:[%s4 + $0xf0] sm:$0xf] %vm1619, %v1551
  %1681 = vst.msk [vmem:[%s4 + $0xf4] sm:$0xf] %vm1619, %v1552
  %1682 = vst.msk [vmem:[%s4 + $0xf8] sm:$0xf] %vm1619, %v1553
  %1683 = vst.msk [vmem:[%s4 + $0xfc] sm:$0xf] %vm1619, %v1554
  // Predicated region
  $region18: #{discriminator_forward.6} parent=0 // pred_check
    _
  $region19: #{discriminator_forward.6} parent=0 // pred_check_branch
    %1685 = sbr.rel (0) target = $region21
  $region20: #{discriminator_forward.6} parent=0 // pred_region
    _
  $region21: #{discriminator_forward.6} parent=0 // pred_fallthru
    _
  // Predicated region
  $region22: #{discriminator_forward.6} parent=0 // pred_check
    _
  $region23: #{discriminator_forward.6} parent=0 // pred_check_branch
    %1687 = sbr.rel (0) target = $region25
  $region24: #{discriminator_forward.6} parent=0 // pred_region
    _
  $region25: #{discriminator_forward.6} parent=0 // pred_fallthru
    _

// kernel: discriminator_forward.7
$region0: #{discriminator_forward.7}
  #allocation0 [shape = 'u32[]', space=smem, size = 0x4, offset = 0x4, fixed_abs, tag = 'smem constant byte address 0x4 - core index']
  #allocation1 [shape = 'u32[144,128]{1,0:T(1,128)}', space=vmem, size = 0x12000, scoped, tag = 'internal scratch']
  %s0 = inlined_call_operand.vmem [shape: bf16[128,256], index: 0, kind: input, shape index: {}]
  %s1 = inlined_call_operand.vmem [shape: bf16[256,128], index: 1, kind: input, shape index: {}]
  %s2 = inlined_call_operand.vmem [shape: f32[1,32], index: 2, kind: input, shape index: {}]
  %s3 = inlined_call_operand.vmem [shape: f32[1,32], index: 3, kind: input, shape index: {}]
  %s4 = inlined_call_operand.vmem [shape: bf16[128,32], index: 4, kind: output, shape index: {}]
  %s5 = sld [smem:[#allocation0]]
  $region26: #{discriminator_forward.7} parent=0
    _
  %s7 = ssub.s32 1, %s5
  %s8 = scalar_select 0, %s7, %s5
  // Predicated region
  $region2: #{discriminator_forward.7} parent=0 // pred_check
    _
  $region3: #{discriminator_forward.7} parent=0 // pred_check_branch
    %10 = sbr.rel (0) target = $region5
  $region4: #{discriminator_forward.7} parent=0 // pred_region
    _
  $region5: #{discriminator_forward.7} parent=0 // pred_fallthru
    _
  // Predicated region
  $region6: #{discriminator_forward.7} parent=0 // pred_check
    _
  $region7: #{discriminator_forward.7} parent=0 // pred_check_branch
    %12 = sbr.rel (0) target = $region9
  $region8: #{discriminator_forward.7} parent=0 // pred_region
    _
  $region9: #{discriminator_forward.7} parent=0 // pred_fallthru
    _
  // Predicated region
  $region10: #{discriminator_forward.7} parent=0 // pred_check
    _
  $region11: #{discriminator_forward.7} parent=0 // pred_check_branch
    %14 = sbr.rel (0) target = $region13
  $region12: #{discriminator_forward.7} parent=0 // pred_region
    _
  $region13: #{discriminator_forward.7} parent=0 // pred_fallthru
    _
  // Predicated region
  $region14: #{discriminator_forward.7} parent=0 // pred_check
    _
  $region15: #{discriminator_forward.7} parent=0 // pred_check_branch
    %16 = sbr.rel (0) target = $region17
  $region16: #{discriminator_forward.7} parent=0 // pred_region
    _
  $region17: #{discriminator_forward.7} parent=0 // pred_fallthru
    _
  %v18 = vld [vmem:[%s0] sm:$0xff]
  %v19 = vld [vmem:[%s0 + $0x8] sm:$0xff]
  %v20 = vld [vmem:[%s0 + $0x10] sm:$0xff]
  %v21 = vld [vmem:[%s0 + $0x18] sm:$0xff]
  %v22 = vld [vmem:[%s0 + $0x20] sm:$0xff]
  %v23 = vld [vmem:[%s0 + $0x28] sm:$0xff]
  %v24 = vld [vmem:[%s0 + $0x30] sm:$0xff]
  %v25 = vld [vmem:[%s0 + $0x38] sm:$0xff]
  %v26 = vld [vmem:[%s0 + $0x40] sm:$0xff]
  %v27 = vld [vmem:[%s0 + $0x48] sm:$0xff]
  %v28 = vld [vmem:[%s0 + $0x50] sm:$0xff]
  %v29 = vld [vmem:[%s0 + $0x58] sm:$0xff]
  %v30 = vld [vmem:[%s0 + $0x60] sm:$0xff]
  %v31 = vld [vmem:[%s0 + $0x68] sm:$0xff]
  %v32 = vld [vmem:[%s0 + $0x70] sm:$0xff]
  %v33 = vld [vmem:[%s0 + $0x78] sm:$0xff]
  %v34 = vld [vmem:[%s1] sm:$0xf]
  %v35 = vld [vmem:[%s1 + $0x4] sm:$0xf]
  %v36 = vld [vmem:[%s1 + $0x8] sm:$0xf]
  %v37 = vld [vmem:[%s1 + $0xc] sm:$0xf]
  %v38 = vld [vmem:[%s1 + $0x10] sm:$0xf]
  %v39 = vld [vmem:[%s1 + $0x14] sm:$0xf]
  %v40 = vld [vmem:[%s1 + $0x18] sm:$0xf]
  %v41 = vld [vmem:[%s1 + $0x1c] sm:$0xf]
  %v42 = vld [vmem:[%s1 + $0x20] sm:$0xf]
  %v43 = vld [vmem:[%s1 + $0x24] sm:$0xf]
  %v44 = vld [vmem:[%s1 + $0x28] sm:$0xf]
  %v45 = vld [vmem:[%s1 + $0x2c] sm:$0xf]
  %v46 = vld [vmem:[%s1 + $0x30] sm:$0xf]
  %v47 = vld [vmem:[%s1 + $0x34] sm:$0xf]
  %v48 = vld [vmem:[%s1 + $0x38] sm:$0xf]
  %v49 = vld [vmem:[%s1 + $0x3c] sm:$0xf]
  %v50 = vld [vmem:[%s1 + $0x40] sm:$0xf]
  %v51 = vld [vmem:[%s1 + $0x44] sm:$0xf]
  %v52 = vld [vmem:[%s1 + $0x48] sm:$0xf]
  %v53 = vld [vmem:[%s1 + $0x4c] sm:$0xf]
  %v54 = vld [vmem:[%s1 + $0x50] sm:$0xf]
  %v55 = vld [vmem:[%s1 + $0x54] sm:$0xf]
  %v56 = vld [vmem:[%s1 + $0x58] sm:$0xf]
  %v57 = vld [vmem:[%s1 + $0x5c] sm:$0xf]
  %v58 = vld [vmem:[%s1 + $0x60] sm:$0xf]
  %v59 = vld [vmem:[%s1 + $0x64] sm:$0xf]
  %v60 = vld [vmem:[%s1 + $0x68] sm:$0xf]
  %v61 = vld [vmem:[%s1 + $0x6c] sm:$0xf]
  %v62 = vld [vmem:[%s1 + $0x70] sm:$0xf]
  %v63 = vld [vmem:[%s1 + $0x74] sm:$0xf]
  %v64 = vld [vmem:[%s1 + $0x78] sm:$0xf]
  %v65 = vld [vmem:[%s1 + $0x7c] sm:$0xf]
  %v82 = vunpack.c.l.b16 %v18
  %v83 = vunpack.c.h.b16 %v18
  %v84 = vunpack.c.l.b16 %v19
  %v85 = vunpack.c.h.b16 %v19
  %v86 = vunpack.c.l.b16 %v20
  %v87 = vunpack.c.h.b16 %v20
  %v88 = vunpack.c.l.b16 %v21
  %v89 = vunpack.c.h.b16 %v21
  %v90 = vunpack.c.l.b16 %v22
  %v91 = vunpack.c.h.b16 %v22
  %v92 = vunpack.c.l.b16 %v23
  %v93 = vunpack.c.h.b16 %v23
  %v94 = vunpack.c.l.b16 %v24
  %v95 = vunpack.c.h.b16 %v24
  %v96 = vunpack.c.l.b16 %v25
  %v97 = vunpack.c.h.b16 %v25
  %v98 = vunpack.c.l.b16 %v26
  %v99 = vunpack.c.h.b16 %v26
  %v100 = vunpack.c.l.b16 %v27
  %v101 = vunpack.c.h.b16 %v27
  %v102 = vunpack.c.l.b16 %v28
  %v103 = vunpack.c.h.b16 %v28
  %v104 = vunpack.c.l.b16 %v29
  %v105 = vunpack.c.h.b16 %v29
  %v106 = vunpack.c.l.b16 %v30
  %v107 = vunpack.c.h.b16 %v30
  %v108 = vunpack.c.l.b16 %v31
  %v109 = vunpack.c.h.b16 %v31
  %v110 = vunpack.c.l.b16 %v32
  %v111 = vunpack.c.h.b16 %v32
  %v112 = vunpack.c.l.b16 %v33
  %v113 = vunpack.c.h.b16 %v33
  %v114 = vpack.c.b16 %v84, %v82
  %v115 = vpack.c.b16 %v85, %v83
  %v116 = vpack.c.b16 %v88, %v86
  %v117 = vpack.c.b16 %v89, %v87
  %v118 = vpack.c.b16 %v92, %v90
  %v119 = vpack.c.b16 %v93, %v91
  %v120 = vpack.c.b16 %v96, %v94
  %v121 = vpack.c.b16 %v97, %v95
  %v122 = vpack.c.b16 %v100, %v98
  %v123 = vpack.c.b16 %v101, %v99
  %v124 = vpack.c.b16 %v104, %v102
  %v125 = vpack.c.b16 %v105, %v103
  %v126 = vpack.c.b16 %v108, %v106
  %v127 = vpack.c.b16 %v109, %v107
  %v128 = vpack.c.b16 %v112, %v110
  %v129 = vpack.c.b16 %v113, %v111
  %v178 = vunpack.c.l.b16 %v34
  %v179 = vunpack.c.l.b16 %v35
  %v180 = vunpack.c.l.b16 %v36
  %v181 = vunpack.c.l.b16 %v37
  %v182 = vunpack.c.l.b16 %v38
  %v183 = vunpack.c.l.b16 %v39
  %v184 = vunpack.c.l.b16 %v40
  %v185 = vunpack.c.l.b16 %v41
  %v186 = vunpack.c.l.b16 %v42
  %v187 = vunpack.c.l.b16 %v43
  %v188 = vunpack.c.l.b16 %v44
  %v189 = vunpack.c.l.b16 %v45
  %v190 = vunpack.c.l.b16 %v46
  %v191 = vunpack.c.l.b16 %v47
  %v192 = vunpack.c.l.b16 %v48
  %v193 = vunpack.c.l.b16 %v49
  %v194 = vunpack.c.l.b16 %v50
  %v195 = vunpack.c.l.b16 %v51
  %v196 = vunpack.c.l.b16 %v52
  %v197 = vunpack.c.l.b16 %v53
  %v198 = vunpack.c.l.b16 %v54
  %v199 = vunpack.c.l.b16 %v55
  %v200 = vunpack.c.l.b16 %v56
  %v201 = vunpack.c.l.b16 %v57
  %v202 = vunpack.c.l.b16 %v58
  %v203 = vunpack.c.l.b16 %v59
  %v204 = vunpack.c.l.b16 %v60
  %v205 = vunpack.c.l.b16 %v61
  %v206 = vunpack.c.l.b16 %v62
  %v207 = vunpack.c.l.b16 %v63
  %v208 = vunpack.c.l.b16 %v64
  %v209 = vunpack.c.l.b16 %v65
  %v210 = vpack.c.b16 %v179, %v178
  %v211 = vpack.c.b16 %v181, %v180
  %v212 = vpack.c.b16 %v183, %v182
  %v213 = vpack.c.b16 %v185, %v184
  %v214 = vpack.c.b16 %v187, %v186
  %v215 = vpack.c.b16 %v189, %v188
  %v216 = vpack.c.b16 %v191, %v190
  %v217 = vpack.c.b16 %v193, %v192
  %v218 = vpack.c.b16 %v195, %v194
  %v219 = vpack.c.b16 %v197, %v196
  %v220 = vpack.c.b16 %v199, %v198
  %v221 = vpack.c.b16 %v201, %v200
  %v222 = vpack.c.b16 %v203, %v202
  %v223 = vpack.c.b16 %v205, %v204
  %v224 = vpack.c.b16 %v207, %v206
  %v225 = vpack.c.b16 %v209, %v208
  %242 = vmatprep.subr.bf16.mxu0 0
  %243 = vmatpush1.bf16.msra.mxu0 %v210
  %244 = vmatprep.subr.bf16.mxu0 0
  %245 = vmatpush1.bf16.msra.mxu0 %v211
  %246 = vmatprep.subr.bf16.mxu0 0
  %247 = vmatpush1.bf16.msra.mxu0 %v212
  %248 = vmatprep.subr.bf16.mxu0 0
  %249 = vmatpush1.bf16.msra.mxu0 %v213
  %250 = vmatprep.subr.bf16.mxu0 0
  %251 = vmatpush1.bf16.msra.mxu0 %v214
  %252 = vmatprep.subr.bf16.mxu0 0
  %253 = vmatpush1.bf16.msra.mxu0 %v215
  %254 = vmatprep.subr.bf16.mxu0 0
  %255 = vmatpush1.bf16.msra.mxu0 %v216
  %256 = vmatprep.subr.bf16.mxu0 0
  %257 = vmatpush1.bf16.msra.mxu0 %v217
  %258 = vmatprep.subr.bf16.mxu0 0
  %259 = vmatpush1.bf16.msra.mxu0 %v218
  %260 = vmatprep.subr.bf16.mxu0 0
  %261 = vmatpush1.bf16.msra.mxu0 %v219
  %262 = vmatprep.subr.bf16.mxu0 0
  %263 = vmatpush1.bf16.msra.mxu0 %v220
  %264 = vmatprep.subr.bf16.mxu0 0
  %265 = vmatpush1.bf16.msra.mxu0 %v221
  %266 = vmatprep.subr.bf16.mxu0 0
  %267 = vmatpush1.bf16.msra.mxu0 %v222
  %268 = vmatprep.subr.bf16.mxu0 0
  %269 = vmatpush1.bf16.msra.mxu0 %v223
  %270 = vmatprep.subr.bf16.mxu0 0
  %271 = vmatpush1.bf16.msra.mxu0 %v224
  %272 = vmatprep.subr.bf16.mxu0 0
  %273 = vmatpush1.bf16.msra.mxu0 %v225
  %274 = vmatprep.mubr.bf16.mxu0 %v115
  %275 = vmatmul.mubr.bf16.gmra.mrb[0].mxu0 %v114
  %v276 = vpop.f32.mrb[0].mxu0
  %v277 = vadd.f32 0.0, %v276
  %v278 = vpop.f32.mrb[0].mxu0
  %v279 = vpop.f32.mrb[0].mxu0
  %v280 = vadd.f32 0.0, %v279
  %v281 = vpop.f32.mrb[0].mxu0
  %282 = vmatprep.mubr.bf16.mxu0 %v117
  %283 = vmatmul.mubr.bf16.gmra.mrb[0].mxu0 %v116
  %v284 = vpop.f32.mrb[0].mxu0
  %v285 = vadd.f32 0.0, %v284
  %v286 = vpop.f32.mrb[0].mxu0
  %v287 = vpop.f32.mrb[0].mxu0
  %v288 = vadd.f32 0.0, %v287
  %v289 = vpop.f32.mrb[0].mxu0
  %290 = vmatprep.mubr.bf16.mxu0 %v119
  %291 = vmatmul.mubr.bf16.gmra.mrb[0].mxu0 %v118
  %v292 = vpop.f32.mrb[0].mxu0
  %v293 = vadd.f32 0.0, %v292
  %v294 = vpop.f32.mrb[0].mxu0
  %v295 = vpop.f32.mrb[0].mxu0
  %v296 = vadd.f32 0.0, %v295
  %v297 = vpop.f32.mrb[0].mxu0
  %298 = vmatprep.mubr.bf16.mxu0 %v121
  %299 = vmatmul.mubr.bf16.gmra.mrb[0].mxu0 %v120
  %v300 = vpop.f32.mrb[0].mxu0
  %v301 = vadd.f32 0.0, %v300
  %v302 = vpop.f32.mrb[0].mxu0
  %v303 = vpop.f32.mrb[0].mxu0
  %v304 = vadd.f32 0.0, %v303
  %v305 = vpop.f32.mrb[0].mxu0
  %306 = vmatprep.mubr.bf16.mxu0 %v123
  %307 = vmatmul.mubr.bf16.gmra.mrb[0].mxu0 %v122
  %v308 = vpop.f32.mrb[0].mxu0
  %v309 = vadd.f32 0.0, %v308
  %v310 = vpop.f32.mrb[0].mxu0
  %v311 = vpop.f32.mrb[0].mxu0
  %v312 = vadd.f32 0.0, %v311
  %v313 = vpop.f32.mrb[0].mxu0
  %314 = vmatprep.mubr.bf16.mxu0 %v125
  %315 = vmatmul.mubr.bf16.gmra.mrb[0].mxu0 %v124
  %v316 = vpop.f32.mrb[0].mxu0
  %v317 = vadd.f32 0.0, %v316
  %v318 = vpop.f32.mrb[0].mxu0
  %v319 = vpop.f32.mrb[0].mxu0
  %v320 = vadd.f32 0.0, %v319
  %v321 = vpop.f32.mrb[0].mxu0
  %322 = vmatprep.mubr.bf16.mxu0 %v127
  %323 = vmatmul.mubr.bf16.gmra.mrb[0].mxu0 %v126
  %v324 = vpop.f32.mrb[0].mxu0
  %v325 = vadd.f32 0.0, %v324
  %v326 = vpop.f32.mrb[0].mxu0
  %v327 = vpop.f32.mrb[0].mxu0
  %v328 = vadd.f32 0.0, %v327
  %v329 = vpop.f32.mrb[0].mxu0
  %330 = vmatprep.mubr.bf16.mxu0 %v129
  %331 = vmatmul.mubr.bf16.gmra.mrb[0].mxu0 %v128
  %v332 = vpop.f32.mrb[0].mxu0
  %v333 = vadd.f32 0.0, %v332
  %v334 = vpop.f32.mrb[0].mxu0
  %v335 = vpop.f32.mrb[0].mxu0
  %v336 = vadd.f32 0.0, %v335
  %v337 = vpop.f32.mrb[0].mxu0
  %338 = vdwg.mxu0
  %vm339 = vcmask 261120
  %v340 = vsel %vm339, %v277, 0.0
  %v341 = vsel %vm339, %v280, 0.0
  %v342 = vadd.f32 %v340, %v341
  %v343 = vsel %vm339, %v285, 0.0
  %v344 = vadd.f32 %v342, %v343
  %v345 = vsel %vm339, %v288, 0.0
  %v346 = vadd.f32 %v344, %v345
  %v347 = vsel %vm339, %v293, 0.0
  %v348 = vadd.f32 %v346, %v347
  %v349 = vsel %vm339, %v296, 0.0
  %v350 = vadd.f32 %v348, %v349
  %v351 = vsel %vm339, %v301, 0.0
  %v352 = vadd.f32 %v350, %v351
  %v353 = vsel %vm339, %v304, 0.0
  %v354 = vadd.f32 %v352, %v353
  %v355 = vsel %vm339, %v309, 0.0
  %v356 = vadd.f32 %v354, %v355
  %v357 = vsel %vm339, %v312, 0.0
  %v358 = vadd.f32 %v356, %v357
  %v359 = vsel %vm339, %v317, 0.0
  %v360 = vadd.f32 %v358, %v359
  %v361 = vsel %vm339, %v320, 0.0
  %v362 = vadd.f32 %v360, %v361
  %v363 = vsel %vm339, %v325, 0.0
  %v364 = vadd.f32 %v362, %v363
  %v365 = vsel %vm339, %v328, 0.0
  %v366 = vadd.f32 %v364, %v365
  %v367 = vsel %vm339, %v333, 0.0
  %v368 = vadd.f32 %v366, %v367
  %v369 = vsel %vm339, %v336, 0.0
  %v370 = vadd.f32 %v368, %v369
  %v371 = vrot.slane %v370, 4
  %v372 = vadd.f32 %v370, %v371
  %v373 = vrot.slane %v372, 2
  %v374 = vadd.f32 %v372, %v373
  %v375 = vrot.slane %v374, 1
  %v376 = vadd.f32 %v374, %v375
  %v377 = vmul.f32 %v376, 0.0078125
  %v378 = vsub.f32 %v277, %v377
  %v379 = vsub.f32 %v280, %v377
  %v380 = vsub.f32 %v285, %v377
  %v381 = vsub.f32 %v288, %v377
  %v382 = vsub.f32 %v293, %v377
  %v383 = vsub.f32 %v296, %v377
  %v384 = vsub.f32 %v301, %v377
  %v385 = vsub.f32 %v304, %v377
  %v386 = vsub.f32 %v309, %v377
  %v387 = vsub.f32 %v312, %v377
  %v388 = vsub.f32 %v317, %v377
  %v389 = vsub.f32 %v320, %v377
  %v390 = vsub.f32 %v325, %v377
  %v391 = vsub.f32 %v328, %v377
  %v392 = vsub.f32 %v333, %v377
  %v393 = vsub.f32 %v336, %v377
  %v394 = vmul.f32 %v378, %v378
  %v395 = vmul.f32 %v379, %v379
  %v396 = vmul.f32 %v380, %v380
  %v397 = vmul.f32 %v381, %v381
  %v398 = vmul.f32 %v382, %v382
  %v399 = vmul.f32 %v383, %v383
  %v400 = vmul.f32 %v384, %v384
  %v401 = vmul.f32 %v385, %v385
  %v402 = vmul.f32 %v386, %v386
  %v403 = vmul.f32 %v387, %v387
  %v404 = vmul.f32 %v388, %v388
  %v405 = vmul.f32 %v389, %v389
  %v406 = vmul.f32 %v390, %v390
  %v407 = vmul.f32 %v391, %v391
  %v408 = vmul.f32 %v392, %v392
  %v409 = vmul.f32 %v393, %v393
  %v410 = vsel %vm339, %v394, 0.0
  %v411 = vsel %vm339, %v395, 0.0
  %v412 = vadd.f32 %v410, %v411
  %v413 = vsel %vm339, %v396, 0.0
  %v414 = vadd.f32 %v412, %v413
  %v415 = vsel %vm339, %v397, 0.0
  %v416 = vadd.f32 %v414, %v415
  %v417 = vsel %vm339, %v398, 0.0
  %v418 = vadd.f32 %v416, %v417
  %v419 = vsel %vm339, %v399, 0.0
  %v420 = vadd.f32 %v418, %v419
  %v421 = vsel %vm339, %v400, 0.0
  %v422 = vadd.f32 %v420, %v421
  %v423 = vsel %vm339, %v401, 0.0
  %v424 = vadd.f32 %v422, %v423
  %v425 = vsel %vm339, %v402, 0.0
  %v426 = vadd.f32 %v424, %v425
  %v427 = vsel %vm339, %v403, 0.0
  %v428 = vadd.f32 %v426, %v427
  %v429 = vsel %vm339, %v404, 0.0
  %v430 = vadd.f32 %v428, %v429
  %v431 = vsel %vm339, %v405, 0.0
  %v432 = vadd.f32 %v430, %v431
  %v433 = vsel %vm339, %v406, 0.0
  %v434 = vadd.f32 %v432, %v433
  %v435 = vsel %vm339, %v407, 0.0
  %v436 = vadd.f32 %v434, %v435
  %v437 = vsel %vm339, %v408, 0.0
  %v438 = vadd.f32 %v436, %v437
  %v439 = vsel %vm339, %v409, 0.0
  %v440 = vadd.f32 %v438, %v439
  %v441 = vrot.slane %v440, 4
  %v442 = vadd.f32 %v440, %v441
  %v443 = vrot.slane %v442, 2
  %v444 = vadd.f32 %v442, %v443
  %v445 = vrot.slane %v444, 1
  %v446 = vadd.f32 %v444, %v445
  %v447 = vmul.f32 %v446, 0.0078125
  %v448 = vld [vmem:[%s2] sm:$0x1]
  %v449 = vadd.f32 %v447, 1e-05
  %v450 = vrsqrt.pop %v449
  %v451 = vmul.f32 %v448, %v450
  %v452 = vld [vmem:[%s3] sm:$0x1]
  %v453 = vmul.f32 %v377, %v451
  %v454 = vsub.f32 %v452, %v453
  %v456 = vlaneseq
  %v457 = vshrl.u32 %v456, 7
  %v458 = vsub.s32 0, %v457
  %v459 = vrot.slane %v451, %v458
  %v461 = vmul.f32 %v277, %v459
  %v462 = vmul.f32 %v280, %v459
  %v463 = vmul.f32 %v285, %v459
  %v464 = vmul.f32 %v288, %v459
  %v465 = vmul.f32 %v293, %v459
  %v466 = vmul.f32 %v296, %v459
  %v467 = vmul.f32 %v301, %v459
  %v468 = vmul.f32 %v304, %v459
  %v469 = vmul.f32 %v309, %v459
  %v470 = vmul.f32 %v312, %v459
  %v471 = vmul.f32 %v317, %v459
  %v472 = vmul.f32 %v320, %v459
  %v473 = vmul.f32 %v325, %v459
  %v474 = vmul.f32 %v328, %v459
  %v475 = vmul.f32 %v333, %v459
  %v476 = vmul.f32 %v336, %v459
  %v478 = vlaneseq
  %v479 = vshrl.u32 %v478, 7
  %v480 = vsub.s32 0, %v479
  %v481 = vrot.slane %v454, %v480
  %v483 = vadd.f32 %v461, %v481
  %v484 = vadd.f32 %v462, %v481
  %v485 = vadd.f32 %v463, %v481
  %v486 = vadd.f32 %v464, %v481
  %v487 = vadd.f32 %v465, %v481
  %v488 = vadd.f32 %v466, %v481
  %v489 = vadd.f32 %v467, %v481
  %v490 = vadd.f32 %v468, %v481
  %v491 = vadd.f32 %v469, %v481
  %v492 = vadd.f32 %v470, %v481
  %v493 = vadd.f32 %v471, %v481
  %v494 = vadd.f32 %v472, %v481
  %v495 = vadd.f32 %v473, %v481
  %v496 = vadd.f32 %v474, %v481
  %v497 = vadd.f32 %v475, %v481
  %v498 = vadd.f32 %v476, %v481
  %vm499 = vcmp.ge.f32.partialorder %v483, 0.0
  %vm500 = vcmp.ge.f32.partialorder %v484, 0.0
  %vm501 = vcmp.ge.f32.partialorder %v485, 0.0
  %vm502 = vcmp.ge.f32.partialorder %v486, 0.0
  %vm503 = vcmp.ge.f32.partialorder %v487, 0.0
  %vm504 = vcmp.ge.f32.partialorder %v488, 0.0
  %vm505 = vcmp.ge.f32.partialorder %v489, 0.0
  %vm506 = vcmp.ge.f32.partialorder %v490, 0.0
  %vm507 = vcmp.ge.f32.partialorder %v491, 0.0
  %vm508 = vcmp.ge.f32.partialorder %v492, 0.0
  %vm509 = vcmp.ge.f32.partialorder %v493, 0.0
  %vm510 = vcmp.ge.f32.partialorder %v494, 0.0
  %vm511 = vcmp.ge.f32.partialorder %v495, 0.0
  %vm512 = vcmp.ge.f32.partialorder %v496, 0.0
  %vm513 = vcmp.ge.f32.partialorder %v497, 0.0
  %vm514 = vcmp.ge.f32.partialorder %v498, 0.0
  %v515 = vmul.f32 %v483, 0.2
  %v516 = vmul.f32 %v484, 0.2
  %v517 = vmul.f32 %v485, 0.2
  %v518 = vmul.f32 %v486, 0.2
  %v519 = vmul.f32 %v487, 0.2
  %v520 = vmul.f32 %v488, 0.2
  %v521 = vmul.f32 %v489, 0.2
  %v522 = vmul.f32 %v490, 0.2
  %v523 = vmul.f32 %v491, 0.2
  %v524 = vmul.f32 %v492, 0.2
  %v525 = vmul.f32 %v493, 0.2
  %v526 = vmul.f32 %v494, 0.2
  %v527 = vmul.f32 %v495, 0.2
  %v528 = vmul.f32 %v496, 0.2
  %v529 = vmul.f32 %v497, 0.2
  %v530 = vmul.f32 %v498, 0.2
  %v531 = vsel %vm499, %v483, %v515
  %v532 = vsel %vm500, %v484, %v516
  %v533 = vsel %vm501, %v485, %v517
  %v534 = vsel %vm502, %v486, %v518
  %v535 = vsel %vm503, %v487, %v519
  %v536 = vsel %vm504, %v488, %v520
  %v537 = vsel %vm505, %v489, %v521
  %v538 = vsel %vm506, %v490, %v522
  %v539 = vsel %vm507, %v491, %v523
  %v540 = vsel %vm508, %v492, %v524
  %v541 = vsel %vm509, %v493, %v525
  %v542 = vsel %vm510, %v494, %v526
  %v543 = vsel %vm511, %v495, %v527
  %v544 = vsel %vm512, %v496, %v528
  %v545 = vsel %vm513, %v497, %v529
  %v546 = vsel %vm514, %v498, %v530
  %v547 = vpack.c.bf16 %v532, %v531
  %v548 = vpack.c.bf16 %v534, %v533
  %v549 = vpack.c.bf16 %v536, %v535
  %v550 = vpack.c.bf16 %v538, %v537
  %v551 = vpack.c.bf16 %v540, %v539
  %v552 = vpack.c.bf16 %v542, %v541
  %v553 = vpack.c.bf16 %v544, %v543
  %v554 = vpack.c.bf16 %v546, %v545
  %v563 = vunpack.c.l.b16 %v547
  %v564 = vunpack.c.h.b16 %v547
  %v565 = vunpack.c.l.b16 %v548
  %v566 = vunpack.c.h.b16 %v548
  %v567 = vunpack.c.l.b16 %v549
  %v568 = vunpack.c.h.b16 %v549
  %v569 = vunpack.c.l.b16 %v550
  %v570 = vunpack.c.h.b16 %v550
  %v571 = vunpack.c.l.b16 %v551
  %v572 = vunpack.c.h.b16 %v551
  %v573 = vunpack.c.l.b16 %v552
  %v574 = vunpack.c.h.b16 %v552
  %v575 = vunpack.c.l.b16 %v553
  %v576 = vunpack.c.h.b16 %v553
  %v577 = vunpack.c.l.b16 %v554
  %v578 = vunpack.c.h.b16 %v554
  %v579 = vpack.c.b16 %v563, %v563
  %v580 = vpack.c.b16 %v564, %v564
  %v581 = vpack.c.b16 %v565, %v565
  %v582 = vpack.c.b16 %v566, %v566
  %v583 = vpack.c.b16 %v567, %v567
  %v584 = vpack.c.b16 %v568, %v568
  %v585 = vpack.c.b16 %v569, %v569
  %v586 = vpack.c.b16 %v570, %v570
  %v587 = vpack.c.b16 %v571, %v571
  %v588 = vpack.c.b16 %v572, %v572
  %v589 = vpack.c.b16 %v573, %v573
  %v590 = vpack.c.b16 %v574, %v574
  %v591 = vpack.c.b16 %v575, %v575
  %v592 = vpack.c.b16 %v576, %v576
  %v593 = vpack.c.b16 %v577, %v577
  %v594 = vpack.c.b16 %v578, %v578
  %vm611 = vcmask 257024
  %612 = vst.msk [vmem:[%s4] sm:$0xf] %vm611, %v579
  %613 = vst.msk [vmem:[%s4 + $0x4] sm:$0xf] %vm611, %v580
  %614 = vst.msk [vmem:[%s4 + $0x8] sm:$0xf] %vm611, %v581
  %615 = vst.msk [vmem:[%s4 + $0xc] sm:$0xf] %vm611, %v582
  %616 = vst.msk [vmem:[%s4 + $0x10] sm:$0xf] %vm611, %v583
  %617 = vst.msk [vmem:[%s4 + $0x14] sm:$0xf] %vm611, %v584
  %618 = vst.msk [vmem:[%s4 + $0x18] sm:$0xf] %vm611, %v585
  %619 = vst.msk [vmem:[%s4 + $0x1c] sm:$0xf] %vm611, %v586
  %620 = vst.msk [vmem:[%s4 + $0x20] sm:$0xf] %vm611, %v587
  %621 = vst.msk [vmem:[%s4 + $0x24] sm:$0xf] %vm611, %v588
  %622 = vst.msk [vmem:[%s4 + $0x28] sm:$0xf] %vm611, %v589
  %623 = vst.msk [vmem:[%s4 + $0x2c] sm:$0xf] %vm611, %v590
  %624 = vst.msk [vmem:[%s4 + $0x30] sm:$0xf] %vm611, %v591
  %625 = vst.msk [vmem:[%s4 + $0x34] sm:$0xf] %vm611, %v592
  %626 = vst.msk [vmem:[%s4 + $0x38] sm:$0xf] %vm611, %v593
  %627 = vst.msk [vmem:[%s4 + $0x3c] sm:$0xf] %vm611, %v594
  // Predicated region
  $region18: #{discriminator_forward.7} parent=0 // pred_check
    _
  $region19: #{discriminator_forward.7} parent=0 // pred_check_branch
    %629 = sbr.rel (0) target = $region21
  $region20: #{discriminator_forward.7} parent=0 // pred_region
    _
  $region21: #{discriminator_forward.7} parent=0 // pred_fallthru
    _
  // Predicated region
  $region22: #{discriminator_forward.7} parent=0 // pred_check
    _
  $region23: #{discriminator_forward.7} parent=0 // pred_check_branch
    %631 = sbr.rel (0) target = $region25
  $region24: #{discriminator_forward.7} parent=0 // pred_region
    _
  $region25: #{discriminator_forward.7} parent=0 // pred_fallthru
    _

// kernel: discriminator_forward.8
$region0: #{discriminator_forward.8}
  #allocation0 [shape = 'u32[]', space=smem, size = 0x4, offset = 0x4, fixed_abs, tag = 'smem constant byte address 0x4 - core index']
  #allocation1 [shape = 'u32[144,128]{1,0:T(1,128)}', space=vmem, size = 0x12000, scoped, tag = 'internal scratch']
  %s0 = inlined_call_operand.vmem [shape: bf16[32,512], index: 0, kind: input, shape index: {}]
  %s1 = inlined_call_operand.vmem [shape: bf16[512,128], index: 1, kind: input, shape index: {}]
  %s2 = inlined_call_operand.vmem [shape: f32[1,64], index: 2, kind: input, shape index: {}]
  %s3 = inlined_call_operand.vmem [shape: f32[1,64], index: 3, kind: input, shape index: {}]
  %s4 = inlined_call_operand.vmem [shape: bf16[32,64], index: 4, kind: output, shape index: {}]
  %s5 = sld [smem:[#allocation0]]
  $region26: #{discriminator_forward.8} parent=0
    _
  %s7 = ssub.s32 1, %s5
  %s8 = scalar_select 0, %s7, %s5
  // Predicated region
  $region2: #{discriminator_forward.8} parent=0 // pred_check
    _
  $region3: #{discriminator_forward.8} parent=0 // pred_check_branch
    %10 = sbr.rel (0) target = $region5
  $region4: #{discriminator_forward.8} parent=0 // pred_region
    _
  $region5: #{discriminator_forward.8} parent=0 // pred_fallthru
    _
  // Predicated region
  $region6: #{discriminator_forward.8} parent=0 // pred_check
    _
  $region7: #{discriminator_forward.8} parent=0 // pred_check_branch
    %12 = sbr.rel (0) target = $region9
  $region8: #{discriminator_forward.8} parent=0 // pred_region
    _
  $region9: #{discriminator_forward.8} parent=0 // pred_fallthru
    _
  // Predicated region
  $region10: #{discriminator_forward.8} parent=0 // pred_check
    _
  $region11: #{discriminator_forward.8} parent=0 // pred_check_branch
    %14 = sbr.rel (0) target = $region13
  $region12: #{discriminator_forward.8} parent=0 // pred_region
    _
  $region13: #{discriminator_forward.8} parent=0 // pred_fallthru
    _
  // Predicated region
  $region14: #{discriminator_forward.8} parent=0 // pred_check
    _
  $region15: #{discriminator_forward.8} parent=0 // pred_check_branch
    %16 = sbr.rel (0) target = $region17
  $region16: #{discriminator_forward.8} parent=0 // pred_region
    _
  $region17: #{discriminator_forward.8} parent=0 // pred_fallthru
    _
  %v18 = vld [vmem:[%s0] sm:$0xff]
  %v19 = vld [vmem:[%s0 + $0x8] sm:$0xff]
  %v20 = vld [vmem:[%s0 + $0x10] sm:$0xff]
  %v21 = vld [vmem:[%s0 + $0x18] sm:$0xff]
  %v22 = vld [vmem:[%s0 + $0x20] sm:$0xff]
  %v23 = vld [vmem:[%s0 + $0x28] sm:$0xff]
  %v24 = vld [vmem:[%s0 + $0x30] sm:$0xff]
  %v25 = vld [vmem:[%s0 + $0x38] sm:$0xff]
  %v26 = vld [vmem:[%s1] sm:$0xf]
  %v27 = vld [vmem:[%s1 + $0x4] sm:$0xf]
  %v28 = vld [vmem:[%s1 + $0x8] sm:$0xf]
  %v29 = vld [vmem:[%s1 + $0xc] sm:$0xf]
  %v30 = vld [vmem:[%s1 + $0x10] sm:$0xf]
  %v31 = vld [vmem:[%s1 + $0x14] sm:$0xf]
  %v32 = vld [vmem:[%s1 + $0x18] sm:$0xf]
  %v33 = vld [vmem:[%s1 + $0x1c] sm:$0xf]
  %v34 = vld [vmem:[%s1 + $0x20] sm:$0xf]
  %v35 = vld [vmem:[%s1 + $0x24] sm:$0xf]
  %v36 = vld [vmem:[%s1 + $0x28] sm:$0xf]
  %v37 = vld [vmem:[%s1 + $0x2c] sm:$0xf]
  %v38 = vld [vmem:[%s1 + $0x30] sm:$0xf]
  %v39 = vld [vmem:[%s1 + $0x34] sm:$0xf]
  %v40 = vld [vmem:[%s1 + $0x38] sm:$0xf]
  %v41 = vld [vmem:[%s1 + $0x3c] sm:$0xf]
  %v42 = vld [vmem:[%s1 + $0x40] sm:$0xf]
  %v43 = vld [vmem:[%s1 + $0x44] sm:$0xf]
  %v44 = vld [vmem:[%s1 + $0x48] sm:$0xf]
  %v45 = vld [vmem:[%s1 + $0x4c] sm:$0xf]
  %v46 = vld [vmem:[%s1 + $0x50] sm:$0xf]
  %v47 = vld [vmem:[%s1 + $0x54] sm:$0xf]
  %v48 = vld [vmem:[%s1 + $0x58] sm:$0xf]
  %v49 = vld [vmem:[%s1 + $0x5c] sm:$0xf]
  %v50 = vld [vmem:[%s1 + $0x60] sm:$0xf]
  %v51 = vld [vmem:[%s1 + $0x64] sm:$0xf]
  %v52 = vld [vmem:[%s1 + $0x68] sm:$0xf]
  %v53 = vld [vmem:[%s1 + $0x6c] sm:$0xf]
  %v54 = vld [vmem:[%s1 + $0x70] sm:$0xf]
  %v55 = vld [vmem:[%s1 + $0x74] sm:$0xf]
  %v56 = vld [vmem:[%s1 + $0x78] sm:$0xf]
  %v57 = vld [vmem:[%s1 + $0x7c] sm:$0xf]
  %v58 = vld [vmem:[%s1 + $0x80] sm:$0xf]
  %v59 = vld [vmem:[%s1 + $0x84] sm:$0xf]
  %v60 = vld [vmem:[%s1 + $0x88] sm:$0xf]
  %v61 = vld [vmem:[%s1 + $0x8c] sm:$0xf]
  %v62 = vld [vmem:[%s1 + $0x90] sm:$0xf]
  %v63 = vld [vmem:[%s1 + $0x94] sm:$0xf]
  %v64 = vld [vmem:[%s1 + $0x98] sm:$0xf]
  %v65 = vld [vmem:[%s1 + $0x9c] sm:$0xf]
  %v66 = vld [vmem:[%s1 + $0xa0] sm:$0xf]
  %v67 = vld [vmem:[%s1 + $0xa4] sm:$0xf]
  %v68 = vld [vmem:[%s1 + $0xa8] sm:$0xf]
  %v69 = vld [vmem:[%s1 + $0xac] sm:$0xf]
  %v70 = vld [vmem:[%s1 + $0xb0] sm:$0xf]
  %v71 = vld [vmem:[%s1 + $0xb4] sm:$0xf]
  %v72 = vld [vmem:[%s1 + $0xb8] sm:$0xf]
  %v73 = vld [vmem:[%s1 + $0xbc] sm:$0xf]
  %v74 = vld [vmem:[%s1 + $0xc0] sm:$0xf]
  %v75 = vld [vmem:[%s1 + $0xc4] sm:$0xf]
  %v76 = vld [vmem:[%s1 + $0xc8] sm:$0xf]
  %v77 = vld [vmem:[%s1 + $0xcc] sm:$0xf]
  %v78 = vld [vmem:[%s1 + $0xd0] sm:$0xf]
  %v79 = vld [vmem:[%s1 + $0xd4] sm:$0xf]
  %v80 = vld [vmem:[%s1 + $0xd8] sm:$0xf]
  %v81 = vld [vmem:[%s1 + $0xdc] sm:$0xf]
  %v82 = vld [vmem:[%s1 + $0xe0] sm:$0xf]
  %v83 = vld [vmem:[%s1 + $0xe4] sm:$0xf]
  %v84 = vld [vmem:[%s1 + $0xe8] sm:$0xf]
  %v85 = vld [vmem:[%s1 + $0xec] sm:$0xf]
  %v86 = vld [vmem:[%s1 + $0xf0] sm:$0xf]
  %v87 = vld [vmem:[%s1 + $0xf4] sm:$0xf]
  %v88 = vld [vmem:[%s1 + $0xf8] sm:$0xf]
  %v89 = vld [vmem:[%s1 + $0xfc] sm:$0xf]
  %v98 = vunpack.c.l.b16 %v18
  %v99 = vunpack.c.h.b16 %v18
  %v100 = vunpack.c.l.b16 %v19
  %v101 = vunpack.c.h.b16 %v19
  %v102 = vunpack.c.l.b16 %v20
  %v103 = vunpack.c.h.b16 %v20
  %v104 = vunpack.c.l.b16 %v21
  %v105 = vunpack.c.h.b16 %v21
  %v106 = vunpack.c.l.b16 %v22
  %v107 = vunpack.c.h.b16 %v22
  %v108 = vunpack.c.l.b16 %v23
  %v109 = vunpack.c.h.b16 %v23
  %v110 = vunpack.c.l.b16 %v24
  %v111 = vunpack.c.h.b16 %v24
  %v112 = vunpack.c.l.b16 %v25
  %v113 = vunpack.c.h.b16 %v25
  %v114 = vpack.c.b16 %v102, %v98
  %v115 = vpack.c.b16 %v103, %v99
  %v116 = vpack.c.b16 %v104, %v100
  %v117 = vpack.c.b16 %v105, %v101
  %v118 = vpack.c.b16 %v110, %v106
  %v119 = vpack.c.b16 %v111, %v107
  %v120 = vpack.c.b16 %v112, %v108
  %v121 = vpack.c.b16 %v113, %v109
  %v194 = vunpack.c.l.b16 %v26
  %v195 = vunpack.c.l.b16 %v27
  %v196 = vunpack.c.l.b16 %v28
  %v197 = vunpack.c.l.b16 %v29
  %v198 = vunpack.c.l.b16 %v30
  %v199 = vunpack.c.l.b16 %v31
  %v200 = vunpack.c.l.b16 %v32
  %v201 = vunpack.c.l.b16 %v33
  %v202 = vunpack.c.l.b16 %v34
  %v203 = vunpack.c.l.b16 %v35
  %v204 = vunpack.c.l.b16 %v36
  %v205 = vunpack.c.l.b16 %v37
  %v206 = vunpack.c.l.b16 %v38
  %v207 = vunpack.c.l.b16 %v39
  %v208 = vunpack.c.l.b16 %v40
  %v209 = vunpack.c.l.b16 %v41
  %v210 = vunpack.c.l.b16 %v42
  %v211 = vunpack.c.l.b16 %v43
  %v212 = vunpack.c.l.b16 %v44
  %v213 = vunpack.c.l.b16 %v45
  %v214 = vunpack.c.l.b16 %v46
  %v215 = vunpack.c.l.b16 %v47
  %v216 = vunpack.c.l.b16 %v48
  %v217 = vunpack.c.l.b16 %v49
  %v218 = vunpack.c.l.b16 %v50
  %v219 = vunpack.c.l.b16 %v51
  %v220 = vunpack.c.l.b16 %v52
  %v221 = vunpack.c.l.b16 %v53
  %v222 = vunpack.c.l.b16 %v54
  %v223 = vunpack.c.l.b16 %v55
  %v224 = vunpack.c.l.b16 %v56
  %v225 = vunpack.c.l.b16 %v57
  %v226 = vunpack.c.l.b16 %v58
  %v227 = vunpack.c.l.b16 %v59
  %v228 = vunpack.c.l.b16 %v60
  %v229 = vunpack.c.l.b16 %v61
  %v230 = vunpack.c.l.b16 %v62
  %v231 = vunpack.c.l.b16 %v63
  %v232 = vunpack.c.l.b16 %v64
  %v233 = vunpack.c.l.b16 %v65
  %v234 = vunpack.c.l.b16 %v66
  %v235 = vunpack.c.l.b16 %v67
  %v236 = vunpack.c.l.b16 %v68
  %v237 = vunpack.c.l.b16 %v69
  %v238 = vunpack.c.l.b16 %v70
  %v239 = vunpack.c.l.b16 %v71
  %v240 = vunpack.c.l.b16 %v72
  %v241 = vunpack.c.l.b16 %v73
  %v242 = vunpack.c.l.b16 %v74
  %v243 = vunpack.c.l.b16 %v75
  %v244 = vunpack.c.l.b16 %v76
  %v245 = vunpack.c.l.b16 %v77
  %v246 = vunpack.c.l.b16 %v78
  %v247 = vunpack.c.l.b16 %v79
  %v248 = vunpack.c.l.b16 %v80
  %v249 = vunpack.c.l.b16 %v81
  %v250 = vunpack.c.l.b16 %v82
  %v251 = vunpack.c.l.b16 %v83
  %v252 = vunpack.c.l.b16 %v84
  %v253 = vunpack.c.l.b16 %v85
  %v254 = vunpack.c.l.b16 %v86
  %v255 = vunpack.c.l.b16 %v87
  %v256 = vunpack.c.l.b16 %v88
  %v257 = vunpack.c.l.b16 %v89
  %v258 = vpack.c.b16 %v195, %v194
  %v259 = vpack.c.b16 %v197, %v196
  %v260 = vpack.c.b16 %v199, %v198
  %v261 = vpack.c.b16 %v201, %v200
  %v262 = vpack.c.b16 %v203, %v202
  %v263 = vpack.c.b16 %v205, %v204
  %v264 = vpack.c.b16 %v207, %v206
  %v265 = vpack.c.b16 %v209, %v208
  %v266 = vpack.c.b16 %v211, %v210
  %v267 = vpack.c.b16 %v213, %v212
  %v268 = vpack.c.b16 %v215, %v214
  %v269 = vpack.c.b16 %v217, %v216
  %v270 = vpack.c.b16 %v219, %v218
  %v271 = vpack.c.b16 %v221, %v220
  %v272 = vpack.c.b16 %v223, %v222
  %v273 = vpack.c.b16 %v225, %v224
  %v274 = vpack.c.b16 %v227, %v226
  %v275 = vpack.c.b16 %v229, %v228
  %v276 = vpack.c.b16 %v231, %v230
  %v277 = vpack.c.b16 %v233, %v232
  %v278 = vpack.c.b16 %v235, %v234
  %v279 = vpack.c.b16 %v237, %v236
  %v280 = vpack.c.b16 %v239, %v238
  %v281 = vpack.c.b16 %v241, %v240
  %v282 = vpack.c.b16 %v243, %v242
  %v283 = vpack.c.b16 %v245, %v244
  %v284 = vpack.c.b16 %v247, %v246
  %v285 = vpack.c.b16 %v249, %v248
  %v286 = vpack.c.b16 %v251, %v250
  %v287 = vpack.c.b16 %v253, %v252
  %v288 = vpack.c.b16 %v255, %v254
  %v289 = vpack.c.b16 %v257, %v256
  %322 = vmatprep.subr.bf16.mxu0 0
  %323 = vmatpush1.bf16.msra.mxu0 %v258
  %324 = vmatprep.subr.bf16.mxu0 0
  %325 = vmatpush1.bf16.msra.mxu0 %v259
  %326 = vmatprep.subr.bf16.mxu0 0
  %327 = vmatpush1.bf16.msra.mxu0 %v260
  %328 = vmatprep.subr.bf16.mxu0 0
  %329 = vmatpush1.bf16.msra.mxu0 %v261
  %330 = vmatprep.subr.bf16.mxu0 0
  %331 = vmatpush1.bf16.msra.mxu0 %v262
  %332 = vmatprep.subr.bf16.mxu0 0
  %333 = vmatpush1.bf16.msra.mxu0 %v263
  %334 = vmatprep.subr.bf16.mxu0 0
  %335 = vmatpush1.bf16.msra.mxu0 %v264
  %336 = vmatprep.subr.bf16.mxu0 0
  %337 = vmatpush1.bf16.msra.mxu0 %v265
  %338 = vmatprep.subr.bf16.mxu0 0
  %339 = vmatpush1.bf16.msra.mxu0 %v266
  %340 = vmatprep.subr.bf16.mxu0 0
  %341 = vmatpush1.bf16.msra.mxu0 %v267
  %342 = vmatprep.subr.bf16.mxu0 0
  %343 = vmatpush1.bf16.msra.mxu0 %v268
  %344 = vmatprep.subr.bf16.mxu0 0
  %345 = vmatpush1.bf16.msra.mxu0 %v269
  %346 = vmatprep.subr.bf16.mxu0 0
  %347 = vmatpush1.bf16.msra.mxu0 %v270
  %348 = vmatprep.subr.bf16.mxu0 0
  %349 = vmatpush1.bf16.msra.mxu0 %v271
  %350 = vmatprep.subr.bf16.mxu0 0
  %351 = vmatpush1.bf16.msra.mxu0 %v272
  %352 = vmatprep.subr.bf16.mxu0 0
  %353 = vmatpush1.bf16.msra.mxu0 %v273
  %354 = vmatprep.mubr.bf16.mxu0 %v115
  %355 = vmatmul.mubr.bf16.gmra.mrb[0].mxu0 %v114
  %v356 = vpop.f32.mrb[0].mxu0
  %v357 = vadd.f32 0.0, %v356
  %v358 = vpop.f32.mrb[0].mxu0
  %v359 = vpop.f32.mrb[0].mxu0
  %v360 = vadd.f32 0.0, %v359
  %v361 = vpop.f32.mrb[0].mxu0
  %362 = vmatprep.mubr.bf16.mxu0 %v119
  %363 = vmatmul.mubr.bf16.gmra.mrb[0].mxu0 %v118
  %v364 = vpop.f32.mrb[0].mxu0
  %v365 = vadd.f32 0.0, %v364
  %v366 = vpop.f32.mrb[0].mxu0
  %v367 = vpop.f32.mrb[0].mxu0
  %v368 = vadd.f32 0.0, %v367
  %v369 = vpop.f32.mrb[0].mxu0
  %370 = vdwg.mxu0
  %371 = vmatprep.subr.bf16.mxu0 0
  %372 = vmatpush1.bf16.msra.mxu0 %v274
  %373 = vmatprep.subr.bf16.mxu0 0
  %374 = vmatpush1.bf16.msra.mxu0 %v275
  %375 = vmatprep.subr.bf16.mxu0 0
  %376 = vmatpush1.bf16.msra.mxu0 %v276
  %377 = vmatprep.subr.bf16.mxu0 0
  %378 = vmatpush1.bf16.msra.mxu0 %v277
  %379 = vmatprep.subr.bf16.mxu0 0
  %380 = vmatpush1.bf16.msra.mxu0 %v278
  %381 = vmatprep.subr.bf16.mxu0 0
  %382 = vmatpush1.bf16.msra.mxu0 %v279
  %383 = vmatprep.subr.bf16.mxu0 0
  %384 = vmatpush1.bf16.msra.mxu0 %v280
  %385 = vmatprep.subr.bf16.mxu0 0
  %386 = vmatpush1.bf16.msra.mxu0 %v281
  %387 = vmatprep.subr.bf16.mxu0 0
  %388 = vmatpush1.bf16.msra.mxu0 %v282
  %389 = vmatprep.subr.bf16.mxu0 0
  %390 = vmatpush1.bf16.msra.mxu0 %v283
  %391 = vmatprep.subr.bf16.mxu0 0
  %392 = vmatpush1.bf16.msra.mxu0 %v284
  %393 = vmatprep.subr.bf16.mxu0 0
  %394 = vmatpush1.bf16.msra.mxu0 %v285
  %395 = vmatprep.subr.bf16.mxu0 0
  %396 = vmatpush1.bf16.msra.mxu0 %v286
  %397 = vmatprep.subr.bf16.mxu0 0
  %398 = vmatpush1.bf16.msra.mxu0 %v287
  %399 = vmatprep.subr.bf16.mxu0 0
  %400 = vmatpush1.bf16.msra.mxu0 %v288
  %401 = vmatprep.subr.bf16.mxu0 0
  %402 = vmatpush1.bf16.msra.mxu0 %v289
  %403 = vmatprep.mubr.bf16.mxu0 %v117
  %404 = vmatmul.mubr.bf16.gmra.mrb[0].mxu0 %v116
  %v405 = vpop.f32.mrb[0].mxu0
  %v406 = vadd.f32 %v357, %v405
  %v407 = vpop.f32.mrb[0].mxu0
  %v408 = vpop.f32.mrb[0].mxu0
  %v409 = vadd.f32 %v360, %v408
  %v410 = vpop.f32.mrb[0].mxu0
  %411 = vmatprep.mubr.bf16.mxu0 %v121
  %412 = vmatmul.mubr.bf16.gmra.mrb[0].mxu0 %v120
  %v413 = vpop.f32.mrb[0].mxu0
  %v414 = vadd.f32 %v365, %v413
  %v415 = vpop.f32.mrb[0].mxu0
  %v416 = vpop.f32.mrb[0].mxu0
  %v417 = vadd.f32 %v368, %v416
  %v418 = vpop.f32.mrb[0].mxu0
  %419 = vdwg.mxu0
  %vm420 = vcmask 523264
  %v421 = vsel %vm420, %v406, 0.0
  %v422 = vsel %vm420, %v409, 0.0
  %v423 = vadd.f32 %v421, %v422
  %v424 = vsel %vm420, %v414, 0.0
  %v425 = vadd.f32 %v423, %v424
  %v426 = vsel %vm420, %v417, 0.0
  %v427 = vadd.f32 %v425, %v426
  %v428 = vrot.slane %v427, 4
  %v429 = vadd.f32 %v427, %v428
  %v430 = vrot.slane %v429, 2
  %v431 = vadd.f32 %v429, %v430
  %v432 = vrot.slane %v431, 1
  %v433 = vadd.f32 %v431, %v432
  %v434 = vmul.f32 %v433, 0.03125
  %v435 = vsub.f32 %v406, %v434
  %v436 = vsub.f32 %v409, %v434
  %v437 = vsub.f32 %v414, %v434
  %v438 = vsub.f32 %v417, %v434
  %v439 = vmul.f32 %v435, %v435
  %v440 = vmul.f32 %v436, %v436
  %v441 = vmul.f32 %v437, %v437
  %v442 = vmul.f32 %v438, %v438
  %v443 = vsel %vm420, %v439, 0.0
  %v444 = vsel %vm420, %v440, 0.0
  %v445 = vadd.f32 %v443, %v444
  %v446 = vsel %vm420, %v441, 0.0
  %v447 = vadd.f32 %v445, %v446
  %v448 = vsel %vm420, %v442, 0.0
  %v449 = vadd.f32 %v447, %v448
  %v450 = vrot.slane %v449, 4
  %v451 = vadd.f32 %v449, %v450
  %v452 = vrot.slane %v451, 2
  %v453 = vadd.f32 %v451, %v452
  %v454 = vrot.slane %v453, 1
  %v455 = vadd.f32 %v453, %v454
  %v456 = vmul.f32 %v455, 0.03125
  %v457 = vld [vmem:[%s2] sm:$0x1]
  %v458 = vadd.f32 %v456, 1e-05
  %v459 = vrsqrt.pop %v458
  %v460 = vmul.f32 %v457, %v459
  %v461 = vld [vmem:[%s3] sm:$0x1]
  %v462 = vmul.f32 %v434, %v460
  %v463 = vsub.f32 %v461, %v462
  %v465 = vlaneseq
  %v466 = vshrl.u32 %v465, 7
  %v467 = vsub.s32 0, %v466
  %v468 = vrot.slane %v460, %v467
  %v470 = vmul.f32 %v406, %v468
  %v471 = vmul.f32 %v409, %v468
  %v472 = vmul.f32 %v414, %v468
  %v473 = vmul.f32 %v417, %v468
  %v475 = vlaneseq
  %v476 = vshrl.u32 %v475, 7
  %v477 = vsub.s32 0, %v476
  %v478 = vrot.slane %v463, %v477
  %v480 = vadd.f32 %v470, %v478
  %v481 = vadd.f32 %v471, %v478
  %v482 = vadd.f32 %v472, %v478
  %v483 = vadd.f32 %v473, %v478
  %vm484 = vcmp.ge.f32.partialorder %v480, 0.0
  %vm485 = vcmp.ge.f32.partialorder %v481, 0.0
  %vm486 = vcmp.ge.f32.partialorder %v482, 0.0
  %vm487 = vcmp.ge.f32.partialorder %v483, 0.0
  %v488 = vmul.f32 %v480, 0.2
  %v489 = vmul.f32 %v481, 0.2
  %v490 = vmul.f32 %v482, 0.2
  %v491 = vmul.f32 %v483, 0.2
  %v492 = vsel %vm484, %v480, %v488
  %v493 = vsel %vm485, %v481, %v489
  %v494 = vsel %vm486, %v482, %v490
  %v495 = vsel %vm487, %v483, %v491
  %v496 = vpack.c.bf16 %v493, %v492
  %v497 = vpack.c.bf16 %v495, %v494
  %v500 = vunpack.c.l.b16 %v496
  %v501 = vunpack.c.h.b16 %v496
  %v502 = vunpack.c.l.b16 %v497
  %v503 = vunpack.c.h.b16 %v497
  %v504 = vpack.c.b16 %v500, %v500
  %v505 = vpack.c.b16 %v501, %v501
  %v506 = vpack.c.b16 %v502, %v502
  %v507 = vpack.c.b16 %v503, %v503
  %vm512 = vcmask 519168
  %513 = vst.msk [vmem:[%s4] sm:$0xf] %vm512, %v504
  %514 = vst.msk [vmem:[%s4 + $0x4] sm:$0xf] %vm512, %v505
  %515 = vst.msk [vmem:[%s4 + $0x8] sm:$0xf] %vm512, %v506
  %516 = vst.msk [vmem:[%s4 + $0xc] sm:$0xf] %vm512, %v507
  // Predicated region
  $region18: #{discriminator_forward.8} parent=0 // pred_check
    _
  $region19: #{discriminator_forward.8} parent=0 // pred_check_branch
    %518 = sbr.rel (0) target = $region21
  $region20: #{discriminator_forward.8} parent=0 // pred_region
    _
  $region21: #{discriminator_forward.8} parent=0 // pred_fallthru
    _
  // Predicated region
  $region22: #{discriminator_forward.8} parent=0 // pred_check
    _
  $region23: #{discriminator_forward.8} parent=0 // pred_check_branch
    %520 = sbr.rel (0) target = $region25
  $region24: #{discriminator_forward.8} parent=0 // pred_region
    _
  $region25: #{discriminator_forward.8} parent=0 // pred_fallthru
    _

// kernel: discriminator_forward.9
$region0: #{discriminator_forward.9}
  #allocation0 [shape = 'u32[]', space=smem, size = 0x4, offset = 0x4, fixed_abs, tag = 'smem constant byte address 0x4 - core index']
  #allocation1 [shape = 'u32[144,128]{1,0:T(1,128)}', space=vmem, size = 0x12000, scoped, tag = 'internal scratch']
  #allocation2 [shape = 'f32[1,1]{1,0:T(1,128)S(1)}', space=vmem, size = 0x200, scoped, tag = 'scoped memory for discriminator_forward.9']
  %s0 = inlined_call_operand.vmem [shape: bf16[2,1024], index: 0, kind: input, shape index: {}]
  %s1 = inlined_call_operand.vmem [shape: bf16[1024,128], index: 1, kind: input, shape index: {}]
  %s2 = inlined_call_operand.<no memory space> [shape: f32[1,1], index: 2, kind: input, shape index: {}]
  %s3 = inlined_call_operand.vmem [shape: f32[2,1], index: 3, kind: output, shape index: {}]
  %s4 = sld [smem:[#allocation0]]
  $region22: #{discriminator_forward.9} parent=0
    _
  %s6 = ssub.s32 1, %s4
  %s7 = scalar_select 0, %s6, %s4
  %v8 = vstv %s2
  %9 = vst [vmem:[#allocation2] sm:$0x1] %v8
  // Predicated region
  $region2: #{discriminator_forward.9} parent=0 // pred_check
    _
  $region3: #{discriminator_forward.9} parent=0 // pred_check_branch
    %11 = sbr.rel (0) target = $region5
  $region4: #{discriminator_forward.9} parent=0 // pred_region
    _
  $region5: #{discriminator_forward.9} parent=0 // pred_fallthru
    _
  // Predicated region
  $region6: #{discriminator_forward.9} parent=0 // pred_check
    _
  $region7: #{discriminator_forward.9} parent=0 // pred_check_branch
    %13 = sbr.rel (0) target = $region9
  $region8: #{discriminator_forward.9} parent=0 // pred_region
    _
  $region9: #{discriminator_forward.9} parent=0 // pred_fallthru
    _
  // Predicated region
  $region10: #{discriminator_forward.9} parent=0 // pred_check
    _
  $region11: #{discriminator_forward.9} parent=0 // pred_check_branch
    %15 = sbr.rel (0) target = $region13
  $region12: #{discriminator_forward.9} parent=0 // pred_region
    _
  $region13: #{discriminator_forward.9} parent=0 // pred_fallthru
    _
  %v17 = vld [vmem:[%s0] sm:$0xff]
  %v18 = vld [vmem:[%s1] sm:$0xf]
  %v19 = vld [vmem:[%s1 + $0x4] sm:$0xf]
  %v20 = vld [vmem:[%s1 + $0x8] sm:$0xf]
  %v21 = vld [vmem:[%s1 + $0xc] sm:$0xf]
  %v22 = vld [vmem:[%s1 + $0x10] sm:$0xf]
  %v23 = vld [vmem:[%s1 + $0x14] sm:$0xf]
  %v24 = vld [vmem:[%s1 + $0x18] sm:$0xf]
  %v25 = vld [vmem:[%s1 + $0x1c] sm:$0xf]
  %v26 = vld [vmem:[%s1 + $0x20] sm:$0xf]
  %v27 = vld [vmem:[%s1 + $0x24] sm:$0xf]
  %v28 = vld [vmem:[%s1 + $0x28] sm:$0xf]
  %v29 = vld [vmem:[%s1 + $0x2c] sm:$0xf]
  %v30 = vld [vmem:[%s1 + $0x30] sm:$0xf]
  %v31 = vld [vmem:[%s1 + $0x34] sm:$0xf]
  %v32 = vld [vmem:[%s1 + $0x38] sm:$0xf]
  %v33 = vld [vmem:[%s1 + $0x3c] sm:$0xf]
  %v34 = vld [vmem:[%s1 + $0x40] sm:$0xf]
  %v35 = vld [vmem:[%s1 + $0x44] sm:$0xf]
  %v36 = vld [vmem:[%s1 + $0x48] sm:$0xf]
  %v37 = vld [vmem:[%s1 + $0x4c] sm:$0xf]
  %v38 = vld [vmem:[%s1 + $0x50] sm:$0xf]
  %v39 = vld [vmem:[%s1 + $0x54] sm:$0xf]
  %v40 = vld [vmem:[%s1 + $0x58] sm:$0xf]
  %v41 = vld [vmem:[%s1 + $0x5c] sm:$0xf]
  %v42 = vld [vmem:[%s1 + $0x60] sm:$0xf]
  %v43 = vld [vmem:[%s1 + $0x64] sm:$0xf]
  %v44 = vld [vmem:[%s1 + $0x68] sm:$0xf]
  %v45 = vld [vmem:[%s1 + $0x6c] sm:$0xf]
  %v46 = vld [vmem:[%s1 + $0x70] sm:$0xf]
  %v47 = vld [vmem:[%s1 + $0x74] sm:$0xf]
  %v48 = vld [vmem:[%s1 + $0x78] sm:$0xf]
  %v49 = vld [vmem:[%s1 + $0x7c] sm:$0xf]
  %v50 = vld [vmem:[%s1 + $0x80] sm:$0xf]
  %v51 = vld [vmem:[%s1 + $0x84] sm:$0xf]
  %v52 = vld [vmem:[%s1 + $0x88] sm:$0xf]
  %v53 = vld [vmem:[%s1 + $0x8c] sm:$0xf]
  %v54 = vld [vmem:[%s1 + $0x90] sm:$0xf]
  %v55 = vld [vmem:[%s1 + $0x94] sm:$0xf]
  %v56 = vld [vmem:[%s1 + $0x98] sm:$0xf]
  %v57 = vld [vmem:[%s1 + $0x9c] sm:$0xf]
  %v58 = vld [vmem:[%s1 + $0xa0] sm:$0xf]
  %v59 = vld [vmem:[%s1 + $0xa4] sm:$0xf]
  %v60 = vld [vmem:[%s1 + $0xa8] sm:$0xf]
  %v61 = vld [vmem:[%s1 + $0xac] sm:$0xf]
  %v62 = vld [vmem:[%s1 + $0xb0] sm:$0xf]
  %v63 = vld [vmem:[%s1 + $0xb4] sm:$0xf]
  %v64 = vld [vmem:[%s1 + $0xb8] sm:$0xf]
  %v65 = vld [vmem:[%s1 + $0xbc] sm:$0xf]
  %v66 = vld [vmem:[%s1 + $0xc0] sm:$0xf]
  %v67 = vld [vmem:[%s1 + $0xc4] sm:$0xf]
  %v68 = vld [vmem:[%s1 + $0xc8] sm:$0xf]
  %v69 = vld [vmem:[%s1 + $0xcc] sm:$0xf]
  %v70 = vld [vmem:[%s1 + $0xd0] sm:$0xf]
  %v71 = vld [vmem:[%s1 + $0xd4] sm:$0xf]
  %v72 = vld [vmem:[%s1 + $0xd8] sm:$0xf]
  %v73 = vld [vmem:[%s1 + $0xdc] sm:$0xf]
  %v74 = vld [vmem:[%s1 + $0xe0] sm:$0xf]
  %v75 = vld [vmem:[%s1 + $0xe4] sm:$0xf]
  %v76 = vld [vmem:[%s1 + $0xe8] sm:$0xf]
  %v77 = vld [vmem:[%s1 + $0xec] sm:$0xf]
  %v78 = vld [vmem:[%s1 + $0xf0] sm:$0xf]
  %v79 = vld [vmem:[%s1 + $0xf4] sm:$0xf]
  %v80 = vld [vmem:[%s1 + $0xf8] sm:$0xf]
  %v81 = vld [vmem:[%s1 + $0xfc] sm:$0xf]
  %v82 = vld [vmem:[%s1 + $0x100] sm:$0xf]
  %v83 = vld [vmem:[%s1 + $0x104] sm:$0xf]
  %v84 = vld [vmem:[%s1 + $0x108] sm:$0xf]
  %v85 = vld [vmem:[%s1 + $0x10c] sm:$0xf]
  %v86 = vld [vmem:[%s1 + $0x110] sm:$0xf]
  %v87 = vld [vmem:[%s1 + $0x114] sm:$0xf]
  %v88 = vld [vmem:[%s1 + $0x118] sm:$0xf]
  %v89 = vld [vmem:[%s1 + $0x11c] sm:$0xf]
  %v90 = vld [vmem:[%s1 + $0x120] sm:$0xf]
  %v91 = vld [vmem:[%s1 + $0x124] sm:$0xf]
  %v92 = vld [vmem:[%s1 + $0x128] sm:$0xf]
  %v93 = vld [vmem:[%s1 + $0x12c] sm:$0xf]
  %v94 = vld [vmem:[%s1 + $0x130] sm:$0xf]
  %v95 = vld [vmem:[%s1 + $0x134] sm:$0xf]
  %v96 = vld [vmem:[%s1 + $0x138] sm:$0xf]
  %v97 = vld [vmem:[%s1 + $0x13c] sm:$0xf]
  %v98 = vld [vmem:[%s1 + $0x140] sm:$0xf]
  %v99 = vld [vmem:[%s1 + $0x144] sm:$0xf]
  %v100 = vld [vmem:[%s1 + $0x148] sm:$0xf]
  %v101 = vld [vmem:[%s1 + $0x14c] sm:$0xf]
  %v102 = vld [vmem:[%s1 + $0x150] sm:$0xf]
  %v103 = vld [vmem:[%s1 + $0x154] sm:$0xf]
  %v104 = vld [vmem:[%s1 + $0x158] sm:$0xf]
  %v105 = vld [vmem:[%s1 + $0x15c] sm:$0xf]
  %v106 = vld [vmem:[%s1 + $0x160] sm:$0xf]
  %v107 = vld [vmem:[%s1 + $0x164] sm:$0xf]
  %v108 = vld [vmem:[%s1 + $0x168] sm:$0xf]
  %v109 = vld [vmem:[%s1 + $0x16c] sm:$0xf]
  %v110 = vld [vmem:[%s1 + $0x170] sm:$0xf]
  %v111 = vld [vmem:[%s1 + $0x174] sm:$0xf]
  %v112 = vld [vmem:[%s1 + $0x178] sm:$0xf]
  %v113 = vld [vmem:[%s1 + $0x17c] sm:$0xf]
  %v114 = vld [vmem:[%s1 + $0x180] sm:$0xf]
  %v115 = vld [vmem:[%s1 + $0x184] sm:$0xf]
  %v116 = vld [vmem:[%s1 + $0x188] sm:$0xf]
  %v117 = vld [vmem:[%s1 + $0x18c] sm:$0xf]
  %v118 = vld [vmem:[%s1 + $0x190] sm:$0xf]
  %v119 = vld [vmem:[%s1 + $0x194] sm:$0xf]
  %v120 = vld [vmem:[%s1 + $0x198] sm:$0xf]
  %v121 = vld [vmem:[%s1 + $0x19c] sm:$0xf]
  %v122 = vld [vmem:[%s1 + $0x1a0] sm:$0xf]
  %v123 = vld [vmem:[%s1 + $0x1a4] sm:$0xf]
  %v124 = vld [vmem:[%s1 + $0x1a8] sm:$0xf]
  %v125 = vld [vmem:[%s1 + $0x1ac] sm:$0xf]
  %v126 = vld [vmem:[%s1 + $0x1b0] sm:$0xf]
  %v127 = vld [vmem:[%s1 + $0x1b4] sm:$0xf]
  %v128 = vld [vmem:[%s1 + $0x1b8] sm:$0xf]
  %v129 = vld [vmem:[%s1 + $0x1bc] sm:$0xf]
  %v130 = vld [vmem:[%s1 + $0x1c0] sm:$0xf]
  %v131 = vld [vmem:[%s1 + $0x1c4] sm:$0xf]
  %v132 = vld [vmem:[%s1 + $0x1c8] sm:$0xf]
  %v133 = vld [vmem:[%s1 + $0x1cc] sm:$0xf]
  %v134 = vld [vmem:[%s1 + $0x1d0] sm:$0xf]
  %v135 = vld [vmem:[%s1 + $0x1d4] sm:$0xf]
  %v136 = vld [vmem:[%s1 + $0x1d8] sm:$0xf]
  %v137 = vld [vmem:[%s1 + $0x1dc] sm:$0xf]
  %v138 = vld [vmem:[%s1 + $0x1e0] sm:$0xf]
  %v139 = vld [vmem:[%s1 + $0x1e4] sm:$0xf]
  %v140 = vld [vmem:[%s1 + $0x1e8] sm:$0xf]
  %v141 = vld [vmem:[%s1 + $0x1ec] sm:$0xf]
  %v142 = vld [vmem:[%s1 + $0x1f0] sm:$0xf]
  %v143 = vld [vmem:[%s1 + $0x1f4] sm:$0xf]
  %v144 = vld [vmem:[%s1 + $0x1f8] sm:$0xf]
  %v145 = vld [vmem:[%s1 + $0x1fc] sm:$0xf]
  %v147 = vcombine.high %v17, %v17
  %v149 = vunpack.c.l.s4 1966171168
  %v150 = vunpack.c.0.s8 %v149
  %v151 = vlaneseq
  %v152 = vshrl.u32 %v151, 7
  %v153 = vsub.s32 %v150, %v152
  %v154 = vrot.slane %v17, %v153
  %v156 = vunpack.c.l.s4 1966171168
  %v157 = vunpack.c.0.s8 %v156
  %v158 = vlaneseq
  %v159 = vshrl.u32 %v158, 7
  %v160 = vsub.s32 %v157, %v159
  %v161 = vrot.slane %v147, %v160
  %v162 = vcombine.high %v154, %v154
  %v163 = vcombine.high %v161, %v161
  %v165 = vunpack.c.l.s4 1966171168
  %v166 = vunpack.c.0.s8 %v165
  %v167 = vlaneseq
  %v168 = vshrl.u32 %v167, 7
  %v169 = vsub.s32 %v166, %v168
  %v170 = vrot.slane %v154, %v169
  %v172 = vunpack.c.l.s4 1966171168
  %v173 = vunpack.c.0.s8 %v172
  %v174 = vlaneseq
  %v175 = vshrl.u32 %v174, 7
  %v176 = vsub.s32 %v173, %v175
  %v177 = vrot.slane %v161, %v176
  %v179 = vunpack.c.l.s4 1966171168
  %v180 = vunpack.c.0.s8 %v179
  %v181 = vlaneseq
  %v182 = vshrl.u32 %v181, 7
  %v183 = vsub.s32 %v180, %v182
  %v184 = vrot.slane %v162, %v183
  %v186 = vunpack.c.l.s4 1966171168
  %v187 = vunpack.c.0.s8 %v186
  %v188 = vlaneseq
  %v189 = vshrl.u32 %v188, 7
  %v190 = vsub.s32 %v187, %v189
  %v191 = vrot.slane %v163, %v190
  %v192 = vcombine.high %v170, %v170
  %v193 = vcombine.high %v177, %v177
  %v194 = vcombine.high %v184, %v184
  %v195 = vcombine.high %v191, %v191
  %v332 = vunpack.c.l.b16 %v18
  %v333 = vunpack.c.l.b16 %v19
  %v334 = vunpack.c.l.b16 %v20
  %v335 = vunpack.c.l.b16 %v21
  %v336 = vunpack.c.l.b16 %v22
  %v337 = vunpack.c.l.b16 %v23
  %v338 = vunpack.c.l.b16 %v24
  %v339 = vunpack.c.l.b16 %v25
  %v340 = vunpack.c.l.b16 %v26
  %v341 = vunpack.c.l.b16 %v27
  %v342 = vunpack.c.l.b16 %v28
  %v343 = vunpack.c.l.b16 %v29
  %v344 = vunpack.c.l.b16 %v30
  %v345 = vunpack.c.l.b16 %v31
  %v346 = vunpack.c.l.b16 %v32
  %v347 = vunpack.c.l.b16 %v33
  %v348 = vunpack.c.l.b16 %v34
  %v349 = vunpack.c.l.b16 %v35
  %v350 = vunpack.c.l.b16 %v36
  %v351 = vunpack.c.l.b16 %v37
  %v352 = vunpack.c.l.b16 %v38
  %v353 = vunpack.c.l.b16 %v39
  %v354 = vunpack.c.l.b16 %v40
  %v355 = vunpack.c.l.b16 %v41
  %v356 = vunpack.c.l.b16 %v42
  %v357 = vunpack.c.l.b16 %v43
  %v358 = vunpack.c.l.b16 %v44
  %v359 = vunpack.c.l.b16 %v45
  %v360 = vunpack.c.l.b16 %v46
  %v361 = vunpack.c.l.b16 %v47
  %v362 = vunpack.c.l.b16 %v48
  %v363 = vunpack.c.l.b16 %v49
  %v364 = vunpack.c.l.b16 %v50
  %v365 = vunpack.c.l.b16 %v51
  %v366 = vunpack.c.l.b16 %v52
  %v367 = vunpack.c.l.b16 %v53
  %v368 = vunpack.c.l.b16 %v54
  %v369 = vunpack.c.l.b16 %v55
  %v370 = vunpack.c.l.b16 %v56
  %v371 = vunpack.c.l.b16 %v57
  %v372 = vunpack.c.l.b16 %v58
  %v373 = vunpack.c.l.b16 %v59
  %v374 = vunpack.c.l.b16 %v60
  %v375 = vunpack.c.l.b16 %v61
  %v376 = vunpack.c.l.b16 %v62
  %v377 = vunpack.c.l.b16 %v63
  %v378 = vunpack.c.l.b16 %v64
  %v379 = vunpack.c.l.b16 %v65
  %v380 = vunpack.c.l.b16 %v66
  %v381 = vunpack.c.l.b16 %v67
  %v382 = vunpack.c.l.b16 %v68
  %v383 = vunpack.c.l.b16 %v69
  %v384 = vunpack.c.l.b16 %v70
  %v385 = vunpack.c.l.b16 %v71
  %v386 = vunpack.c.l.b16 %v72
  %v387 = vunpack.c.l.b16 %v73
  %v388 = vunpack.c.l.b16 %v74
  %v389 = vunpack.c.l.b16 %v75
  %v390 = vunpack.c.l.b16 %v76
  %v391 = vunpack.c.l.b16 %v77
  %v392 = vunpack.c.l.b16 %v78
  %v393 = vunpack.c.l.b16 %v79
  %v394 = vunpack.c.l.b16 %v80
  %v395 = vunpack.c.l.b16 %v81
  %v396 = vunpack.c.l.b16 %v82
  %v397 = vunpack.c.l.b16 %v83
  %v398 = vunpack.c.l.b16 %v84
  %v399 = vunpack.c.l.b16 %v85
  %v400 = vunpack.c.l.b16 %v86
  %v401 = vunpack.c.l.b16 %v87
  %v402 = vunpack.c.l.b16 %v88
  %v403 = vunpack.c.l.b16 %v89
  %v404 = vunpack.c.l.b16 %v90
  %v405 = vunpack.c.l.b16 %v91
  %v406 = vunpack.c.l.b16 %v92
  %v407 = vunpack.c.l.b16 %v93
  %v408 = vunpack.c.l.b16 %v94
  %v409 = vunpack.c.l.b16 %v95
  %v410 = vunpack.c.l.b16 %v96
  %v411 = vunpack.c.l.b16 %v97
  %v412 = vunpack.c.l.b16 %v98
  %v413 = vunpack.c.l.b16 %v99
  %v414 = vunpack.c.l.b16 %v100
  %v415 = vunpack.c.l.b16 %v101
  %v416 = vunpack.c.l.b16 %v102
  %v417 = vunpack.c.l.b16 %v103
  %v418 = vunpack.c.l.b16 %v104
  %v419 = vunpack.c.l.b16 %v105
  %v420 = vunpack.c.l.b16 %v106
  %v421 = vunpack.c.l.b16 %v107
  %v422 = vunpack.c.l.b16 %v108
  %v423 = vunpack.c.l.b16 %v109
  %v424 = vunpack.c.l.b16 %v110
  %v425 = vunpack.c.l.b16 %v111
  %v426 = vunpack.c.l.b16 %v112
  %v427 = vunpack.c.l.b16 %v113
  %v428 = vunpack.c.l.b16 %v114
  %v429 = vunpack.c.l.b16 %v115
  %v430 = vunpack.c.l.b16 %v116
  %v431 = vunpack.c.l.b16 %v117
  %v432 = vunpack.c.l.b16 %v118
  %v433 = vunpack.c.l.b16 %v119
  %v434 = vunpack.c.l.b16 %v120
  %v435 = vunpack.c.l.b16 %v121
  %v436 = vunpack.c.l.b16 %v122
  %v437 = vunpack.c.l.b16 %v123
  %v438 = vunpack.c.l.b16 %v124
  %v439 = vunpack.c.l.b16 %v125
  %v440 = vunpack.c.l.b16 %v126
  %v441 = vunpack.c.l.b16 %v127
  %v442 = vunpack.c.l.b16 %v128
  %v443 = vunpack.c.l.b16 %v129
  %v444 = vunpack.c.l.b16 %v130
  %v445 = vunpack.c.l.b16 %v131
  %v446 = vunpack.c.l.b16 %v132
  %v447 = vunpack.c.l.b16 %v133
  %v448 = vunpack.c.l.b16 %v134
  %v449 = vunpack.c.l.b16 %v135
  %v450 = vunpack.c.l.b16 %v136
  %v451 = vunpack.c.l.b16 %v137
  %v452 = vunpack.c.l.b16 %v138
  %v453 = vunpack.c.l.b16 %v139
  %v454 = vunpack.c.l.b16 %v140
  %v455 = vunpack.c.l.b16 %v141
  %v456 = vunpack.c.l.b16 %v142
  %v457 = vunpack.c.l.b16 %v143
  %v458 = vunpack.c.l.b16 %v144
  %v459 = vunpack.c.l.b16 %v145
  %v460 = vpack.c.b16 %v333, %v332
  %v461 = vpack.c.b16 %v335, %v334
  %v462 = vpack.c.b16 %v337, %v336
  %v463 = vpack.c.b16 %v339, %v338
  %v464 = vpack.c.b16 %v341, %v340
  %v465 = vpack.c.b16 %v343, %v342
  %v466 = vpack.c.b16 %v345, %v344
  %v467 = vpack.c.b16 %v347, %v346
  %v468 = vpack.c.b16 %v349, %v348
  %v469 = vpack.c.b16 %v351, %v350
  %v470 = vpack.c.b16 %v353, %v352
  %v471 = vpack.c.b16 %v355, %v354
  %v472 = vpack.c.b16 %v357, %v356
  %v473 = vpack.c.b16 %v359, %v358
  %v474 = vpack.c.b16 %v361, %v360
  %v475 = vpack.c.b16 %v363, %v362
  %v476 = vpack.c.b16 %v365, %v364
  %v477 = vpack.c.b16 %v367, %v366
  %v478 = vpack.c.b16 %v369, %v368
  %v479 = vpack.c.b16 %v371, %v370
  %v480 = vpack.c.b16 %v373, %v372
  %v481 = vpack.c.b16 %v375, %v374
  %v482 = vpack.c.b16 %v377, %v376
  %v483 = vpack.c.b16 %v379, %v378
  %v484 = vpack.c.b16 %v381, %v380
  %v485 = vpack.c.b16 %v383, %v382
  %v486 = vpack.c.b16 %v385, %v384
  %v487 = vpack.c.b16 %v387, %v386
  %v488 = vpack.c.b16 %v389, %v388
  %v489 = vpack.c.b16 %v391, %v390
  %v490 = vpack.c.b16 %v393, %v392
  %v491 = vpack.c.b16 %v395, %v394
  %v492 = vpack.c.b16 %v397, %v396
  %v493 = vpack.c.b16 %v399, %v398
  %v494 = vpack.c.b16 %v401, %v400
  %v495 = vpack.c.b16 %v403, %v402
  %v496 = vpack.c.b16 %v405, %v404
  %v497 = vpack.c.b16 %v407, %v406
  %v498 = vpack.c.b16 %v409, %v408
  %v499 = vpack.c.b16 %v411, %v410
  %v500 = vpack.c.b16 %v413, %v412
  %v501 = vpack.c.b16 %v415, %v414
  %v502 = vpack.c.b16 %v417, %v416
  %v503 = vpack.c.b16 %v419, %v418
  %v504 = vpack.c.b16 %v421, %v420
  %v505 = vpack.c.b16 %v423, %v422
  %v506 = vpack.c.b16 %v425, %v424
  %v507 = vpack.c.b16 %v427, %v426
  %v508 = vpack.c.b16 %v429, %v428
  %v509 = vpack.c.b16 %v431, %v430
  %v510 = vpack.c.b16 %v433, %v432
  %v511 = vpack.c.b16 %v435, %v434
  %v512 = vpack.c.b16 %v437, %v436
  %v513 = vpack.c.b16 %v439, %v438
  %v514 = vpack.c.b16 %v441, %v440
  %v515 = vpack.c.b16 %v443, %v442
  %v516 = vpack.c.b16 %v445, %v444
  %v517 = vpack.c.b16 %v447, %v446
  %v518 = vpack.c.b16 %v449, %v448
  %v519 = vpack.c.b16 %v451, %v450
  %v520 = vpack.c.b16 %v453, %v452
  %v521 = vpack.c.b16 %v455, %v454
  %v522 = vpack.c.b16 %v457, %v456
  %v523 = vpack.c.b16 %v459, %v458
  %588 = vmatprep.subr.bf16.mxu0 0
  %589 = vmatpush1.bf16.msra.mxu0 %v460
  %590 = vmatprep.subr.bf16.mxu0 0
  %591 = vmatpush1.bf16.msra.mxu0 %v461
  %592 = vmatprep.subr.bf16.mxu0 0
  %593 = vmatpush1.bf16.msra.mxu0 %v462
  %594 = vmatprep.subr.bf16.mxu0 0
  %595 = vmatpush1.bf16.msra.mxu0 %v463
  %596 = vmatprep.subr.bf16.mxu0 0
  %597 = vmatpush1.bf16.msra.mxu0 %v464
  %598 = vmatprep.subr.bf16.mxu0 0
  %599 = vmatpush1.bf16.msra.mxu0 %v465
  %600 = vmatprep.subr.bf16.mxu0 0
  %601 = vmatpush1.bf16.msra.mxu0 %v466
  %602 = vmatprep.subr.bf16.mxu0 0
  %603 = vmatpush1.bf16.msra.mxu0 %v467
  %604 = vmatprep.subr.bf16.mxu0 0
  %605 = vmatpush1.bf16.msra.mxu0 %v468
  %606 = vmatprep.subr.bf16.mxu0 0
  %607 = vmatpush1.bf16.msra.mxu0 %v469
  %608 = vmatprep.subr.bf16.mxu0 0
  %609 = vmatpush1.bf16.msra.mxu0 %v470
  %610 = vmatprep.subr.bf16.mxu0 0
  %611 = vmatpush1.bf16.msra.mxu0 %v471
  %612 = vmatprep.subr.bf16.mxu0 0
  %613 = vmatpush1.bf16.msra.mxu0 %v472
  %614 = vmatprep.subr.bf16.mxu0 0
  %615 = vmatpush1.bf16.msra.mxu0 %v473
  %616 = vmatprep.subr.bf16.mxu0 0
  %617 = vmatpush1.bf16.msra.mxu0 %v474
  %618 = vmatprep.subr.bf16.mxu0 0
  %619 = vmatpush1.bf16.msra.mxu0 %v475
  %620 = vmatprep.mubr.bf16.mxu0 %v184
  %621 = vmatmul.mubr.bf16.gmra.mrb[0].mxu0 %v170
  %v622 = vpop.f32.mrb[0].mxu0
  %v623 = vadd.f32 0.0, %v622
  %v624 = vpop.f32.mrb[0].mxu0
  %v625 = vpop.f32.mrb[0].mxu0
  %v626 = vpop.f32.mrb[0].mxu0
  %627 = vdwg.mxu0
  %628 = vmatprep.subr.bf16.mxu0 0
  %629 = vmatpush1.bf16.msra.mxu0 %v476
  %630 = vmatprep.subr.bf16.mxu0 0
  %631 = vmatpush1.bf16.msra.mxu0 %v477
  %632 = vmatprep.subr.bf16.mxu0 0
  %633 = vmatpush1.bf16.msra.mxu0 %v478
  %634 = vmatprep.subr.bf16.mxu0 0
  %635 = vmatpush1.bf16.msra.mxu0 %v479
  %636 = vmatprep.subr.bf16.mxu0 0
  %637 = vmatpush1.bf16.msra.mxu0 %v480
  %638 = vmatprep.subr.bf16.mxu0 0
  %639 = vmatpush1.bf16.msra.mxu0 %v481
  %640 = vmatprep.subr.bf16.mxu0 0
  %641 = vmatpush1.bf16.msra.mxu0 %v482
  %642 = vmatprep.subr.bf16.mxu0 0
  %643 = vmatpush1.bf16.msra.mxu0 %v483
  %644 = vmatprep.subr.bf16.mxu0 0
  %645 = vmatpush1.bf16.msra.mxu0 %v484
  %646 = vmatprep.subr.bf16.mxu0 0
  %647 = vmatpush1.bf16.msra.mxu0 %v485
  %648 = vmatprep.subr.bf16.mxu0 0
  %649 = vmatpush1.bf16.msra.mxu0 %v486
  %650 = vmatprep.subr.bf16.mxu0 0
  %651 = vmatpush1.bf16.msra.mxu0 %v487
  %652 = vmatprep.subr.bf16.mxu0 0
  %653 = vmatpush1.bf16.msra.mxu0 %v488
  %654 = vmatprep.subr.bf16.mxu0 0
  %655 = vmatpush1.bf16.msra.mxu0 %v489
  %656 = vmatprep.subr.bf16.mxu0 0
  %657 = vmatpush1.bf16.msra.mxu0 %v490
  %658 = vmatprep.subr.bf16.mxu0 0
  %659 = vmatpush1.bf16.msra.mxu0 %v491
  %660 = vmatprep.mubr.bf16.mxu0 %v194
  %661 = vmatmul.mubr.bf16.gmra.mrb[0].mxu0 %v192
  %v662 = vpop.f32.mrb[0].mxu0
  %v663 = vadd.f32 %v623, %v662
  %v664 = vpop.f32.mrb[0].mxu0
  %v665 = vpop.f32.mrb[0].mxu0
  %v666 = vpop.f32.mrb[0].mxu0
  %667 = vdwg.mxu0
  %668 = vmatprep.subr.bf16.mxu0 0
  %669 = vmatpush1.bf16.msra.mxu0 %v492
  %670 = vmatprep.subr.bf16.mxu0 0
  %671 = vmatpush1.bf16.msra.mxu0 %v493
  %672 = vmatprep.subr.bf16.mxu0 0
  %673 = vmatpush1.bf16.msra.mxu0 %v494
  %674 = vmatprep.subr.bf16.mxu0 0
  %675 = vmatpush1.bf16.msra.mxu0 %v495
  %676 = vmatprep.subr.bf16.mxu0 0
  %677 = vmatpush1.bf16.msra.mxu0 %v496
  %678 = vmatprep.subr.bf16.mxu0 0
  %679 = vmatpush1.bf16.msra.mxu0 %v497
  %680 = vmatprep.subr.bf16.mxu0 0
  %681 = vmatpush1.bf16.msra.mxu0 %v498
  %682 = vmatprep.subr.bf16.mxu0 0
  %683 = vmatpush1.bf16.msra.mxu0 %v499
  %684 = vmatprep.subr.bf16.mxu0 0
  %685 = vmatpush1.bf16.msra.mxu0 %v500
  %686 = vmatprep.subr.bf16.mxu0 0
  %687 = vmatpush1.bf16.msra.mxu0 %v501
  %688 = vmatprep.subr.bf16.mxu0 0
  %689 = vmatpush1.bf16.msra.mxu0 %v502
  %690 = vmatprep.subr.bf16.mxu0 0
  %691 = vmatpush1.bf16.msra.mxu0 %v503
  %692 = vmatprep.subr.bf16.mxu0 0
  %693 = vmatpush1.bf16.msra.mxu0 %v504
  %694 = vmatprep.subr.bf16.mxu0 0
  %695 = vmatpush1.bf16.msra.mxu0 %v505
  %696 = vmatprep.subr.bf16.mxu0 0
  %697 = vmatpush1.bf16.msra.mxu0 %v506
  %698 = vmatprep.subr.bf16.mxu0 0
  %699 = vmatpush1.bf16.msra.mxu0 %v507
  %700 = vmatprep.mubr.bf16.mxu0 %v191
  %701 = vmatmul.mubr.bf16.gmra.mrb[0].mxu0 %v177
  %v702 = vpop.f32.mrb[0].mxu0
  %v703 = vadd.f32 %v663, %v702
  %v704 = vpop.f32.mrb[0].mxu0
  %v705 = vpop.f32.mrb[0].mxu0
  %v706 = vpop.f32.mrb[0].mxu0
  %707 = vdwg.mxu0
  %708 = vmatprep.subr.bf16.mxu0 0
  %709 = vmatpush1.bf16.msra.mxu0 %v508
  %710 = vmatprep.subr.bf16.mxu0 0
  %711 = vmatpush1.bf16.msra.mxu0 %v509
  %712 = vmatprep.subr.bf16.mxu0 0
  %713 = vmatpush1.bf16.msra.mxu0 %v510
  %714 = vmatprep.subr.bf16.mxu0 0
  %715 = vmatpush1.bf16.msra.mxu0 %v511
  %716 = vmatprep.subr.bf16.mxu0 0
  %717 = vmatpush1.bf16.msra.mxu0 %v512
  %718 = vmatprep.subr.bf16.mxu0 0
  %719 = vmatpush1.bf16.msra.mxu0 %v513
  %720 = vmatprep.subr.bf16.mxu0 0
  %721 = vmatpush1.bf16.msra.mxu0 %v514
  %722 = vmatprep.subr.bf16.mxu0 0
  %723 = vmatpush1.bf16.msra.mxu0 %v515
  %724 = vmatprep.subr.bf16.mxu0 0
  %725 = vmatpush1.bf16.msra.mxu0 %v516
  %726 = vmatprep.subr.bf16.mxu0 0
  %727 = vmatpush1.bf16.msra.mxu0 %v517
  %728 = vmatprep.subr.bf16.mxu0 0
  %729 = vmatpush1.bf16.msra.mxu0 %v518
  %730 = vmatprep.subr.bf16.mxu0 0
  %731 = vmatpush1.bf16.msra.mxu0 %v519
  %732 = vmatprep.subr.bf16.mxu0 0
  %733 = vmatpush1.bf16.msra.mxu0 %v520
  %734 = vmatprep.subr.bf16.mxu0 0
  %735 = vmatpush1.bf16.msra.mxu0 %v521
  %736 = vmatprep.subr.bf16.mxu0 0
  %737 = vmatpush1.bf16.msra.mxu0 %v522
  %738 = vmatprep.subr.bf16.mxu0 0
  %739 = vmatpush1.bf16.msra.mxu0 %v523
  %740 = vmatprep.mubr.bf16.mxu0 %v195
  %741 = vmatmul.mubr.bf16.gmra.mrb[0].mxu0 %v193
  %v742 = vpop.f32.mrb[0].mxu0
  %v743 = vadd.f32 %v703, %v742
  %v744 = vpop.f32.mrb[0].mxu0
  %v745 = vpop.f32.mrb[0].mxu0
  %v746 = vpop.f32.mrb[0].mxu0
  %747 = vdwg.mxu0
  %v748 = vld [vmem:[#allocation2] sm:$0x1]
  %v750 = vlaneseq
  %v751 = vshrl.u32 %v750, 7
  %v752 = vsub.s32 0, %v751
  %v753 = vrot.slane %v748, %v752
  %v755 = vadd.f32 %v743, %v753
  %v756 = vand.u32 2147483647, %v755
  %v757 = vsub.f32 0.0, %v756
  %v758 = vmul.f32 %v757, 1.442695
  %v759 = vpow.pop %v758
  %vm760 = vcmp.ge.f32.partialorder %v755, 0.0
  %v761 = vadd.f32 %v759, 1.0
  %v762 = vrcp.pop %v761
  %v763 = vmul.f32 1.0, %v762
  %v764 = vmul.f32 %v759, %v762
  %v765 = vsel %vm760, %v763, %v764
  %vm766 = vcmask 1024
  %767 = vst.msk [vmem:[%s3] sm:$0x3] %vm766, %v765
  // Predicated region
  $region14: #{discriminator_forward.9} parent=0 // pred_check
    _
  $region15: #{discriminator_forward.9} parent=0 // pred_check_branch
    %769 = sbr.rel (0) target = $region17
  $region16: #{discriminator_forward.9} parent=0 // pred_region
    _
  $region17: #{discriminator_forward.9} parent=0 // pred_fallthru
    _
  // Predicated region
  $region18: #{discriminator_forward.9} parent=0 // pred_check
    _
  $region19: #{discriminator_forward.9} parent=0 // pred_check_branch
    %771 = sbr.rel (0) target = $region21
  $region20: #{discriminator_forward.9} parent=0 // pred_region
    _
  $region21: #{discriminator_forward.9} parent=0 // pred_fallthru
    _

</llo_original>
